<compile_context>
chip_gen: v7x
topology: tpu7x:2x2x1
jax: 0.10.0
libtpu: 0.0.40
codegen_flags: <defaults>
</compile_context>

<pallas_src>
import jax
import jax.numpy as jnp
from jax.experimental import pallas as pl
from jax.experimental.pallas import tpu as pltpu


def _ffn_kernel(x_ref, w1_ref, b1_ref, w2_ref, b2_ref, o_ref):
    """One grid step = one tile of rows.

    x_ref  : (tm, C)
    w1_ref : (C, 4C)    b1_ref : (1, 4C)
    w2_ref : (4C, C)    b2_ref : (1, C)
    o_ref  : (tm, C)
    """
    x = x_ref[...]

    # h = relu(x @ W1 + b1)   -- MXU matmul (N = 4C), fp32 accumulate,
    # bias-add + ReLU on the VPU, overlapped with the MXU.
    h = jnp.dot(x, w1_ref[...], preferred_element_type=jnp.float32)
    h = jnp.maximum(h + b1_ref[...], 0.0)

    # out = h @ W2 + b2
    out = jnp.dot(h, w2_ref[...], preferred_element_type=jnp.float32)
    out = out + b2_ref[...]

    # Dropout(p=0.2) is identity in eval mode.
    o_ref[...] = out.astype(o_ref.dtype)


def feedforward_forward(x, w1, b1, w2, b2, *, block_rows=512):
    """Pallas equivalent of FeedForward.forward (eval mode).

    x  : (B, T, C) float32
    w1 : (C, 4C) float32   b1 : (4C,) float32   (transposed torch nn.Linear weights)
    w2 : (4C, C) float32   b2 : (C,)  float32
    returns (B, T, C) float32
    """
    B, T, C = x.shape
    Hd = w1.shape[1]
    M = B * T

    x2 = x.reshape(M, C)
    b1r = b1.reshape(1, Hd)
    b2r = b2.reshape(1, C)

    # Choose the row tile: whole array if it is small (block == full dim is
    # always a legal tiling), otherwise block_rows-row tiles with padding so
    # the tile divides evenly; padded rows are discarded afterwards.
    if M <= block_rows:
        tm = M
        Mp = M
    else:
        tm = block_rows
        Mp = pl.cdiv(M, tm) * tm
        if Mp != M:
            x2 = jnp.pad(x2, ((0, Mp - M), (0, 0)))

    grid = (Mp // tm,)

    flops = 2 * Mp * C * Hd * 2                       # two GEMMs
    bytes_accessed = 4 * (Mp * C * 2 + C * Hd * 2 + Hd + C)

    out = pl.pallas_call(
        _ffn_kernel,
        out_shape=jax.ShapeDtypeStruct((Mp, C), jnp.float32),
        grid_spec=pltpu.PrefetchScalarGridSpec(
            num_scalar_prefetch=0,
            grid=grid,
            in_specs=[
                pl.BlockSpec((tm, C), lambda i: (i, 0)),   # x rows (pipelined)
                pl.BlockSpec((C, Hd), lambda i: (0, 0)),   # W1 (VMEM-resident)
                pl.BlockSpec((1, Hd), lambda i: (0, 0)),   # b1 (VMEM-resident)
                pl.BlockSpec((Hd, C), lambda i: (0, 0)),   # W2 (VMEM-resident)
                pl.BlockSpec((1, C), lambda i: (0, 0)),    # b2 (VMEM-resident)
            ],
            out_specs=pl.BlockSpec((tm, C), lambda i: (i, 0)),
        ),
        compiler_params=pltpu.CompilerParams(
            dimension_semantics=("parallel",),
            vmem_limit_bytes=64 << 20,
        ),
        cost_estimate=pl.CostEstimate(
            flops=flops, transcendentals=0, bytes_accessed=bytes_accessed),
    )(x2, w1, b1r, w2, b2r)

    if Mp != M:
        out = out[:M]
    return out.reshape(B, T, C)


def _reference(x, w1, b1, w2, b2):
    h = jnp.maximum(x @ w1 + b1, 0.0)
    return h @ w2 + b2


if __name__ == "__main__":
    # Small deterministic config consistent with the module (n_embd = 384).
    n_embd = 384           # C
    hidden = 4 * n_embd    # 1536
    B, T = 2, 8

    key = jax.random.PRNGKey(0)
    kx, k1, kb1, k2, kb2 = jax.random.split(key, 5)

    x = jax.random.normal(kx, (B, T, n_embd), dtype=jnp.float32)
    # torch nn.Linear weight is (out, in); we store/apply the transpose (in, out)
    w1 = jax.random.normal(k1, (n_embd, hidden), dtype=jnp.float32) * 0.02
    b1 = jax.random.normal(kb1, (hidden,), dtype=jnp.float32) * 0.02
    w2 = jax.random.normal(k2, (hidden, n_embd), dtype=jnp.float32) * 0.02
    b2 = jax.random.normal(kb2, (n_embd,), dtype=jnp.float32) * 0.02

    out = feedforward_forward(x, w1, b1, w2, b2)
    out = jax.block_until_ready(out)

    ref = _reference(x, w1, b1, w2, b2)
    assert out.shape == (B, T, n_embd)
    assert jnp.allclose(out, ref, atol=1e-3, rtol=1e-3), "mismatch vs reference"

    print("KERNEL_OK")
</pallas_src>

<mosaic_0001>
module attributes {stable_mosaic.version = 11 : i64} {
  func.func @_ffn_kernel(%arg0: i32, %arg1: memref<16x384xf32, #tpu.memory_space<vmem>>, %arg2: memref<384x1536xf32, #tpu.memory_space<vmem>>, %arg3: memref<1x1536xf32, #tpu.memory_space<vmem>>, %arg4: memref<1536x384xf32, #tpu.memory_space<vmem>>, %arg5: memref<1x384xf32, #tpu.memory_space<vmem>>, %arg6: memref<16x384xf32, #tpu.memory_space<vmem>>) attributes {dimension_semantics = [#tpu.dimension_semantics<parallel>], iteration_bounds = array<i64: 1>, scalar_prefetch = 0 : i64, scratch_operands = 0 : i64, tpu.core_type = #tpu.core_type<tc>, window_params = [{transform_indices = @transform_0, window_bounds = array<i64: 16, 384>}, {pipeline_mode = #tpu.pipeline_mode<synchronous>, transform_indices = @transform_1, window_bounds = array<i64: 384, 1536>}, {pipeline_mode = #tpu.pipeline_mode<synchronous>, transform_indices = @transform_2, window_bounds = array<i64: 1, 1536>}, {pipeline_mode = #tpu.pipeline_mode<synchronous>, transform_indices = @transform_3, window_bounds = array<i64: 1536, 384>}, {pipeline_mode = #tpu.pipeline_mode<synchronous>, transform_indices = @transform_4, window_bounds = array<i64: 1, 384>}, {transform_indices = @transform_5, window_bounds = array<i64: 16, 384>}]} {
    %c0 = arith.constant 0 : index
    %c0_0 = arith.constant 0 : index
    %0 = vector.load %arg1[%c0, %c0_0] : memref<16x384xf32, #tpu.memory_space<vmem>>, vector<16x384xf32>
    %c0_1 = arith.constant 0 : index
    %c0_2 = arith.constant 0 : index
    %1 = vector.load %arg2[%c0_1, %c0_2] : memref<384x1536xf32, #tpu.memory_space<vmem>>, vector<384x1536xf32>
    %cst = arith.constant dense<0.000000e+00> : vector<16x1536xf32>
    %2 = tpu.matmul %0, %1, %cst {dimension_numbers = #tpu.dot_dimension_numbers<[1], [0], [0], [1], [0, 0, 1, 1], [], []>} : vector<16x384xf32>, vector<384x1536xf32>, vector<16x1536xf32> -> vector<16x1536xf32>
    %c0_3 = arith.constant 0 : index
    %c0_4 = arith.constant 0 : index
    %3 = vector.load %arg3[%c0_3, %c0_4] : memref<1x1536xf32, #tpu.memory_space<vmem>>, vector<1x1536xf32>
    %4 = vector.broadcast %3 : vector<1x1536xf32> to vector<16x1536xf32>
    %5 = arith.addf %2, %4 : vector<16x1536xf32>
    %cst_5 = arith.constant 0.000000e+00 : f32
    %6 = vector.broadcast %cst_5 : f32 to vector<16x1536xf32>
    %7 = arith.maximumf %5, %6 : vector<16x1536xf32>
    %c0_6 = arith.constant 0 : index
    %c0_7 = arith.constant 0 : index
    %8 = vector.load %arg4[%c0_6, %c0_7] : memref<1536x384xf32, #tpu.memory_space<vmem>>, vector<1536x384xf32>
    %cst_8 = arith.constant dense<0.000000e+00> : vector<16x384xf32>
    %9 = tpu.matmul %7, %8, %cst_8 {dimension_numbers = #tpu.dot_dimension_numbers<[1], [0], [0], [1], [0, 0, 1, 1], [], []>} : vector<16x1536xf32>, vector<1536x384xf32>, vector<16x384xf32> -> vector<16x384xf32>
    %c0_9 = arith.constant 0 : index
    %c0_10 = arith.constant 0 : index
    %10 = vector.load %arg5[%c0_9, %c0_10] : memref<1x384xf32, #tpu.memory_space<vmem>>, vector<1x384xf32>
    %11 = vector.broadcast %10 : vector<1x384xf32> to vector<16x384xf32>
    %12 = arith.addf %9, %11 : vector<16x384xf32>
    %c0_11 = arith.constant 0 : index
    %c0_12 = arith.constant 0 : index
    %13 = vector.load %arg6[%c0_11, %c0_12] : memref<16x384xf32, #tpu.memory_space<vmem>>, vector<16x384xf32>
    tpu.vector_store %arg6[%c0_11, %c0_12], %12 {strides = array<i32>} : memref<16x384xf32, #tpu.memory_space<vmem>>, vector<16x384xf32>,
    return
  }
  func.func @transform_0(%arg0: i32) -> (i32, i32) {
    %c0_i32 = arith.constant 0 : i32
    %c0_i32_0 = arith.constant 0 : i32
    return %arg0, %c0_i32 : i32, i32
  }
  func.func @transform_1(%arg0: i32) -> (i32, i32) {
    %c0_i32 = arith.constant 0 : i32
    %c0_i32_0 = arith.constant 0 : i32
    %c0_i32_1 = arith.constant 0 : i32
    return %c0_i32, %c0_i32_0 : i32, i32
  }
  func.func @transform_2(%arg0: i32) -> (i32, i32) {
    %c0_i32 = arith.constant 0 : i32
    %c0_i32_0 = arith.constant 0 : i32
    %c0_i32_1 = arith.constant 0 : i32
    return %c0_i32, %c0_i32_0 : i32, i32
  }
  func.func @transform_3(%arg0: i32) -> (i32, i32) {
    %c0_i32 = arith.constant 0 : i32
    %c0_i32_0 = arith.constant 0 : i32
    %c0_i32_1 = arith.constant 0 : i32
    return %c0_i32, %c0_i32_0 : i32, i32
  }
  func.func @transform_4(%arg0: i32) -> (i32, i32) {
    %c0_i32 = arith.constant 0 : i32
    %c0_i32_0 = arith.constant 0 : i32
    %c0_i32_1 = arith.constant 0 : i32
    return %c0_i32, %c0_i32_0 : i32, i32
  }
  func.func @transform_5(%arg0: i32) -> (i32, i32) {
    %c0_i32 = arith.constant 0 : i32
    %c0_i32_0 = arith.constant 0 : i32
    return %arg0, %c0_i32 : i32, i32
  }
}

</mosaic_0001>

<llo_original>
// kernel: tpu_custom_call.1
$region0: #{tpu_custom_call.1}
  #allocation0 [shape = 'u32[]', space=smem, size = 0x4, offset = 0x4, fixed_abs, tag = 'smem constant byte address 0x4 - core index']
  #allocation1 [shape = 'u32[144,128]{1,0:T(1,128)}', space=vmem, size = 0x12000, scoped, tag = 'internal scratch']
  %s0 = inlined_call_operand.hbm [shape: f32[16,384], index: 0, kind: input, shape index: {}]
  %s1 = inlined_call_operand.hbm [shape: f32[384,1536], index: 1, kind: input, shape index: {}]
  %s2 = inlined_call_operand.hbm [shape: f32[1,1536], index: 2, kind: input, shape index: {}]
  %s3 = inlined_call_operand.hbm [shape: f32[1536,384], index: 3, kind: input, shape index: {}]
  %s4 = inlined_call_operand.hbm [shape: f32[1,384], index: 4, kind: input, shape index: {}]
  %s5 = inlined_call_operand.hbm [shape: f32[16,384], index: 5, kind: output, shape index: {}]
  %s6 = sld [smem:[#allocation0]]
  $region50: #{tpu_custom_call.1} parent=0
    _
  %s8 = ssub.s32 1, %s6
  %s9 = scalar_select 0, %s8, %s6
  $region1: #{tpu_custom_call.1} parent=0
    #allocation2 [shape = 'u8[24576]{0}', space=vmem, size = 0x6000, scoped, tag = 'input window, operand 0, single buffered']
    #allocation3 [shape = 's32[1]{0}', space=sflag, size = 0x4, scoped, tag = 'scoped memory for tpu_custom_call.1']
    #allocation4 [shape = 's32[1]{0}', space=sflag, size = 0x4, scoped, tag = 'scoped memory for tpu_custom_call.1']
    #allocation5 [shape = 'u8[2359296]{0}', space=vmem, size = 0x240000, scoped, tag = 'input window, operand 1, single buffered']
    #allocation6 [shape = 's32[1]{0}', space=sflag, size = 0x4, scoped, tag = 'scoped memory for tpu_custom_call.1']
    #allocation7 [shape = 'u8[6144]{0}', space=vmem, size = 0x1800, scoped, tag = 'input window, operand 2, single buffered']
    #allocation8 [shape = 'u8[2359296]{0}', space=vmem, size = 0x240000, scoped, tag = 'input window, operand 3, single buffered']
    #allocation9 [shape = 's32[1]{0}', space=sflag, size = 0x4, scoped, tag = 'scoped memory for tpu_custom_call.1']
    #allocation10 [shape = 'u8[1536]{0}', space=vmem, size = 0x800, scoped, tag = 'input window, operand 4, single buffered']
    #allocation11 [shape = 'u8[24576]{0}', space=vmem, size = 0x6000, scoped, tag = 'output window, operand 0, single buffered']
    %10 = vsyncpa [#allocation3], 0
    %11 = vsyncpa [#allocation6], 0
    %12 = vsyncpa [#allocation9], 0
    %13 = vsyncpa [#allocation4], 0
    // Predicated region
    $region2: #{tpu_custom_call.1} parent=1 // pred_check
      _
    $region3: #{tpu_custom_call.1} parent=1 // pred_check_branch
      %15 = sbr.rel (0) target = $region5
    $region4: #{tpu_custom_call.1} parent=1 // pred_region
      %s17 = ssub.s32 768, 768
      %18 = vsyncadd [#allocation3], %s17
      %s19 = sshll.u32 [#allocation2], 4
      %s20 = int_to_ptr.vmem [resolvable:$true] %s19
      %25 = dma.hbm_to_vmem [thread:$0]  %s0, 768, %s20, [#allocation3], 384, 384, 24
    $region5: #{tpu_custom_call.1} parent=1 // pred_fallthru
      _
    // Predicated region
    $region6: #{tpu_custom_call.1} parent=1 // pred_check
      _
    $region7: #{tpu_custom_call.1} parent=1 // pred_check_branch
      %27 = sbr.rel (0) target = $region9
    $region8: #{tpu_custom_call.1} parent=1 // pred_region
      %s29 = ssub.s32 73728, 73728
      %30 = vsyncadd [#allocation6], %s29
      %s31 = sshll.u32 [#allocation5], 4
      %s32 = int_to_ptr.vmem [resolvable:$true] %s31
      %37 = dma.hbm_to_vmem [thread:$0]  %s1, 73728, %s32, [#allocation6], 1536, 1536, 96
    $region9: #{tpu_custom_call.1} parent=1 // pred_fallthru
      _
    // Predicated region
    $region10: #{tpu_custom_call.1} parent=1 // pred_check
      _
    $region11: #{tpu_custom_call.1} parent=1 // pred_check_branch
      %39 = sbr.rel (0) target = $region13
    $region12: #{tpu_custom_call.1} parent=1 // pred_region
      %s41 = ssub.s32 192, 192
      %42 = vsyncadd [#allocation6], %s41
      %s44 = sshll.u32 [#allocation7], 4
      %s45 = int_to_ptr.vmem [resolvable:$true] %s44
      %47 = dma.hbm_to_vmem [thread:$0]  %s2, 192, %s45, [#allocation6]
    $region13: #{tpu_custom_call.1} parent=1 // pred_fallthru
      _
    // Predicated region
    $region14: #{tpu_custom_call.1} parent=1 // pred_check
      _
    $region15: #{tpu_custom_call.1} parent=1 // pred_check_branch
      %49 = sbr.rel (0) target = $region17
    $region16: #{tpu_custom_call.1} parent=1 // pred_region
      %s51 = ssub.s32 73728, 73728
      %52 = vsyncadd [#allocation9], %s51
      %s53 = sshll.u32 [#allocation8], 4
      %s54 = int_to_ptr.vmem [resolvable:$true] %s53
      %59 = dma.hbm_to_vmem [thread:$0]  %s3, 73728, %s54, [#allocation9], 384, 384, 24
    $region17: #{tpu_custom_call.1} parent=1 // pred_fallthru
      _
    // Predicated region
    $region18: #{tpu_custom_call.1} parent=1 // pred_check
      _
    $region19: #{tpu_custom_call.1} parent=1 // pred_check_branch
      %61 = sbr.rel (0) target = $region21
    $region20: #{tpu_custom_call.1} parent=1 // pred_region
      %s63 = ssub.s32 48, 48
      %64 = vsyncadd [#allocation9], %s63
      %s66 = sshll.u32 [#allocation10], 4
      %s67 = int_to_ptr.vmem [resolvable:$true] %s66
      %69 = dma.hbm_to_vmem [thread:$0]  %s4, 48, %s67, [#allocation9]
    $region21: #{tpu_custom_call.1} parent=1 // pred_fallthru
      _
    // Predicated region
    $region22: #{tpu_custom_call.1} parent=1 // pred_check
      _
    $region23: #{tpu_custom_call.1} parent=1 // pred_check_branch
      %71 = sbr.rel (0) target = $region25
    $region24: #{tpu_custom_call.1} parent=1 // pred_region
      %72 = dma.done [#allocation3], 768
    $region25: #{tpu_custom_call.1} parent=1 // pred_fallthru
      _
    // Predicated region
    $region26: #{tpu_custom_call.1} parent=1 // pred_check
      _
    $region27: #{tpu_custom_call.1} parent=1 // pred_check_branch
      %74 = sbr.rel (0) target = $region29
    $region28: #{tpu_custom_call.1} parent=1 // pred_region
      %75 = dma.done [#allocation6], 73728
    $region29: #{tpu_custom_call.1} parent=1 // pred_fallthru
      _
    // Predicated region
    $region30: #{tpu_custom_call.1} parent=1 // pred_check
      _
    $region31: #{tpu_custom_call.1} parent=1 // pred_check_branch
      %77 = sbr.rel (0) target = $region33
    $region32: #{tpu_custom_call.1} parent=1 // pred_region
      %78 = dma.done [#allocation6], 192
    $region33: #{tpu_custom_call.1} parent=1 // pred_fallthru
      _
    // Predicated region
    $region34: #{tpu_custom_call.1} parent=1 // pred_check
      _
    $region35: #{tpu_custom_call.1} parent=1 // pred_check_branch
      %80 = sbr.rel (0) target = $region37
    $region36: #{tpu_custom_call.1} parent=1 // pred_region
      %81 = dma.done [#allocation9], 73728
    $region37: #{tpu_custom_call.1} parent=1 // pred_fallthru
      _
    // Predicated region
    $region38: #{tpu_custom_call.1} parent=1 // pred_check
      _
    $region39: #{tpu_custom_call.1} parent=1 // pred_check_branch
      %83 = sbr.rel (0) target = $region41
    $region40: #{tpu_custom_call.1} parent=1 // pred_region
      %84 = dma.done [#allocation9], 48
    $region41: #{tpu_custom_call.1} parent=1 // pred_fallthru
      _
    %v85 = vld [vmem:[#allocation2] sm:$0xff]
    %v86 = vld [vmem:[#allocation2 + $0x8] sm:$0xff]
    %v87 = vld [vmem:[#allocation2 + $0x10] sm:$0xff]
    %v88 = vld [vmem:[#allocation2 + $0x18] sm:$0xff]
    %v89 = vld [vmem:[#allocation2 + $0x20] sm:$0xff]
    %v90 = vld [vmem:[#allocation2 + $0x28] sm:$0xff]
    %v91 = vld [vmem:[#allocation5] sm:$0xff]
    %v92 = vld [vmem:[#allocation5 + $0x8] sm:$0xff]
    %v93 = vld [vmem:[#allocation5 + $0x10] sm:$0xff]
    %v94 = vld [vmem:[#allocation5 + $0x18] sm:$0xff]
    %v95 = vld [vmem:[#allocation5 + $0x20] sm:$0xff]
    %v96 = vld [vmem:[#allocation5 + $0x28] sm:$0xff]
    %v97 = vld [vmem:[#allocation5 + $0x30] sm:$0xff]
    %v98 = vld [vmem:[#allocation5 + $0x38] sm:$0xff]
    %v99 = vld [vmem:[#allocation5 + $0x40] sm:$0xff]
    %v100 = vld [vmem:[#allocation5 + $0x48] sm:$0xff]
    %v101 = vld [vmem:[#allocation5 + $0x50] sm:$0xff]
    %v102 = vld [vmem:[#allocation5 + $0x58] sm:$0xff]
    %v103 = vld [vmem:[#allocation5 + $0x60] sm:$0xff]
    %v104 = vld [vmem:[#allocation5 + $0x68] sm:$0xff]
    %v105 = vld [vmem:[#allocation5 + $0x70] sm:$0xff]
    %v106 = vld [vmem:[#allocation5 + $0x78] sm:$0xff]
    %v107 = vld [vmem:[#allocation5 + $0x80] sm:$0xff]
    %v108 = vld [vmem:[#allocation5 + $0x88] sm:$0xff]
    %v109 = vld [vmem:[#allocation5 + $0x90] sm:$0xff]
    %v110 = vld [vmem:[#allocation5 + $0x98] sm:$0xff]
    %v111 = vld [vmem:[#allocation5 + $0xa0] sm:$0xff]
    %v112 = vld [vmem:[#allocation5 + $0xa8] sm:$0xff]
    %v113 = vld [vmem:[#allocation5 + $0xb0] sm:$0xff]
    %v114 = vld [vmem:[#allocation5 + $0xb8] sm:$0xff]
    %v115 = vld [vmem:[#allocation5 + $0xc0] sm:$0xff]
    %v116 = vld [vmem:[#allocation5 + $0xc8] sm:$0xff]
    %v117 = vld [vmem:[#allocation5 + $0xd0] sm:$0xff]
    %v118 = vld [vmem:[#allocation5 + $0xd8] sm:$0xff]
    %v119 = vld [vmem:[#allocation5 + $0xe0] sm:$0xff]
    %v120 = vld [vmem:[#allocation5 + $0xe8] sm:$0xff]
    %v121 = vld [vmem:[#allocation5 + $0xf0] sm:$0xff]
    %v122 = vld [vmem:[#allocation5 + $0xf8] sm:$0xff]
    %v123 = vld [vmem:[#allocation5 + $0x100] sm:$0xff]
    %v124 = vld [vmem:[#allocation5 + $0x108] sm:$0xff]
    %v125 = vld [vmem:[#allocation5 + $0x110] sm:$0xff]
    %v126 = vld [vmem:[#allocation5 + $0x118] sm:$0xff]
    %v127 = vld [vmem:[#allocation5 + $0x120] sm:$0xff]
    %v128 = vld [vmem:[#allocation5 + $0x128] sm:$0xff]
    %v129 = vld [vmem:[#allocation5 + $0x130] sm:$0xff]
    %v130 = vld [vmem:[#allocation5 + $0x138] sm:$0xff]
    %v131 = vld [vmem:[#allocation5 + $0x140] sm:$0xff]
    %v132 = vld [vmem:[#allocation5 + $0x148] sm:$0xff]
    %v133 = vld [vmem:[#allocation5 + $0x150] sm:$0xff]
    %v134 = vld [vmem:[#allocation5 + $0x158] sm:$0xff]
    %v135 = vld [vmem:[#allocation5 + $0x160] sm:$0xff]
    %v136 = vld [vmem:[#allocation5 + $0x168] sm:$0xff]
    %v137 = vld [vmem:[#allocation5 + $0x170] sm:$0xff]
    %v138 = vld [vmem:[#allocation5 + $0x178] sm:$0xff]
    %v139 = vld [vmem:[#allocation5 + $0x180] sm:$0xff]
    %v140 = vld [vmem:[#allocation5 + $0x188] sm:$0xff]
    %v141 = vld [vmem:[#allocation5 + $0x190] sm:$0xff]
    %v142 = vld [vmem:[#allocation5 + $0x198] sm:$0xff]
    %v143 = vld [vmem:[#allocation5 + $0x1a0] sm:$0xff]
    %v144 = vld [vmem:[#allocation5 + $0x1a8] sm:$0xff]
    %v145 = vld [vmem:[#allocation5 + $0x1b0] sm:$0xff]
    %v146 = vld [vmem:[#allocation5 + $0x1b8] sm:$0xff]
    %v147 = vld [vmem:[#allocation5 + $0x1c0] sm:$0xff]
    %v148 = vld [vmem:[#allocation5 + $0x1c8] sm:$0xff]
    %v149 = vld [vmem:[#allocation5 + $0x1d0] sm:$0xff]
    %v150 = vld [vmem:[#allocation5 + $0x1d8] sm:$0xff]
    %v151 = vld [vmem:[#allocation5 + $0x1e0] sm:$0xff]
    %v152 = vld [vmem:[#allocation5 + $0x1e8] sm:$0xff]
    %v153 = vld [vmem:[#allocation5 + $0x1f0] sm:$0xff]
    %v154 = vld [vmem:[#allocation5 + $0x1f8] sm:$0xff]
    %v155 = vld [vmem:[#allocation5 + $0x200] sm:$0xff]
    %v156 = vld [vmem:[#allocation5 + $0x208] sm:$0xff]
    %v157 = vld [vmem:[#allocation5 + $0x210] sm:$0xff]
    %v158 = vld [vmem:[#allocation5 + $0x218] sm:$0xff]
    %v159 = vld [vmem:[#allocation5 + $0x220] sm:$0xff]
    %v160 = vld [vmem:[#allocation5 + $0x228] sm:$0xff]
    %v161 = vld [vmem:[#allocation5 + $0x230] sm:$0xff]
    %v162 = vld [vmem:[#allocation5 + $0x238] sm:$0xff]
    %v163 = vld [vmem:[#allocation5 + $0x240] sm:$0xff]
    %v164 = vld [vmem:[#allocation5 + $0x248] sm:$0xff]
    %v165 = vld [vmem:[#allocation5 + $0x250] sm:$0xff]
    %v166 = vld [vmem:[#allocation5 + $0x258] sm:$0xff]
    %v167 = vld [vmem:[#allocation5 + $0x260] sm:$0xff]
    %v168 = vld [vmem:[#allocation5 + $0x268] sm:$0xff]
    %v169 = vld [vmem:[#allocation5 + $0x270] sm:$0xff]
    %v170 = vld [vmem:[#allocation5 + $0x278] sm:$0xff]
    %v171 = vld [vmem:[#allocation5 + $0x280] sm:$0xff]
    %v172 = vld [vmem:[#allocation5 + $0x288] sm:$0xff]
    %v173 = vld [vmem:[#allocation5 + $0x290] sm:$0xff]
    %v174 = vld [vmem:[#allocation5 + $0x298] sm:$0xff]
    %v175 = vld [vmem:[#allocation5 + $0x2a0] sm:$0xff]
    %v176 = vld [vmem:[#allocation5 + $0x2a8] sm:$0xff]
    %v177 = vld [vmem:[#allocation5 + $0x2b0] sm:$0xff]
    %v178 = vld [vmem:[#allocation5 + $0x2b8] sm:$0xff]
    %v179 = vld [vmem:[#allocation5 + $0x2c0] sm:$0xff]
    %v180 = vld [vmem:[#allocation5 + $0x2c8] sm:$0xff]
    %v181 = vld [vmem:[#allocation5 + $0x2d0] sm:$0xff]
    %v182 = vld [vmem:[#allocation5 + $0x2d8] sm:$0xff]
    %v183 = vld [vmem:[#allocation5 + $0x2e0] sm:$0xff]
    %v184 = vld [vmem:[#allocation5 + $0x2e8] sm:$0xff]
    %v185 = vld [vmem:[#allocation5 + $0x2f0] sm:$0xff]
    %v186 = vld [vmem:[#allocation5 + $0x2f8] sm:$0xff]
    %v187 = vld [vmem:[#allocation5 + $0x300] sm:$0xff]
    %v188 = vld [vmem:[#allocation5 + $0x308] sm:$0xff]
    %v189 = vld [vmem:[#allocation5 + $0x310] sm:$0xff]
    %v190 = vld [vmem:[#allocation5 + $0x318] sm:$0xff]
    %v191 = vld [vmem:[#allocation5 + $0x320] sm:$0xff]
    %v192 = vld [vmem:[#allocation5 + $0x328] sm:$0xff]
    %v193 = vld [vmem:[#allocation5 + $0x330] sm:$0xff]
    %v194 = vld [vmem:[#allocation5 + $0x338] sm:$0xff]
    %v195 = vld [vmem:[#allocation5 + $0x340] sm:$0xff]
    %v196 = vld [vmem:[#allocation5 + $0x348] sm:$0xff]
    %v197 = vld [vmem:[#allocation5 + $0x350] sm:$0xff]
    %v198 = vld [vmem:[#allocation5 + $0x358] sm:$0xff]
    %v199 = vld [vmem:[#allocation5 + $0x360] sm:$0xff]
    %v200 = vld [vmem:[#allocation5 + $0x368] sm:$0xff]
    %v201 = vld [vmem:[#allocation5 + $0x370] sm:$0xff]
    %v202 = vld [vmem:[#allocation5 + $0x378] sm:$0xff]
    %v203 = vld [vmem:[#allocation5 + $0x380] sm:$0xff]
    %v204 = vld [vmem:[#allocation5 + $0x388] sm:$0xff]
    %v205 = vld [vmem:[#allocation5 + $0x390] sm:$0xff]
    %v206 = vld [vmem:[#allocation5 + $0x398] sm:$0xff]
    %v207 = vld [vmem:[#allocation5 + $0x3a0] sm:$0xff]
    %v208 = vld [vmem:[#allocation5 + $0x3a8] sm:$0xff]
    %v209 = vld [vmem:[#allocation5 + $0x3b0] sm:$0xff]
    %v210 = vld [vmem:[#allocation5 + $0x3b8] sm:$0xff]
    %v211 = vld [vmem:[#allocation5 + $0x3c0] sm:$0xff]
    %v212 = vld [vmem:[#allocation5 + $0x3c8] sm:$0xff]
    %v213 = vld [vmem:[#allocation5 + $0x3d0] sm:$0xff]
    %v214 = vld [vmem:[#allocation5 + $0x3d8] sm:$0xff]
    %v215 = vld [vmem:[#allocation5 + $0x3e0] sm:$0xff]
    %v216 = vld [vmem:[#allocation5 + $0x3e8] sm:$0xff]
    %v217 = vld [vmem:[#allocation5 + $0x3f0] sm:$0xff]
    %v218 = vld [vmem:[#allocation5 + $0x3f8] sm:$0xff]
    %v219 = vld [vmem:[#allocation5 + $0x400] sm:$0xff]
    %v220 = vld [vmem:[#allocation5 + $0x408] sm:$0xff]
    %v221 = vld [vmem:[#allocation5 + $0x410] sm:$0xff]
    %v222 = vld [vmem:[#allocation5 + $0x418] sm:$0xff]
    %v223 = vld [vmem:[#allocation5 + $0x420] sm:$0xff]
    %v224 = vld [vmem:[#allocation5 + $0x428] sm:$0xff]
    %v225 = vld [vmem:[#allocation5 + $0x430] sm:$0xff]
    %v226 = vld [vmem:[#allocation5 + $0x438] sm:$0xff]
    %v227 = vld [vmem:[#allocation5 + $0x440] sm:$0xff]
    %v228 = vld [vmem:[#allocation5 + $0x448] sm:$0xff]
    %v229 = vld [vmem:[#allocation5 + $0x450] sm:$0xff]
    %v230 = vld [vmem:[#allocation5 + $0x458] sm:$0xff]
    %v231 = vld [vmem:[#allocation5 + $0x460] sm:$0xff]
    %v232 = vld [vmem:[#allocation5 + $0x468] sm:$0xff]
    %v233 = vld [vmem:[#allocation5 + $0x470] sm:$0xff]
    %v234 = vld [vmem:[#allocation5 + $0x478] sm:$0xff]
    %v235 = vld [vmem:[#allocation5 + $0x480] sm:$0xff]
    %v236 = vld [vmem:[#allocation5 + $0x488] sm:$0xff]
    %v237 = vld [vmem:[#allocation5 + $0x490] sm:$0xff]
    %v238 = vld [vmem:[#allocation5 + $0x498] sm:$0xff]
    %v239 = vld [vmem:[#allocation5 + $0x4a0] sm:$0xff]
    %v240 = vld [vmem:[#allocation5 + $0x4a8] sm:$0xff]
    %v241 = vld [vmem:[#allocation5 + $0x4b0] sm:$0xff]
    %v242 = vld [vmem:[#allocation5 + $0x4b8] sm:$0xff]
    %v243 = vld [vmem:[#allocation5 + $0x4c0] sm:$0xff]
    %v244 = vld [vmem:[#allocation5 + $0x4c8] sm:$0xff]
    %v245 = vld [vmem:[#allocation5 + $0x4d0] sm:$0xff]
    %v246 = vld [vmem:[#allocation5 + $0x4d8] sm:$0xff]
    %v247 = vld [vmem:[#allocation5 + $0x4e0] sm:$0xff]
    %v248 = vld [vmem:[#allocation5 + $0x4e8] sm:$0xff]
    %v249 = vld [vmem:[#allocation5 + $0x4f0] sm:$0xff]
    %v250 = vld [vmem:[#allocation5 + $0x4f8] sm:$0xff]
    %v251 = vld [vmem:[#allocation5 + $0x500] sm:$0xff]
    %v252 = vld [vmem:[#allocation5 + $0x508] sm:$0xff]
    %v253 = vld [vmem:[#allocation5 + $0x510] sm:$0xff]
    %v254 = vld [vmem:[#allocation5 + $0x518] sm:$0xff]
    %v255 = vld [vmem:[#allocation5 + $0x520] sm:$0xff]
    %v256 = vld [vmem:[#allocation5 + $0x528] sm:$0xff]
    %v257 = vld [vmem:[#allocation5 + $0x530] sm:$0xff]
    %v258 = vld [vmem:[#allocation5 + $0x538] sm:$0xff]
    %v259 = vld [vmem:[#allocation5 + $0x540] sm:$0xff]
    %v260 = vld [vmem:[#allocation5 + $0x548] sm:$0xff]
    %v261 = vld [vmem:[#allocation5 + $0x550] sm:$0xff]
    %v262 = vld [vmem:[#allocation5 + $0x558] sm:$0xff]
    %v263 = vld [vmem:[#allocation5 + $0x560] sm:$0xff]
    %v264 = vld [vmem:[#allocation5 + $0x568] sm:$0xff]
    %v265 = vld [vmem:[#allocation5 + $0x570] sm:$0xff]
    %v266 = vld [vmem:[#allocation5 + $0x578] sm:$0xff]
    %v267 = vld [vmem:[#allocation5 + $0x580] sm:$0xff]
    %v268 = vld [vmem:[#allocation5 + $0x588] sm:$0xff]
    %v269 = vld [vmem:[#allocation5 + $0x590] sm:$0xff]
    %v270 = vld [vmem:[#allocation5 + $0x598] sm:$0xff]
    %v271 = vld [vmem:[#allocation5 + $0x5a0] sm:$0xff]
    %v272 = vld [vmem:[#allocation5 + $0x5a8] sm:$0xff]
    %v273 = vld [vmem:[#allocation5 + $0x5b0] sm:$0xff]
    %v274 = vld [vmem:[#allocation5 + $0x5b8] sm:$0xff]
    %v275 = vld [vmem:[#allocation5 + $0x5c0] sm:$0xff]
    %v276 = vld [vmem:[#allocation5 + $0x5c8] sm:$0xff]
    %v277 = vld [vmem:[#allocation5 + $0x5d0] sm:$0xff]
    %v278 = vld [vmem:[#allocation5 + $0x5d8] sm:$0xff]
    %v279 = vld [vmem:[#allocation5 + $0x5e0] sm:$0xff]
    %v280 = vld [vmem:[#allocation5 + $0x5e8] sm:$0xff]
    %v281 = vld [vmem:[#allocation5 + $0x5f0] sm:$0xff]
    %v282 = vld [vmem:[#allocation5 + $0x5f8] sm:$0xff]
    %v283 = vld [vmem:[#allocation5 + $0x600] sm:$0xff]
    %v284 = vld [vmem:[#allocation5 + $0x608] sm:$0xff]
    %v285 = vld [vmem:[#allocation5 + $0x610] sm:$0xff]
    %v286 = vld [vmem:[#allocation5 + $0x618] sm:$0xff]
    %v287 = vld [vmem:[#allocation5 + $0x620] sm:$0xff]
    %v288 = vld [vmem:[#allocation5 + $0x628] sm:$0xff]
    %v289 = vld [vmem:[#allocation5 + $0x630] sm:$0xff]
    %v290 = vld [vmem:[#allocation5 + $0x638] sm:$0xff]
    %v291 = vld [vmem:[#allocation5 + $0x640] sm:$0xff]
    %v292 = vld [vmem:[#allocation5 + $0x648] sm:$0xff]
    %v293 = vld [vmem:[#allocation5 + $0x650] sm:$0xff]
    %v294 = vld [vmem:[#allocation5 + $0x658] sm:$0xff]
    %v295 = vld [vmem:[#allocation5 + $0x660] sm:$0xff]
    %v296 = vld [vmem:[#allocation5 + $0x668] sm:$0xff]
    %v297 = vld [vmem:[#allocation5 + $0x670] sm:$0xff]
    %v298 = vld [vmem:[#allocation5 + $0x678] sm:$0xff]
    %v299 = vld [vmem:[#allocation5 + $0x680] sm:$0xff]
    %v300 = vld [vmem:[#allocation5 + $0x688] sm:$0xff]
    %v301 = vld [vmem:[#allocation5 + $0x690] sm:$0xff]
    %v302 = vld [vmem:[#allocation5 + $0x698] sm:$0xff]
    %v303 = vld [vmem:[#allocation5 + $0x6a0] sm:$0xff]
    %v304 = vld [vmem:[#allocation5 + $0x6a8] sm:$0xff]
    %v305 = vld [vmem:[#allocation5 + $0x6b0] sm:$0xff]
    %v306 = vld [vmem:[#allocation5 + $0x6b8] sm:$0xff]
    %v307 = vld [vmem:[#allocation5 + $0x6c0] sm:$0xff]
    %v308 = vld [vmem:[#allocation5 + $0x6c8] sm:$0xff]
    %v309 = vld [vmem:[#allocation5 + $0x6d0] sm:$0xff]
    %v310 = vld [vmem:[#allocation5 + $0x6d8] sm:$0xff]
    %v311 = vld [vmem:[#allocation5 + $0x6e0] sm:$0xff]
    %v312 = vld [vmem:[#allocation5 + $0x6e8] sm:$0xff]
    %v313 = vld [vmem:[#allocation5 + $0x6f0] sm:$0xff]
    %v314 = vld [vmem:[#allocation5 + $0x6f8] sm:$0xff]
    %v315 = vld [vmem:[#allocation5 + $0x700] sm:$0xff]
    %v316 = vld [vmem:[#allocation5 + $0x708] sm:$0xff]
    %v317 = vld [vmem:[#allocation5 + $0x710] sm:$0xff]
    %v318 = vld [vmem:[#allocation5 + $0x718] sm:$0xff]
    %v319 = vld [vmem:[#allocation5 + $0x720] sm:$0xff]
    %v320 = vld [vmem:[#allocation5 + $0x728] sm:$0xff]
    %v321 = vld [vmem:[#allocation5 + $0x730] sm:$0xff]
    %v322 = vld [vmem:[#allocation5 + $0x738] sm:$0xff]
    %v323 = vld [vmem:[#allocation5 + $0x740] sm:$0xff]
    %v324 = vld [vmem:[#allocation5 + $0x748] sm:$0xff]
    %v325 = vld [vmem:[#allocation5 + $0x750] sm:$0xff]
    %v326 = vld [vmem:[#allocation5 + $0x758] sm:$0xff]
    %v327 = vld [vmem:[#allocation5 + $0x760] sm:$0xff]
    %v328 = vld [vmem:[#allocation5 + $0x768] sm:$0xff]
    %v329 = vld [vmem:[#allocation5 + $0x770] sm:$0xff]
    %v330 = vld [vmem:[#allocation5 + $0x778] sm:$0xff]
    %v331 = vld [vmem:[#allocation5 + $0x780] sm:$0xff]
    %v332 = vld [vmem:[#allocation5 + $0x788] sm:$0xff]
    %v333 = vld [vmem:[#allocation5 + $0x790] sm:$0xff]
    %v334 = vld [vmem:[#allocation5 + $0x798] sm:$0xff]
    %v335 = vld [vmem:[#allocation5 + $0x7a0] sm:$0xff]
    %v336 = vld [vmem:[#allocation5 + $0x7a8] sm:$0xff]
    %v337 = vld [vmem:[#allocation5 + $0x7b0] sm:$0xff]
    %v338 = vld [vmem:[#allocation5 + $0x7b8] sm:$0xff]
    %v339 = vld [vmem:[#allocation5 + $0x7c0] sm:$0xff]
    %v340 = vld [vmem:[#allocation5 + $0x7c8] sm:$0xff]
    %v341 = vld [vmem:[#allocation5 + $0x7d0] sm:$0xff]
    %v342 = vld [vmem:[#allocation5 + $0x7d8] sm:$0xff]
    %v343 = vld [vmem:[#allocation5 + $0x7e0] sm:$0xff]
    %v344 = vld [vmem:[#allocation5 + $0x7e8] sm:$0xff]
    %v345 = vld [vmem:[#allocation5 + $0x7f0] sm:$0xff]
    %v346 = vld [vmem:[#allocation5 + $0x7f8] sm:$0xff]
    %v347 = vld [vmem:[#allocation5 + $0x800] sm:$0xff]
    %v348 = vld [vmem:[#allocation5 + $0x808] sm:$0xff]
    %v349 = vld [vmem:[#allocation5 + $0x810] sm:$0xff]
    %v350 = vld [vmem:[#allocation5 + $0x818] sm:$0xff]
    %v351 = vld [vmem:[#allocation5 + $0x820] sm:$0xff]
    %v352 = vld [vmem:[#allocation5 + $0x828] sm:$0xff]
    %v353 = vld [vmem:[#allocation5 + $0x830] sm:$0xff]
    %v354 = vld [vmem:[#allocation5 + $0x838] sm:$0xff]
    %v355 = vld [vmem:[#allocation5 + $0x840] sm:$0xff]
    %v356 = vld [vmem:[#allocation5 + $0x848] sm:$0xff]
    %v357 = vld [vmem:[#allocation5 + $0x850] sm:$0xff]
    %v358 = vld [vmem:[#allocation5 + $0x858] sm:$0xff]
    %v359 = vld [vmem:[#allocation5 + $0x860] sm:$0xff]
    %v360 = vld [vmem:[#allocation5 + $0x868] sm:$0xff]
    %v361 = vld [vmem:[#allocation5 + $0x870] sm:$0xff]
    %v362 = vld [vmem:[#allocation5 + $0x878] sm:$0xff]
    %v363 = vld [vmem:[#allocation5 + $0x880] sm:$0xff]
    %v364 = vld [vmem:[#allocation5 + $0x888] sm:$0xff]
    %v365 = vld [vmem:[#allocation5 + $0x890] sm:$0xff]
    %v366 = vld [vmem:[#allocation5 + $0x898] sm:$0xff]
    %v367 = vld [vmem:[#allocation5 + $0x8a0] sm:$0xff]
    %v368 = vld [vmem:[#allocation5 + $0x8a8] sm:$0xff]
    %v369 = vld [vmem:[#allocation5 + $0x8b0] sm:$0xff]
    %v370 = vld [vmem:[#allocation5 + $0x8b8] sm:$0xff]
    %v371 = vld [vmem:[#allocation5 + $0x8c0] sm:$0xff]
    %v372 = vld [vmem:[#allocation5 + $0x8c8] sm:$0xff]
    %v373 = vld [vmem:[#allocation5 + $0x8d0] sm:$0xff]
    %v374 = vld [vmem:[#allocation5 + $0x8d8] sm:$0xff]
    %v375 = vld [vmem:[#allocation5 + $0x8e0] sm:$0xff]
    %v376 = vld [vmem:[#allocation5 + $0x8e8] sm:$0xff]
    %v377 = vld [vmem:[#allocation5 + $0x8f0] sm:$0xff]
    %v378 = vld [vmem:[#allocation5 + $0x8f8] sm:$0xff]
    %v379 = vld [vmem:[#allocation5 + $0x900] sm:$0xff]
    %v380 = vld [vmem:[#allocation5 + $0x908] sm:$0xff]
    %v381 = vld [vmem:[#allocation5 + $0x910] sm:$0xff]
    %v382 = vld [vmem:[#allocation5 + $0x918] sm:$0xff]
    %v383 = vld [vmem:[#allocation5 + $0x920] sm:$0xff]
    %v384 = vld [vmem:[#allocation5 + $0x928] sm:$0xff]
    %v385 = vld [vmem:[#allocation5 + $0x930] sm:$0xff]
    %v386 = vld [vmem:[#allocation5 + $0x938] sm:$0xff]
    %v387 = vld [vmem:[#allocation5 + $0x940] sm:$0xff]
    %v388 = vld [vmem:[#allocation5 + $0x948] sm:$0xff]
    %v389 = vld [vmem:[#allocation5 + $0x950] sm:$0xff]
    %v390 = vld [vmem:[#allocation5 + $0x958] sm:$0xff]
    %v391 = vld [vmem:[#allocation5 + $0x960] sm:$0xff]
    %v392 = vld [vmem:[#allocation5 + $0x968] sm:$0xff]
    %v393 = vld [vmem:[#allocation5 + $0x970] sm:$0xff]
    %v394 = vld [vmem:[#allocation5 + $0x978] sm:$0xff]
    %v395 = vld [vmem:[#allocation5 + $0x980] sm:$0xff]
    %v396 = vld [vmem:[#allocation5 + $0x988] sm:$0xff]
    %v397 = vld [vmem:[#allocation5 + $0x990] sm:$0xff]
    %v398 = vld [vmem:[#allocation5 + $0x998] sm:$0xff]
    %v399 = vld [vmem:[#allocation5 + $0x9a0] sm:$0xff]
    %v400 = vld [vmem:[#allocation5 + $0x9a8] sm:$0xff]
    %v401 = vld [vmem:[#allocation5 + $0x9b0] sm:$0xff]
    %v402 = vld [vmem:[#allocation5 + $0x9b8] sm:$0xff]
    %v403 = vld [vmem:[#allocation5 + $0x9c0] sm:$0xff]
    %v404 = vld [vmem:[#allocation5 + $0x9c8] sm:$0xff]
    %v405 = vld [vmem:[#allocation5 + $0x9d0] sm:$0xff]
    %v406 = vld [vmem:[#allocation5 + $0x9d8] sm:$0xff]
    %v407 = vld [vmem:[#allocation5 + $0x9e0] sm:$0xff]
    %v408 = vld [vmem:[#allocation5 + $0x9e8] sm:$0xff]
    %v409 = vld [vmem:[#allocation5 + $0x9f0] sm:$0xff]
    %v410 = vld [vmem:[#allocation5 + $0x9f8] sm:$0xff]
    %v411 = vld [vmem:[#allocation5 + $0xa00] sm:$0xff]
    %v412 = vld [vmem:[#allocation5 + $0xa08] sm:$0xff]
    %v413 = vld [vmem:[#allocation5 + $0xa10] sm:$0xff]
    %v414 = vld [vmem:[#allocation5 + $0xa18] sm:$0xff]
    %v415 = vld [vmem:[#allocation5 + $0xa20] sm:$0xff]
    %v416 = vld [vmem:[#allocation5 + $0xa28] sm:$0xff]
    %v417 = vld [vmem:[#allocation5 + $0xa30] sm:$0xff]
    %v418 = vld [vmem:[#allocation5 + $0xa38] sm:$0xff]
    %v419 = vld [vmem:[#allocation5 + $0xa40] sm:$0xff]
    %v420 = vld [vmem:[#allocation5 + $0xa48] sm:$0xff]
    %v421 = vld [vmem:[#allocation5 + $0xa50] sm:$0xff]
    %v422 = vld [vmem:[#allocation5 + $0xa58] sm:$0xff]
    %v423 = vld [vmem:[#allocation5 + $0xa60] sm:$0xff]
    %v424 = vld [vmem:[#allocation5 + $0xa68] sm:$0xff]
    %v425 = vld [vmem:[#allocation5 + $0xa70] sm:$0xff]
    %v426 = vld [vmem:[#allocation5 + $0xa78] sm:$0xff]
    %v427 = vld [vmem:[#allocation5 + $0xa80] sm:$0xff]
    %v428 = vld [vmem:[#allocation5 + $0xa88] sm:$0xff]
    %v429 = vld [vmem:[#allocation5 + $0xa90] sm:$0xff]
    %v430 = vld [vmem:[#allocation5 + $0xa98] sm:$0xff]
    %v431 = vld [vmem:[#allocation5 + $0xaa0] sm:$0xff]
    %v432 = vld [vmem:[#allocation5 + $0xaa8] sm:$0xff]
    %v433 = vld [vmem:[#allocation5 + $0xab0] sm:$0xff]
    %v434 = vld [vmem:[#allocation5 + $0xab8] sm:$0xff]
    %v435 = vld [vmem:[#allocation5 + $0xac0] sm:$0xff]
    %v436 = vld [vmem:[#allocation5 + $0xac8] sm:$0xff]
    %v437 = vld [vmem:[#allocation5 + $0xad0] sm:$0xff]
    %v438 = vld [vmem:[#allocation5 + $0xad8] sm:$0xff]
    %v439 = vld [vmem:[#allocation5 + $0xae0] sm:$0xff]
    %v440 = vld [vmem:[#allocation5 + $0xae8] sm:$0xff]
    %v441 = vld [vmem:[#allocation5 + $0xaf0] sm:$0xff]
    %v442 = vld [vmem:[#allocation5 + $0xaf8] sm:$0xff]
    %v443 = vld [vmem:[#allocation5 + $0xb00] sm:$0xff]
    %v444 = vld [vmem:[#allocation5 + $0xb08] sm:$0xff]
    %v445 = vld [vmem:[#allocation5 + $0xb10] sm:$0xff]
    %v446 = vld [vmem:[#allocation5 + $0xb18] sm:$0xff]
    %v447 = vld [vmem:[#allocation5 + $0xb20] sm:$0xff]
    %v448 = vld [vmem:[#allocation5 + $0xb28] sm:$0xff]
    %v449 = vld [vmem:[#allocation5 + $0xb30] sm:$0xff]
    %v450 = vld [vmem:[#allocation5 + $0xb38] sm:$0xff]
    %v451 = vld [vmem:[#allocation5 + $0xb40] sm:$0xff]
    %v452 = vld [vmem:[#allocation5 + $0xb48] sm:$0xff]
    %v453 = vld [vmem:[#allocation5 + $0xb50] sm:$0xff]
    %v454 = vld [vmem:[#allocation5 + $0xb58] sm:$0xff]
    %v455 = vld [vmem:[#allocation5 + $0xb60] sm:$0xff]
    %v456 = vld [vmem:[#allocation5 + $0xb68] sm:$0xff]
    %v457 = vld [vmem:[#allocation5 + $0xb70] sm:$0xff]
    %v458 = vld [vmem:[#allocation5 + $0xb78] sm:$0xff]
    %v459 = vld [vmem:[#allocation5 + $0xb80] sm:$0xff]
    %v460 = vld [vmem:[#allocation5 + $0xb88] sm:$0xff]
    %v461 = vld [vmem:[#allocation5 + $0xb90] sm:$0xff]
    %v462 = vld [vmem:[#allocation5 + $0xb98] sm:$0xff]
    %v463 = vld [vmem:[#allocation5 + $0xba0] sm:$0xff]
    %v464 = vld [vmem:[#allocation5 + $0xba8] sm:$0xff]
    %v465 = vld [vmem:[#allocation5 + $0xbb0] sm:$0xff]
    %v466 = vld [vmem:[#allocation5 + $0xbb8] sm:$0xff]
    %v467 = vld [vmem:[#allocation5 + $0xbc0] sm:$0xff]
    %v468 = vld [vmem:[#allocation5 + $0xbc8] sm:$0xff]
    %v469 = vld [vmem:[#allocation5 + $0xbd0] sm:$0xff]
    %v470 = vld [vmem:[#allocation5 + $0xbd8] sm:$0xff]
    %v471 = vld [vmem:[#allocation5 + $0xbe0] sm:$0xff]
    %v472 = vld [vmem:[#allocation5 + $0xbe8] sm:$0xff]
    %v473 = vld [vmem:[#allocation5 + $0xbf0] sm:$0xff]
    %v474 = vld [vmem:[#allocation5 + $0xbf8] sm:$0xff]
    %v475 = vld [vmem:[#allocation5 + $0xc00] sm:$0xff]
    %v476 = vld [vmem:[#allocation5 + $0xc08] sm:$0xff]
    %v477 = vld [vmem:[#allocation5 + $0xc10] sm:$0xff]
    %v478 = vld [vmem:[#allocation5 + $0xc18] sm:$0xff]
    %v479 = vld [vmem:[#allocation5 + $0xc20] sm:$0xff]
    %v480 = vld [vmem:[#allocation5 + $0xc28] sm:$0xff]
    %v481 = vld [vmem:[#allocation5 + $0xc30] sm:$0xff]
    %v482 = vld [vmem:[#allocation5 + $0xc38] sm:$0xff]
    %v483 = vld [vmem:[#allocation5 + $0xc40] sm:$0xff]
    %v484 = vld [vmem:[#allocation5 + $0xc48] sm:$0xff]
    %v485 = vld [vmem:[#allocation5 + $0xc50] sm:$0xff]
    %v486 = vld [vmem:[#allocation5 + $0xc58] sm:$0xff]
    %v487 = vld [vmem:[#allocation5 + $0xc60] sm:$0xff]
    %v488 = vld [vmem:[#allocation5 + $0xc68] sm:$0xff]
    %v489 = vld [vmem:[#allocation5 + $0xc70] sm:$0xff]
    %v490 = vld [vmem:[#allocation5 + $0xc78] sm:$0xff]
    %v491 = vld [vmem:[#allocation5 + $0xc80] sm:$0xff]
    %v492 = vld [vmem:[#allocation5 + $0xc88] sm:$0xff]
    %v493 = vld [vmem:[#allocation5 + $0xc90] sm:$0xff]
    %v494 = vld [vmem:[#allocation5 + $0xc98] sm:$0xff]
    %v495 = vld [vmem:[#allocation5 + $0xca0] sm:$0xff]
    %v496 = vld [vmem:[#allocation5 + $0xca8] sm:$0xff]
    %v497 = vld [vmem:[#allocation5 + $0xcb0] sm:$0xff]
    %v498 = vld [vmem:[#allocation5 + $0xcb8] sm:$0xff]
    %v499 = vld [vmem:[#allocation5 + $0xcc0] sm:$0xff]
    %v500 = vld [vmem:[#allocation5 + $0xcc8] sm:$0xff]
    %v501 = vld [vmem:[#allocation5 + $0xcd0] sm:$0xff]
    %v502 = vld [vmem:[#allocation5 + $0xcd8] sm:$0xff]
    %v503 = vld [vmem:[#allocation5 + $0xce0] sm:$0xff]
    %v504 = vld [vmem:[#allocation5 + $0xce8] sm:$0xff]
    %v505 = vld [vmem:[#allocation5 + $0xcf0] sm:$0xff]
    %v506 = vld [vmem:[#allocation5 + $0xcf8] sm:$0xff]
    %v507 = vld [vmem:[#allocation5 + $0xd00] sm:$0xff]
    %v508 = vld [vmem:[#allocation5 + $0xd08] sm:$0xff]
    %v509 = vld [vmem:[#allocation5 + $0xd10] sm:$0xff]
    %v510 = vld [vmem:[#allocation5 + $0xd18] sm:$0xff]
    %v511 = vld [vmem:[#allocation5 + $0xd20] sm:$0xff]
    %v512 = vld [vmem:[#allocation5 + $0xd28] sm:$0xff]
    %v513 = vld [vmem:[#allocation5 + $0xd30] sm:$0xff]
    %v514 = vld [vmem:[#allocation5 + $0xd38] sm:$0xff]
    %v515 = vld [vmem:[#allocation5 + $0xd40] sm:$0xff]
    %v516 = vld [vmem:[#allocation5 + $0xd48] sm:$0xff]
    %v517 = vld [vmem:[#allocation5 + $0xd50] sm:$0xff]
    %v518 = vld [vmem:[#allocation5 + $0xd58] sm:$0xff]
    %v519 = vld [vmem:[#allocation5 + $0xd60] sm:$0xff]
    %v520 = vld [vmem:[#allocation5 + $0xd68] sm:$0xff]
    %v521 = vld [vmem:[#allocation5 + $0xd70] sm:$0xff]
    %v522 = vld [vmem:[#allocation5 + $0xd78] sm:$0xff]
    %v523 = vld [vmem:[#allocation5 + $0xd80] sm:$0xff]
    %v524 = vld [vmem:[#allocation5 + $0xd88] sm:$0xff]
    %v525 = vld [vmem:[#allocation5 + $0xd90] sm:$0xff]
    %v526 = vld [vmem:[#allocation5 + $0xd98] sm:$0xff]
    %v527 = vld [vmem:[#allocation5 + $0xda0] sm:$0xff]
    %v528 = vld [vmem:[#allocation5 + $0xda8] sm:$0xff]
    %v529 = vld [vmem:[#allocation5 + $0xdb0] sm:$0xff]
    %v530 = vld [vmem:[#allocation5 + $0xdb8] sm:$0xff]
    %v531 = vld [vmem:[#allocation5 + $0xdc0] sm:$0xff]
    %v532 = vld [vmem:[#allocation5 + $0xdc8] sm:$0xff]
    %v533 = vld [vmem:[#allocation5 + $0xdd0] sm:$0xff]
    %v534 = vld [vmem:[#allocation5 + $0xdd8] sm:$0xff]
    %v535 = vld [vmem:[#allocation5 + $0xde0] sm:$0xff]
    %v536 = vld [vmem:[#allocation5 + $0xde8] sm:$0xff]
    %v537 = vld [vmem:[#allocation5 + $0xdf0] sm:$0xff]
    %v538 = vld [vmem:[#allocation5 + $0xdf8] sm:$0xff]
    %v539 = vld [vmem:[#allocation5 + $0xe00] sm:$0xff]
    %v540 = vld [vmem:[#allocation5 + $0xe08] sm:$0xff]
    %v541 = vld [vmem:[#allocation5 + $0xe10] sm:$0xff]
    %v542 = vld [vmem:[#allocation5 + $0xe18] sm:$0xff]
    %v543 = vld [vmem:[#allocation5 + $0xe20] sm:$0xff]
    %v544 = vld [vmem:[#allocation5 + $0xe28] sm:$0xff]
    %v545 = vld [vmem:[#allocation5 + $0xe30] sm:$0xff]
    %v546 = vld [vmem:[#allocation5 + $0xe38] sm:$0xff]
    %v547 = vld [vmem:[#allocation5 + $0xe40] sm:$0xff]
    %v548 = vld [vmem:[#allocation5 + $0xe48] sm:$0xff]
    %v549 = vld [vmem:[#allocation5 + $0xe50] sm:$0xff]
    %v550 = vld [vmem:[#allocation5 + $0xe58] sm:$0xff]
    %v551 = vld [vmem:[#allocation5 + $0xe60] sm:$0xff]
    %v552 = vld [vmem:[#allocation5 + $0xe68] sm:$0xff]
    %v553 = vld [vmem:[#allocation5 + $0xe70] sm:$0xff]
    %v554 = vld [vmem:[#allocation5 + $0xe78] sm:$0xff]
    %v555 = vld [vmem:[#allocation5 + $0xe80] sm:$0xff]
    %v556 = vld [vmem:[#allocation5 + $0xe88] sm:$0xff]
    %v557 = vld [vmem:[#allocation5 + $0xe90] sm:$0xff]
    %v558 = vld [vmem:[#allocation5 + $0xe98] sm:$0xff]
    %v559 = vld [vmem:[#allocation5 + $0xea0] sm:$0xff]
    %v560 = vld [vmem:[#allocation5 + $0xea8] sm:$0xff]
    %v561 = vld [vmem:[#allocation5 + $0xeb0] sm:$0xff]
    %v562 = vld [vmem:[#allocation5 + $0xeb8] sm:$0xff]
    %v563 = vld [vmem:[#allocation5 + $0xec0] sm:$0xff]
    %v564 = vld [vmem:[#allocation5 + $0xec8] sm:$0xff]
    %v565 = vld [vmem:[#allocation5 + $0xed0] sm:$0xff]
    %v566 = vld [vmem:[#allocation5 + $0xed8] sm:$0xff]
    %v567 = vld [vmem:[#allocation5 + $0xee0] sm:$0xff]
    %v568 = vld [vmem:[#allocation5 + $0xee8] sm:$0xff]
    %v569 = vld [vmem:[#allocation5 + $0xef0] sm:$0xff]
    %v570 = vld [vmem:[#allocation5 + $0xef8] sm:$0xff]
    %v571 = vld [vmem:[#allocation5 + $0xf00] sm:$0xff]
    %v572 = vld [vmem:[#allocation5 + $0xf08] sm:$0xff]
    %v573 = vld [vmem:[#allocation5 + $0xf10] sm:$0xff]
    %v574 = vld [vmem:[#allocation5 + $0xf18] sm:$0xff]
    %v575 = vld [vmem:[#allocation5 + $0xf20] sm:$0xff]
    %v576 = vld [vmem:[#allocation5 + $0xf28] sm:$0xff]
    %v577 = vld [vmem:[#allocation5 + $0xf30] sm:$0xff]
    %v578 = vld [vmem:[#allocation5 + $0xf38] sm:$0xff]
    %v579 = vld [vmem:[#allocation5 + $0xf40] sm:$0xff]
    %v580 = vld [vmem:[#allocation5 + $0xf48] sm:$0xff]
    %v581 = vld [vmem:[#allocation5 + $0xf50] sm:$0xff]
    %v582 = vld [vmem:[#allocation5 + $0xf58] sm:$0xff]
    %v583 = vld [vmem:[#allocation5 + $0xf60] sm:$0xff]
    %v584 = vld [vmem:[#allocation5 + $0xf68] sm:$0xff]
    %v585 = vld [vmem:[#allocation5 + $0xf70] sm:$0xff]
    %v586 = vld [vmem:[#allocation5 + $0xf78] sm:$0xff]
    %v587 = vld [vmem:[#allocation5 + $0xf80] sm:$0xff]
    %v588 = vld [vmem:[#allocation5 + $0xf88] sm:$0xff]
    %v589 = vld [vmem:[#allocation5 + $0xf90] sm:$0xff]
    %v590 = vld [vmem:[#allocation5 + $0xf98] sm:$0xff]
    %v591 = vld [vmem:[#allocation5 + $0xfa0] sm:$0xff]
    %v592 = vld [vmem:[#allocation5 + $0xfa8] sm:$0xff]
    %v593 = vld [vmem:[#allocation5 + $0xfb0] sm:$0xff]
    %v594 = vld [vmem:[#allocation5 + $0xfb8] sm:$0xff]
    %v595 = vld [vmem:[#allocation5 + $0xfc0] sm:$0xff]
    %v596 = vld [vmem:[#allocation5 + $0xfc8] sm:$0xff]
    %v597 = vld [vmem:[#allocation5 + $0xfd0] sm:$0xff]
    %v598 = vld [vmem:[#allocation5 + $0xfd8] sm:$0xff]
    %v599 = vld [vmem:[#allocation5 + $0xfe0] sm:$0xff]
    %v600 = vld [vmem:[#allocation5 + $0xfe8] sm:$0xff]
    %v601 = vld [vmem:[#allocation5 + $0xff0] sm:$0xff]
    %v602 = vld [vmem:[#allocation5 + $0xff8] sm:$0xff]
    %v603 = vld [vmem:[#allocation5 + $0x1000] sm:$0xff]
    %v604 = vld [vmem:[#allocation5 + $0x1008] sm:$0xff]
    %v605 = vld [vmem:[#allocation5 + $0x1010] sm:$0xff]
    %v606 = vld [vmem:[#allocation5 + $0x1018] sm:$0xff]
    %v607 = vld [vmem:[#allocation5 + $0x1020] sm:$0xff]
    %v608 = vld [vmem:[#allocation5 + $0x1028] sm:$0xff]
    %v609 = vld [vmem:[#allocation5 + $0x1030] sm:$0xff]
    %v610 = vld [vmem:[#allocation5 + $0x1038] sm:$0xff]
    %v611 = vld [vmem:[#allocation5 + $0x1040] sm:$0xff]
    %v612 = vld [vmem:[#allocation5 + $0x1048] sm:$0xff]
    %v613 = vld [vmem:[#allocation5 + $0x1050] sm:$0xff]
    %v614 = vld [vmem:[#allocation5 + $0x1058] sm:$0xff]
    %v615 = vld [vmem:[#allocation5 + $0x1060] sm:$0xff]
    %v616 = vld [vmem:[#allocation5 + $0x1068] sm:$0xff]
    %v617 = vld [vmem:[#allocation5 + $0x1070] sm:$0xff]
    %v618 = vld [vmem:[#allocation5 + $0x1078] sm:$0xff]
    %v619 = vld [vmem:[#allocation5 + $0x1080] sm:$0xff]
    %v620 = vld [vmem:[#allocation5 + $0x1088] sm:$0xff]
    %v621 = vld [vmem:[#allocation5 + $0x1090] sm:$0xff]
    %v622 = vld [vmem:[#allocation5 + $0x1098] sm:$0xff]
    %v623 = vld [vmem:[#allocation5 + $0x10a0] sm:$0xff]
    %v624 = vld [vmem:[#allocation5 + $0x10a8] sm:$0xff]
    %v625 = vld [vmem:[#allocation5 + $0x10b0] sm:$0xff]
    %v626 = vld [vmem:[#allocation5 + $0x10b8] sm:$0xff]
    %v627 = vld [vmem:[#allocation5 + $0x10c0] sm:$0xff]
    %v628 = vld [vmem:[#allocation5 + $0x10c8] sm:$0xff]
    %v629 = vld [vmem:[#allocation5 + $0x10d0] sm:$0xff]
    %v630 = vld [vmem:[#allocation5 + $0x10d8] sm:$0xff]
    %v631 = vld [vmem:[#allocation5 + $0x10e0] sm:$0xff]
    %v632 = vld [vmem:[#allocation5 + $0x10e8] sm:$0xff]
    %v633 = vld [vmem:[#allocation5 + $0x10f0] sm:$0xff]
    %v634 = vld [vmem:[#allocation5 + $0x10f8] sm:$0xff]
    %v635 = vld [vmem:[#allocation5 + $0x1100] sm:$0xff]
    %v636 = vld [vmem:[#allocation5 + $0x1108] sm:$0xff]
    %v637 = vld [vmem:[#allocation5 + $0x1110] sm:$0xff]
    %v638 = vld [vmem:[#allocation5 + $0x1118] sm:$0xff]
    %v639 = vld [vmem:[#allocation5 + $0x1120] sm:$0xff]
    %v640 = vld [vmem:[#allocation5 + $0x1128] sm:$0xff]
    %v641 = vld [vmem:[#allocation5 + $0x1130] sm:$0xff]
    %v642 = vld [vmem:[#allocation5 + $0x1138] sm:$0xff]
    %v643 = vld [vmem:[#allocation5 + $0x1140] sm:$0xff]
    %v644 = vld [vmem:[#allocation5 + $0x1148] sm:$0xff]
    %v645 = vld [vmem:[#allocation5 + $0x1150] sm:$0xff]
    %v646 = vld [vmem:[#allocation5 + $0x1158] sm:$0xff]
    %v647 = vld [vmem:[#allocation5 + $0x1160] sm:$0xff]
    %v648 = vld [vmem:[#allocation5 + $0x1168] sm:$0xff]
    %v649 = vld [vmem:[#allocation5 + $0x1170] sm:$0xff]
    %v650 = vld [vmem:[#allocation5 + $0x1178] sm:$0xff]
    %v651 = vld [vmem:[#allocation5 + $0x1180] sm:$0xff]
    %v652 = vld [vmem:[#allocation5 + $0x1188] sm:$0xff]
    %v653 = vld [vmem:[#allocation5 + $0x1190] sm:$0xff]
    %v654 = vld [vmem:[#allocation5 + $0x1198] sm:$0xff]
    %v655 = vld [vmem:[#allocation5 + $0x11a0] sm:$0xff]
    %v656 = vld [vmem:[#allocation5 + $0x11a8] sm:$0xff]
    %v657 = vld [vmem:[#allocation5 + $0x11b0] sm:$0xff]
    %v658 = vld [vmem:[#allocation5 + $0x11b8] sm:$0xff]
    %v659 = vld [vmem:[#allocation5 + $0x11c0] sm:$0xff]
    %v660 = vld [vmem:[#allocation5 + $0x11c8] sm:$0xff]
    %v661 = vld [vmem:[#allocation5 + $0x11d0] sm:$0xff]
    %v662 = vld [vmem:[#allocation5 + $0x11d8] sm:$0xff]
    %v663 = vld [vmem:[#allocation5 + $0x11e0] sm:$0xff]
    %v664 = vld [vmem:[#allocation5 + $0x11e8] sm:$0xff]
    %v665 = vld [vmem:[#allocation5 + $0x11f0] sm:$0xff]
    %v666 = vld [vmem:[#allocation5 + $0x11f8] sm:$0xff]
    %v667 = vld [vmem:[#allocation7] sm:$0xff]
    %v668 = vld [vmem:[#allocation7 + $0x8] sm:$0xf]
    %v671 = vlaneseq
    %v672 = vshrl.u32 %v671, 7
    %v673 = vsub.s32 0, %v672
    %v674 = vrot.slane %v667, %v673
    %v675 = vlaneseq
    %v676 = vshrl.u32 %v675, 7
    %v677 = vsub.s32 1, %v676
    %v678 = vrot.slane %v667, %v677
    %v679 = vlaneseq
    %v680 = vshrl.u32 %v679, 7
    %v681 = vsub.s32 2, %v680
    %v682 = vrot.slane %v667, %v681
    %v683 = vlaneseq
    %v684 = vshrl.u32 %v683, 7
    %v685 = vsub.s32 3, %v684
    %v686 = vrot.slane %v667, %v685
    %v687 = vlaneseq
    %v688 = vshrl.u32 %v687, 7
    %v689 = vsub.s32 4, %v688
    %v690 = vrot.slane %v667, %v689
    %v691 = vlaneseq
    %v692 = vshrl.u32 %v691, 7
    %v693 = vsub.s32 5, %v692
    %v694 = vrot.slane %v667, %v693
    %v695 = vlaneseq
    %v696 = vshrl.u32 %v695, 7
    %v697 = vsub.s32 6, %v696
    %v698 = vrot.slane %v667, %v697
    %v699 = vlaneseq
    %v700 = vshrl.u32 %v699, 7
    %v701 = vsub.s32 7, %v700
    %v702 = vrot.slane %v667, %v701
    %v703 = vlaneseq
    %v704 = vshrl.u32 %v703, 7
    %v705 = vsub.s32 0, %v704
    %v706 = vrot.slane %v668, %v705
    %v707 = vlaneseq
    %v708 = vshrl.u32 %v707, 7
    %v709 = vsub.s32 1, %v708
    %v710 = vrot.slane %v668, %v709
    %v711 = vlaneseq
    %v712 = vshrl.u32 %v711, 7
    %v713 = vsub.s32 2, %v712
    %v714 = vrot.slane %v668, %v713
    %v715 = vlaneseq
    %v716 = vshrl.u32 %v715, 7
    %v717 = vsub.s32 3, %v716
    %v718 = vrot.slane %v668, %v717
    %731 = vmatprep.subr.mxu0 %v92
    %732 = vmatpush1.msra.mxu0 %v91
    %733 = vmatprep.subr.mxu0 %v104
    %734 = vmatpush1.msra.mxu0 %v103
    %735 = vmatprep.subr.mxu0 %v116
    %736 = vmatpush1.msra.mxu0 %v115
    %737 = vmatprep.subr.mxu0 %v128
    %738 = vmatpush1.msra.mxu0 %v127
    %739 = vmatprep.subr.mxu0 %v140
    %740 = vmatpush1.msra.mxu0 %v139
    %741 = vmatprep.subr.mxu0 %v152
    %742 = vmatpush1.msra.mxu0 %v151
    %743 = vmatprep.subr.mxu0 %v164
    %744 = vmatpush1.msra.mxu0 %v163
    %745 = vmatprep.subr.mxu0 %v176
    %746 = vmatpush1.msra.mxu0 %v175
    %747 = vmatprep.subr.mxu0 %v188
    %748 = vmatpush1.msra.mxu0 %v187
    %749 = vmatprep.subr.mxu0 %v200
    %750 = vmatpush1.msra.mxu0 %v199
    %751 = vmatprep.subr.mxu0 %v212
    %752 = vmatpush1.msra.mxu0 %v211
    %753 = vmatprep.subr.mxu0 %v224
    %754 = vmatpush1.msra.mxu0 %v223
    %755 = vmatprep.subr.mxu0 %v236
    %756 = vmatpush1.msra.mxu0 %v235
    %757 = vmatprep.subr.mxu0 %v248
    %758 = vmatpush1.msra.mxu0 %v247
    %759 = vmatprep.subr.mxu0 %v260
    %760 = vmatpush1.msra.mxu0 %v259
    %761 = vmatprep.subr.mxu0 %v272
    %762 = vmatpush1.msra.mxu0 %v271
    %763 = vmatprep.subr.mxu0 %v284
    %764 = vmatpush1.msra.mxu0 %v283
    %765 = vmatprep.subr.mxu0 %v296
    %766 = vmatpush1.msra.mxu0 %v295
    %767 = vmatprep.subr.mxu0 %v308
    %768 = vmatpush1.msra.mxu0 %v307
    %769 = vmatprep.subr.mxu0 %v320
    %770 = vmatpush1.msra.mxu0 %v319
    %771 = vmatprep.subr.mxu0 %v332
    %772 = vmatpush1.msra.mxu0 %v331
    %773 = vmatprep.subr.mxu0 %v344
    %774 = vmatpush1.msra.mxu0 %v343
    %775 = vmatprep.subr.mxu0 %v356
    %776 = vmatpush1.msra.mxu0 %v355
    %777 = vmatprep.subr.mxu0 %v368
    %778 = vmatpush1.msra.mxu0 %v367
    %779 = vmatprep.subr.mxu0 %v380
    %780 = vmatpush1.msra.mxu0 %v379
    %781 = vmatprep.subr.mxu0 %v392
    %782 = vmatpush1.msra.mxu0 %v391
    %783 = vmatprep.subr.mxu0 %v404
    %784 = vmatpush1.msra.mxu0 %v403
    %785 = vmatprep.subr.mxu0 %v416
    %786 = vmatpush1.msra.mxu0 %v415
    %787 = vmatprep.subr.mxu0 %v428
    %788 = vmatpush1.msra.mxu0 %v427
    %789 = vmatprep.subr.mxu0 %v440
    %790 = vmatpush1.msra.mxu0 %v439
    %791 = vmatprep.subr.mxu0 %v452
    %792 = vmatpush1.msra.mxu0 %v451
    %793 = vmatprep.subr.mxu0 %v464
    %794 = vmatpush1.msra.mxu0 %v463
    %795 = vmatprep.mubr.f32.mxu0 %v86
    %796 = vmatmul.mubr.f32.gmra.mrb[0].mxu0 %v85
    %v797 = vpop.f32.mrb[0].mxu0
    %v798 = vadd.f32 %v674, %v797
    %v799 = vpop.f32.mrb[0].mxu0
    %v800 = vadd.f32 %v678, %v799
    %801 = vmatprep.mubr.f32.mxu0 %v89
    %802 = vmatmul.mubr.f32.gmra.mrb[0].mxu0 %v88
    %v803 = vpop.f32.mrb[0].mxu0
    %v804 = vadd.f32 %v674, %v803
    %v805 = vpop.f32.mrb[0].mxu0
    %v806 = vadd.f32 %v678, %v805
    %807 = vdwg.mxu0
    %808 = vmatprep.subr.mxu0 %v476
    %809 = vmatpush1.msra.mxu0 %v475
    %810 = vmatprep.subr.mxu0 %v488
    %811 = vmatpush1.msra.mxu0 %v487
    %812 = vmatprep.subr.mxu0 %v500
    %813 = vmatpush1.msra.mxu0 %v499
    %814 = vmatprep.subr.mxu0 %v512
    %815 = vmatpush1.msra.mxu0 %v511
    %816 = vmatprep.subr.mxu0 %v524
    %817 = vmatpush1.msra.mxu0 %v523
    %818 = vmatprep.subr.mxu0 %v536
    %819 = vmatpush1.msra.mxu0 %v535
    %820 = vmatprep.subr.mxu0 %v548
    %821 = vmatpush1.msra.mxu0 %v547
    %822 = vmatprep.subr.mxu0 %v560
    %823 = vmatpush1.msra.mxu0 %v559
    %824 = vmatprep.subr.mxu0 %v572
    %825 = vmatpush1.msra.mxu0 %v571
    %826 = vmatprep.subr.mxu0 %v584
    %827 = vmatpush1.msra.mxu0 %v583
    %828 = vmatprep.subr.mxu0 %v596
    %829 = vmatpush1.msra.mxu0 %v595
    %830 = vmatprep.subr.mxu0 %v608
    %831 = vmatpush1.msra.mxu0 %v607
    %832 = vmatprep.subr.mxu0 %v620
    %833 = vmatpush1.msra.mxu0 %v619
    %834 = vmatprep.subr.mxu0 %v632
    %835 = vmatpush1.msra.mxu0 %v631
    %836 = vmatprep.subr.mxu0 %v644
    %837 = vmatpush1.msra.mxu0 %v643
    %838 = vmatprep.subr.mxu0 %v656
    %839 = vmatpush1.msra.mxu0 %v655
    %840 = vmatprep.subr.mxu0 0.0
    %841 = vmatpush1.msra.mxu0 0.0
    %842 = vmatprep.subr.mxu0 0.0
    %843 = vmatpush1.msra.mxu0 0.0
    %844 = vmatprep.subr.mxu0 0.0
    %845 = vmatpush1.msra.mxu0 0.0
    %846 = vmatprep.subr.mxu0 0.0
    %847 = vmatpush1.msra.mxu0 0.0
    %848 = vmatprep.subr.mxu0 0.0
    %849 = vmatpush1.msra.mxu0 0.0
    %850 = vmatprep.subr.mxu0 0.0
    %851 = vmatpush1.msra.mxu0 0.0
    %852 = vmatprep.subr.mxu0 0.0
    %853 = vmatpush1.msra.mxu0 0.0
    %854 = vmatprep.subr.mxu0 0.0
    %855 = vmatpush1.msra.mxu0 0.0
    %856 = vmatprep.subr.mxu0 0.0
    %857 = vmatpush1.msra.mxu0 0.0
    %858 = vmatprep.subr.mxu0 0.0
    %859 = vmatpush1.msra.mxu0 0.0
    %860 = vmatprep.subr.mxu0 0.0
    %861 = vmatpush1.msra.mxu0 0.0
    %862 = vmatprep.subr.mxu0 0.0
    %863 = vmatpush1.msra.mxu0 0.0
    %864 = vmatprep.subr.mxu0 0.0
    %865 = vmatpush1.msra.mxu0 0.0
    %866 = vmatprep.subr.mxu0 0.0
    %867 = vmatpush1.msra.mxu0 0.0
    %868 = vmatprep.subr.mxu0 0.0
    %869 = vmatpush1.msra.mxu0 0.0
    %870 = vmatprep.subr.mxu0 0.0
    %871 = vmatpush1.msra.mxu0 0.0
    %872 = vmatprep.mubr.f32.mxu0 0.0
    %873 = vmatmul.mubr.f32.gmra.mrb[0].mxu0 %v87
    %v874 = vpop.f32.mrb[0].mxu0
    %v875 = vadd.f32 %v798, %v874
    %v876 = vpop.f32.mrb[0].mxu0
    %v877 = vadd.f32 %v800, %v876
    %878 = vmatprep.mubr.f32.mxu0 0.0
    %879 = vmatmul.mubr.f32.gmra.mrb[0].mxu0 %v90
    %v880 = vpop.f32.mrb[0].mxu0
    %v881 = vadd.f32 %v804, %v880
    %v882 = vpop.f32.mrb[0].mxu0
    %v883 = vadd.f32 %v806, %v882
    %884 = vdwg.mxu0
    %885 = vmatprep.subr.mxu0 %v94
    %886 = vmatpush1.msra.mxu0 %v93
    %887 = vmatprep.subr.mxu0 %v106
    %888 = vmatpush1.msra.mxu0 %v105
    %889 = vmatprep.subr.mxu0 %v118
    %890 = vmatpush1.msra.mxu0 %v117
    %891 = vmatprep.subr.mxu0 %v130
    %892 = vmatpush1.msra.mxu0 %v129
    %893 = vmatprep.subr.mxu0 %v142
    %894 = vmatpush1.msra.mxu0 %v141
    %895 = vmatprep.subr.mxu0 %v154
    %896 = vmatpush1.msra.mxu0 %v153
    %897 = vmatprep.subr.mxu0 %v166
    %898 = vmatpush1.msra.mxu0 %v165
    %899 = vmatprep.subr.mxu0 %v178
    %900 = vmatpush1.msra.mxu0 %v177
    %901 = vmatprep.subr.mxu0 %v190
    %902 = vmatpush1.msra.mxu0 %v189
    %903 = vmatprep.subr.mxu0 %v202
    %904 = vmatpush1.msra.mxu0 %v201
    %905 = vmatprep.subr.mxu0 %v214
    %906 = vmatpush1.msra.mxu0 %v213
    %907 = vmatprep.subr.mxu0 %v226
    %908 = vmatpush1.msra.mxu0 %v225
    %909 = vmatprep.subr.mxu0 %v238
    %910 = vmatpush1.msra.mxu0 %v237
    %911 = vmatprep.subr.mxu0 %v250
    %912 = vmatpush1.msra.mxu0 %v249
    %913 = vmatprep.subr.mxu0 %v262
    %914 = vmatpush1.msra.mxu0 %v261
    %915 = vmatprep.subr.mxu0 %v274
    %916 = vmatpush1.msra.mxu0 %v273
    %917 = vmatprep.subr.mxu0 %v286
    %918 = vmatpush1.msra.mxu0 %v285
    %919 = vmatprep.subr.mxu0 %v298
    %920 = vmatpush1.msra.mxu0 %v297
    %921 = vmatprep.subr.mxu0 %v310
    %922 = vmatpush1.msra.mxu0 %v309
    %923 = vmatprep.subr.mxu0 %v322
    %924 = vmatpush1.msra.mxu0 %v321
    %925 = vmatprep.subr.mxu0 %v334
    %926 = vmatpush1.msra.mxu0 %v333
    %927 = vmatprep.subr.mxu0 %v346
    %928 = vmatpush1.msra.mxu0 %v345
    %929 = vmatprep.subr.mxu0 %v358
    %930 = vmatpush1.msra.mxu0 %v357
    %931 = vmatprep.subr.mxu0 %v370
    %932 = vmatpush1.msra.mxu0 %v369
    %933 = vmatprep.subr.mxu0 %v382
    %934 = vmatpush1.msra.mxu0 %v381
    %935 = vmatprep.subr.mxu0 %v394
    %936 = vmatpush1.msra.mxu0 %v393
    %937 = vmatprep.subr.mxu0 %v406
    %938 = vmatpush1.msra.mxu0 %v405
    %939 = vmatprep.subr.mxu0 %v418
    %940 = vmatpush1.msra.mxu0 %v417
    %941 = vmatprep.subr.mxu0 %v430
    %942 = vmatpush1.msra.mxu0 %v429
    %943 = vmatprep.subr.mxu0 %v442
    %944 = vmatpush1.msra.mxu0 %v441
    %945 = vmatprep.subr.mxu0 %v454
    %946 = vmatpush1.msra.mxu0 %v453
    %947 = vmatprep.subr.mxu0 %v466
    %948 = vmatpush1.msra.mxu0 %v465
    %949 = vmatprep.mubr.f32.mxu0 %v86
    %950 = vmatmul.mubr.f32.gmra.mrb[0].mxu0 %v85
    %v951 = vpop.f32.mrb[0].mxu0
    %v952 = vadd.f32 %v682, %v951
    %v953 = vpop.f32.mrb[0].mxu0
    %v954 = vadd.f32 %v686, %v953
    %955 = vmatprep.mubr.f32.mxu0 %v89
    %956 = vmatmul.mubr.f32.gmra.mrb[0].mxu0 %v88
    %v957 = vpop.f32.mrb[0].mxu0
    %v958 = vadd.f32 %v682, %v957
    %v959 = vpop.f32.mrb[0].mxu0
    %v960 = vadd.f32 %v686, %v959
    %961 = vdwg.mxu0
    %962 = vmatprep.subr.mxu0 %v478
    %963 = vmatpush1.msra.mxu0 %v477
    %964 = vmatprep.subr.mxu0 %v490
    %965 = vmatpush1.msra.mxu0 %v489
    %966 = vmatprep.subr.mxu0 %v502
    %967 = vmatpush1.msra.mxu0 %v501
    %968 = vmatprep.subr.mxu0 %v514
    %969 = vmatpush1.msra.mxu0 %v513
    %970 = vmatprep.subr.mxu0 %v526
    %971 = vmatpush1.msra.mxu0 %v525
    %972 = vmatprep.subr.mxu0 %v538
    %973 = vmatpush1.msra.mxu0 %v537
    %974 = vmatprep.subr.mxu0 %v550
    %975 = vmatpush1.msra.mxu0 %v549
    %976 = vmatprep.subr.mxu0 %v562
    %977 = vmatpush1.msra.mxu0 %v561
    %978 = vmatprep.subr.mxu0 %v574
    %979 = vmatpush1.msra.mxu0 %v573
    %980 = vmatprep.subr.mxu0 %v586
    %981 = vmatpush1.msra.mxu0 %v585
    %982 = vmatprep.subr.mxu0 %v598
    %983 = vmatpush1.msra.mxu0 %v597
    %984 = vmatprep.subr.mxu0 %v610
    %985 = vmatpush1.msra.mxu0 %v609
    %986 = vmatprep.subr.mxu0 %v622
    %987 = vmatpush1.msra.mxu0 %v621
    %988 = vmatprep.subr.mxu0 %v634
    %989 = vmatpush1.msra.mxu0 %v633
    %990 = vmatprep.subr.mxu0 %v646
    %991 = vmatpush1.msra.mxu0 %v645
    %992 = vmatprep.subr.mxu0 %v658
    %993 = vmatpush1.msra.mxu0 %v657
    %994 = vmatprep.subr.mxu0 0.0
    %995 = vmatpush1.msra.mxu0 0.0
    %996 = vmatprep.subr.mxu0 0.0
    %997 = vmatpush1.msra.mxu0 0.0
    %998 = vmatprep.subr.mxu0 0.0
    %999 = vmatpush1.msra.mxu0 0.0
    %1000 = vmatprep.subr.mxu0 0.0
    %1001 = vmatpush1.msra.mxu0 0.0
    %1002 = vmatprep.subr.mxu0 0.0
    %1003 = vmatpush1.msra.mxu0 0.0
    %1004 = vmatprep.subr.mxu0 0.0
    %1005 = vmatpush1.msra.mxu0 0.0
    %1006 = vmatprep.subr.mxu0 0.0
    %1007 = vmatpush1.msra.mxu0 0.0
    %1008 = vmatprep.subr.mxu0 0.0
    %1009 = vmatpush1.msra.mxu0 0.0
    %1010 = vmatprep.subr.mxu0 0.0
    %1011 = vmatpush1.msra.mxu0 0.0
    %1012 = vmatprep.subr.mxu0 0.0
    %1013 = vmatpush1.msra.mxu0 0.0
    %1014 = vmatprep.subr.mxu0 0.0
    %1015 = vmatpush1.msra.mxu0 0.0
    %1016 = vmatprep.subr.mxu0 0.0
    %1017 = vmatpush1.msra.mxu0 0.0
    %1018 = vmatprep.subr.mxu0 0.0
    %1019 = vmatpush1.msra.mxu0 0.0
    %1020 = vmatprep.subr.mxu0 0.0
    %1021 = vmatpush1.msra.mxu0 0.0
    %1022 = vmatprep.subr.mxu0 0.0
    %1023 = vmatpush1.msra.mxu0 0.0
    %1024 = vmatprep.subr.mxu0 0.0
    %1025 = vmatpush1.msra.mxu0 0.0
    %1026 = vmatprep.mubr.f32.mxu0 0.0
    %1027 = vmatmul.mubr.f32.gmra.mrb[0].mxu0 %v87
    %v1028 = vpop.f32.mrb[0].mxu0
    %v1029 = vadd.f32 %v952, %v1028
    %v1030 = vpop.f32.mrb[0].mxu0
    %v1031 = vadd.f32 %v954, %v1030
    %1032 = vmatprep.mubr.f32.mxu0 0.0
    %1033 = vmatmul.mubr.f32.gmra.mrb[0].mxu0 %v90
    %v1034 = vpop.f32.mrb[0].mxu0
    %v1035 = vadd.f32 %v958, %v1034
    %v1036 = vpop.f32.mrb[0].mxu0
    %v1037 = vadd.f32 %v960, %v1036
    %1038 = vdwg.mxu0
    %1039 = vmatprep.subr.mxu0 %v96
    %1040 = vmatpush1.msra.mxu0 %v95
    %1041 = vmatprep.subr.mxu0 %v108
    %1042 = vmatpush1.msra.mxu0 %v107
    %1043 = vmatprep.subr.mxu0 %v120
    %1044 = vmatpush1.msra.mxu0 %v119
    %1045 = vmatprep.subr.mxu0 %v132
    %1046 = vmatpush1.msra.mxu0 %v131
    %1047 = vmatprep.subr.mxu0 %v144
    %1048 = vmatpush1.msra.mxu0 %v143
    %1049 = vmatprep.subr.mxu0 %v156
    %1050 = vmatpush1.msra.mxu0 %v155
    %1051 = vmatprep.subr.mxu0 %v168
    %1052 = vmatpush1.msra.mxu0 %v167
    %1053 = vmatprep.subr.mxu0 %v180
    %1054 = vmatpush1.msra.mxu0 %v179
    %1055 = vmatprep.subr.mxu0 %v192
    %1056 = vmatpush1.msra.mxu0 %v191
    %1057 = vmatprep.subr.mxu0 %v204
    %1058 = vmatpush1.msra.mxu0 %v203
    %1059 = vmatprep.subr.mxu0 %v216
    %1060 = vmatpush1.msra.mxu0 %v215
    %1061 = vmatprep.subr.mxu0 %v228
    %1062 = vmatpush1.msra.mxu0 %v227
    %1063 = vmatprep.subr.mxu0 %v240
    %1064 = vmatpush1.msra.mxu0 %v239
    %1065 = vmatprep.subr.mxu0 %v252
    %1066 = vmatpush1.msra.mxu0 %v251
    %1067 = vmatprep.subr.mxu0 %v264
    %1068 = vmatpush1.msra.mxu0 %v263
    %1069 = vmatprep.subr.mxu0 %v276
    %1070 = vmatpush1.msra.mxu0 %v275
    %1071 = vmatprep.subr.mxu0 %v288
    %1072 = vmatpush1.msra.mxu0 %v287
    %1073 = vmatprep.subr.mxu0 %v300
    %1074 = vmatpush1.msra.mxu0 %v299
    %1075 = vmatprep.subr.mxu0 %v312
    %1076 = vmatpush1.msra.mxu0 %v311
    %1077 = vmatprep.subr.mxu0 %v324
    %1078 = vmatpush1.msra.mxu0 %v323
    %1079 = vmatprep.subr.mxu0 %v336
    %1080 = vmatpush1.msra.mxu0 %v335
    %1081 = vmatprep.subr.mxu0 %v348
    %1082 = vmatpush1.msra.mxu0 %v347
    %1083 = vmatprep.subr.mxu0 %v360
    %1084 = vmatpush1.msra.mxu0 %v359
    %1085 = vmatprep.subr.mxu0 %v372
    %1086 = vmatpush1.msra.mxu0 %v371
    %1087 = vmatprep.subr.mxu0 %v384
    %1088 = vmatpush1.msra.mxu0 %v383
    %1089 = vmatprep.subr.mxu0 %v396
    %1090 = vmatpush1.msra.mxu0 %v395
    %1091 = vmatprep.subr.mxu0 %v408
    %1092 = vmatpush1.msra.mxu0 %v407
    %1093 = vmatprep.subr.mxu0 %v420
    %1094 = vmatpush1.msra.mxu0 %v419
    %1095 = vmatprep.subr.mxu0 %v432
    %1096 = vmatpush1.msra.mxu0 %v431
    %1097 = vmatprep.subr.mxu0 %v444
    %1098 = vmatpush1.msra.mxu0 %v443
    %1099 = vmatprep.subr.mxu0 %v456
    %1100 = vmatpush1.msra.mxu0 %v455
    %1101 = vmatprep.subr.mxu0 %v468
    %1102 = vmatpush1.msra.mxu0 %v467
    %1103 = vmatprep.mubr.f32.mxu0 %v86
    %1104 = vmatmul.mubr.f32.gmra.mrb[0].mxu0 %v85
    %v1105 = vpop.f32.mrb[0].mxu0
    %v1106 = vadd.f32 %v690, %v1105
    %v1107 = vpop.f32.mrb[0].mxu0
    %v1108 = vadd.f32 %v694, %v1107
    %1109 = vmatprep.mubr.f32.mxu0 %v89
    %1110 = vmatmul.mubr.f32.gmra.mrb[0].mxu0 %v88
    %v1111 = vpop.f32.mrb[0].mxu0
    %v1112 = vadd.f32 %v690, %v1111
    %v1113 = vpop.f32.mrb[0].mxu0
    %v1114 = vadd.f32 %v694, %v1113
    %1115 = vdwg.mxu0
    %1116 = vmatprep.subr.mxu0 %v480
    %1117 = vmatpush1.msra.mxu0 %v479
    %1118 = vmatprep.subr.mxu0 %v492
    %1119 = vmatpush1.msra.mxu0 %v491
    %1120 = vmatprep.subr.mxu0 %v504
    %1121 = vmatpush1.msra.mxu0 %v503
    %1122 = vmatprep.subr.mxu0 %v516
    %1123 = vmatpush1.msra.mxu0 %v515
    %1124 = vmatprep.subr.mxu0 %v528
    %1125 = vmatpush1.msra.mxu0 %v527
    %1126 = vmatprep.subr.mxu0 %v540
    %1127 = vmatpush1.msra.mxu0 %v539
    %1128 = vmatprep.subr.mxu0 %v552
    %1129 = vmatpush1.msra.mxu0 %v551
    %1130 = vmatprep.subr.mxu0 %v564
    %1131 = vmatpush1.msra.mxu0 %v563
    %1132 = vmatprep.subr.mxu0 %v576
    %1133 = vmatpush1.msra.mxu0 %v575
    %1134 = vmatprep.subr.mxu0 %v588
    %1135 = vmatpush1.msra.mxu0 %v587
    %1136 = vmatprep.subr.mxu0 %v600
    %1137 = vmatpush1.msra.mxu0 %v599
    %1138 = vmatprep.subr.mxu0 %v612
    %1139 = vmatpush1.msra.mxu0 %v611
    %1140 = vmatprep.subr.mxu0 %v624
    %1141 = vmatpush1.msra.mxu0 %v623
    %1142 = vmatprep.subr.mxu0 %v636
    %1143 = vmatpush1.msra.mxu0 %v635
    %1144 = vmatprep.subr.mxu0 %v648
    %1145 = vmatpush1.msra.mxu0 %v647
    %1146 = vmatprep.subr.mxu0 %v660
    %1147 = vmatpush1.msra.mxu0 %v659
    %1148 = vmatprep.subr.mxu0 0.0
    %1149 = vmatpush1.msra.mxu0 0.0
    %1150 = vmatprep.subr.mxu0 0.0
    %1151 = vmatpush1.msra.mxu0 0.0
    %1152 = vmatprep.subr.mxu0 0.0
    %1153 = vmatpush1.msra.mxu0 0.0
    %1154 = vmatprep.subr.mxu0 0.0
    %1155 = vmatpush1.msra.mxu0 0.0
    %1156 = vmatprep.subr.mxu0 0.0
    %1157 = vmatpush1.msra.mxu0 0.0
    %1158 = vmatprep.subr.mxu0 0.0
    %1159 = vmatpush1.msra.mxu0 0.0
    %1160 = vmatprep.subr.mxu0 0.0
    %1161 = vmatpush1.msra.mxu0 0.0
    %1162 = vmatprep.subr.mxu0 0.0
    %1163 = vmatpush1.msra.mxu0 0.0
    %1164 = vmatprep.subr.mxu0 0.0
    %1165 = vmatpush1.msra.mxu0 0.0
    %1166 = vmatprep.subr.mxu0 0.0
    %1167 = vmatpush1.msra.mxu0 0.0
    %1168 = vmatprep.subr.mxu0 0.0
    %1169 = vmatpush1.msra.mxu0 0.0
    %1170 = vmatprep.subr.mxu0 0.0
    %1171 = vmatpush1.msra.mxu0 0.0
    %1172 = vmatprep.subr.mxu0 0.0
    %1173 = vmatpush1.msra.mxu0 0.0
    %1174 = vmatprep.subr.mxu0 0.0
    %1175 = vmatpush1.msra.mxu0 0.0
    %1176 = vmatprep.subr.mxu0 0.0
    %1177 = vmatpush1.msra.mxu0 0.0
    %1178 = vmatprep.subr.mxu0 0.0
    %1179 = vmatpush1.msra.mxu0 0.0
    %1180 = vmatprep.mubr.f32.mxu0 0.0
    %1181 = vmatmul.mubr.f32.gmra.mrb[0].mxu0 %v87
    %v1182 = vpop.f32.mrb[0].mxu0
    %v1183 = vadd.f32 %v1106, %v1182
    %v1184 = vpop.f32.mrb[0].mxu0
    %v1185 = vadd.f32 %v1108, %v1184
    %1186 = vmatprep.mubr.f32.mxu0 0.0
    %1187 = vmatmul.mubr.f32.gmra.mrb[0].mxu0 %v90
    %v1188 = vpop.f32.mrb[0].mxu0
    %v1189 = vadd.f32 %v1112, %v1188
    %v1190 = vpop.f32.mrb[0].mxu0
    %v1191 = vadd.f32 %v1114, %v1190
    %1192 = vdwg.mxu0
    %1193 = vmatprep.subr.mxu0 %v98
    %1194 = vmatpush1.msra.mxu0 %v97
    %1195 = vmatprep.subr.mxu0 %v110
    %1196 = vmatpush1.msra.mxu0 %v109
    %1197 = vmatprep.subr.mxu0 %v122
    %1198 = vmatpush1.msra.mxu0 %v121
    %1199 = vmatprep.subr.mxu0 %v134
    %1200 = vmatpush1.msra.mxu0 %v133
    %1201 = vmatprep.subr.mxu0 %v146
    %1202 = vmatpush1.msra.mxu0 %v145
    %1203 = vmatprep.subr.mxu0 %v158
    %1204 = vmatpush1.msra.mxu0 %v157
    %1205 = vmatprep.subr.mxu0 %v170
    %1206 = vmatpush1.msra.mxu0 %v169
    %1207 = vmatprep.subr.mxu0 %v182
    %1208 = vmatpush1.msra.mxu0 %v181
    %1209 = vmatprep.subr.mxu0 %v194
    %1210 = vmatpush1.msra.mxu0 %v193
    %1211 = vmatprep.subr.mxu0 %v206
    %1212 = vmatpush1.msra.mxu0 %v205
    %1213 = vmatprep.subr.mxu0 %v218
    %1214 = vmatpush1.msra.mxu0 %v217
    %1215 = vmatprep.subr.mxu0 %v230
    %1216 = vmatpush1.msra.mxu0 %v229
    %1217 = vmatprep.subr.mxu0 %v242
    %1218 = vmatpush1.msra.mxu0 %v241
    %1219 = vmatprep.subr.mxu0 %v254
    %1220 = vmatpush1.msra.mxu0 %v253
    %1221 = vmatprep.subr.mxu0 %v266
    %1222 = vmatpush1.msra.mxu0 %v265
    %1223 = vmatprep.subr.mxu0 %v278
    %1224 = vmatpush1.msra.mxu0 %v277
    %1225 = vmatprep.subr.mxu0 %v290
    %1226 = vmatpush1.msra.mxu0 %v289
    %1227 = vmatprep.subr.mxu0 %v302
    %1228 = vmatpush1.msra.mxu0 %v301
    %1229 = vmatprep.subr.mxu0 %v314
    %1230 = vmatpush1.msra.mxu0 %v313
    %1231 = vmatprep.subr.mxu0 %v326
    %1232 = vmatpush1.msra.mxu0 %v325
    %1233 = vmatprep.subr.mxu0 %v338
    %1234 = vmatpush1.msra.mxu0 %v337
    %1235 = vmatprep.subr.mxu0 %v350
    %1236 = vmatpush1.msra.mxu0 %v349
    %1237 = vmatprep.subr.mxu0 %v362
    %1238 = vmatpush1.msra.mxu0 %v361
    %1239 = vmatprep.subr.mxu0 %v374
    %1240 = vmatpush1.msra.mxu0 %v373
    %1241 = vmatprep.subr.mxu0 %v386
    %1242 = vmatpush1.msra.mxu0 %v385
    %1243 = vmatprep.subr.mxu0 %v398
    %1244 = vmatpush1.msra.mxu0 %v397
    %1245 = vmatprep.subr.mxu0 %v410
    %1246 = vmatpush1.msra.mxu0 %v409
    %1247 = vmatprep.subr.mxu0 %v422
    %1248 = vmatpush1.msra.mxu0 %v421
    %1249 = vmatprep.subr.mxu0 %v434
    %1250 = vmatpush1.msra.mxu0 %v433
    %1251 = vmatprep.subr.mxu0 %v446
    %1252 = vmatpush1.msra.mxu0 %v445
    %1253 = vmatprep.subr.mxu0 %v458
    %1254 = vmatpush1.msra.mxu0 %v457
    %1255 = vmatprep.subr.mxu0 %v470
    %1256 = vmatpush1.msra.mxu0 %v469
    %1257 = vmatprep.mubr.f32.mxu0 %v86
    %1258 = vmatmul.mubr.f32.gmra.mrb[0].mxu0 %v85
    %v1259 = vpop.f32.mrb[0].mxu0
    %v1260 = vadd.f32 %v698, %v1259
    %v1261 = vpop.f32.mrb[0].mxu0
    %v1262 = vadd.f32 %v702, %v1261
    %1263 = vmatprep.mubr.f32.mxu0 %v89
    %1264 = vmatmul.mubr.f32.gmra.mrb[0].mxu0 %v88
    %v1265 = vpop.f32.mrb[0].mxu0
    %v1266 = vadd.f32 %v698, %v1265
    %v1267 = vpop.f32.mrb[0].mxu0
    %v1268 = vadd.f32 %v702, %v1267
    %1269 = vdwg.mxu0
    %1270 = vmatprep.subr.mxu0 %v482
    %1271 = vmatpush1.msra.mxu0 %v481
    %1272 = vmatprep.subr.mxu0 %v494
    %1273 = vmatpush1.msra.mxu0 %v493
    %1274 = vmatprep.subr.mxu0 %v506
    %1275 = vmatpush1.msra.mxu0 %v505
    %1276 = vmatprep.subr.mxu0 %v518
    %1277 = vmatpush1.msra.mxu0 %v517
    %1278 = vmatprep.subr.mxu0 %v530
    %1279 = vmatpush1.msra.mxu0 %v529
    %1280 = vmatprep.subr.mxu0 %v542
    %1281 = vmatpush1.msra.mxu0 %v541
    %1282 = vmatprep.subr.mxu0 %v554
    %1283 = vmatpush1.msra.mxu0 %v553
    %1284 = vmatprep.subr.mxu0 %v566
    %1285 = vmatpush1.msra.mxu0 %v565
    %1286 = vmatprep.subr.mxu0 %v578
    %1287 = vmatpush1.msra.mxu0 %v577
    %1288 = vmatprep.subr.mxu0 %v590
    %1289 = vmatpush1.msra.mxu0 %v589
    %1290 = vmatprep.subr.mxu0 %v602
    %1291 = vmatpush1.msra.mxu0 %v601
    %1292 = vmatprep.subr.mxu0 %v614
    %1293 = vmatpush1.msra.mxu0 %v613
    %1294 = vmatprep.subr.mxu0 %v626
    %1295 = vmatpush1.msra.mxu0 %v625
    %1296 = vmatprep.subr.mxu0 %v638
    %1297 = vmatpush1.msra.mxu0 %v637
    %1298 = vmatprep.subr.mxu0 %v650
    %1299 = vmatpush1.msra.mxu0 %v649
    %1300 = vmatprep.subr.mxu0 %v662
    %1301 = vmatpush1.msra.mxu0 %v661
    %1302 = vmatprep.subr.mxu0 0.0
    %1303 = vmatpush1.msra.mxu0 0.0
    %1304 = vmatprep.subr.mxu0 0.0
    %1305 = vmatpush1.msra.mxu0 0.0
    %1306 = vmatprep.subr.mxu0 0.0
    %1307 = vmatpush1.msra.mxu0 0.0
    %1308 = vmatprep.subr.mxu0 0.0
    %1309 = vmatpush1.msra.mxu0 0.0
    %1310 = vmatprep.subr.mxu0 0.0
    %1311 = vmatpush1.msra.mxu0 0.0
    %1312 = vmatprep.subr.mxu0 0.0
    %1313 = vmatpush1.msra.mxu0 0.0
    %1314 = vmatprep.subr.mxu0 0.0
    %1315 = vmatpush1.msra.mxu0 0.0
    %1316 = vmatprep.subr.mxu0 0.0
    %1317 = vmatpush1.msra.mxu0 0.0
    %1318 = vmatprep.subr.mxu0 0.0
    %1319 = vmatpush1.msra.mxu0 0.0
    %1320 = vmatprep.subr.mxu0 0.0
    %1321 = vmatpush1.msra.mxu0 0.0
    %1322 = vmatprep.subr.mxu0 0.0
    %1323 = vmatpush1.msra.mxu0 0.0
    %1324 = vmatprep.subr.mxu0 0.0
    %1325 = vmatpush1.msra.mxu0 0.0
    %1326 = vmatprep.subr.mxu0 0.0
    %1327 = vmatpush1.msra.mxu0 0.0
    %1328 = vmatprep.subr.mxu0 0.0
    %1329 = vmatpush1.msra.mxu0 0.0
    %1330 = vmatprep.subr.mxu0 0.0
    %1331 = vmatpush1.msra.mxu0 0.0
    %1332 = vmatprep.subr.mxu0 0.0
    %1333 = vmatpush1.msra.mxu0 0.0
    %1334 = vmatprep.mubr.f32.mxu0 0.0
    %1335 = vmatmul.mubr.f32.gmra.mrb[0].mxu0 %v87
    %v1336 = vpop.f32.mrb[0].mxu0
    %v1337 = vadd.f32 %v1260, %v1336
    %v1338 = vpop.f32.mrb[0].mxu0
    %v1339 = vadd.f32 %v1262, %v1338
    %1340 = vmatprep.mubr.f32.mxu0 0.0
    %1341 = vmatmul.mubr.f32.gmra.mrb[0].mxu0 %v90
    %v1342 = vpop.f32.mrb[0].mxu0
    %v1343 = vadd.f32 %v1266, %v1342
    %v1344 = vpop.f32.mrb[0].mxu0
    %v1345 = vadd.f32 %v1268, %v1344
    %1346 = vdwg.mxu0
    %1347 = vmatprep.subr.mxu0 %v100
    %1348 = vmatpush1.msra.mxu0 %v99
    %1349 = vmatprep.subr.mxu0 %v112
    %1350 = vmatpush1.msra.mxu0 %v111
    %1351 = vmatprep.subr.mxu0 %v124
    %1352 = vmatpush1.msra.mxu0 %v123
    %1353 = vmatprep.subr.mxu0 %v136
    %1354 = vmatpush1.msra.mxu0 %v135
    %1355 = vmatprep.subr.mxu0 %v148
    %1356 = vmatpush1.msra.mxu0 %v147
    %1357 = vmatprep.subr.mxu0 %v160
    %1358 = vmatpush1.msra.mxu0 %v159
    %1359 = vmatprep.subr.mxu0 %v172
    %1360 = vmatpush1.msra.mxu0 %v171
    %1361 = vmatprep.subr.mxu0 %v184
    %1362 = vmatpush1.msra.mxu0 %v183
    %1363 = vmatprep.subr.mxu0 %v196
    %1364 = vmatpush1.msra.mxu0 %v195
    %1365 = vmatprep.subr.mxu0 %v208
    %1366 = vmatpush1.msra.mxu0 %v207
    %1367 = vmatprep.subr.mxu0 %v220
    %1368 = vmatpush1.msra.mxu0 %v219
    %1369 = vmatprep.subr.mxu0 %v232
    %1370 = vmatpush1.msra.mxu0 %v231
    %1371 = vmatprep.subr.mxu0 %v244
    %1372 = vmatpush1.msra.mxu0 %v243
    %1373 = vmatprep.subr.mxu0 %v256
    %1374 = vmatpush1.msra.mxu0 %v255
    %1375 = vmatprep.subr.mxu0 %v268
    %1376 = vmatpush1.msra.mxu0 %v267
    %1377 = vmatprep.subr.mxu0 %v280
    %1378 = vmatpush1.msra.mxu0 %v279
    %1379 = vmatprep.subr.mxu0 %v292
    %1380 = vmatpush1.msra.mxu0 %v291
    %1381 = vmatprep.subr.mxu0 %v304
    %1382 = vmatpush1.msra.mxu0 %v303
    %1383 = vmatprep.subr.mxu0 %v316
    %1384 = vmatpush1.msra.mxu0 %v315
    %1385 = vmatprep.subr.mxu0 %v328
    %1386 = vmatpush1.msra.mxu0 %v327
    %1387 = vmatprep.subr.mxu0 %v340
    %1388 = vmatpush1.msra.mxu0 %v339
    %1389 = vmatprep.subr.mxu0 %v352
    %1390 = vmatpush1.msra.mxu0 %v351
    %1391 = vmatprep.subr.mxu0 %v364
    %1392 = vmatpush1.msra.mxu0 %v363
    %1393 = vmatprep.subr.mxu0 %v376
    %1394 = vmatpush1.msra.mxu0 %v375
    %1395 = vmatprep.subr.mxu0 %v388
    %1396 = vmatpush1.msra.mxu0 %v387
    %1397 = vmatprep.subr.mxu0 %v400
    %1398 = vmatpush1.msra.mxu0 %v399
    %1399 = vmatprep.subr.mxu0 %v412
    %1400 = vmatpush1.msra.mxu0 %v411
    %1401 = vmatprep.subr.mxu0 %v424
    %1402 = vmatpush1.msra.mxu0 %v423
    %1403 = vmatprep.subr.mxu0 %v436
    %1404 = vmatpush1.msra.mxu0 %v435
    %1405 = vmatprep.subr.mxu0 %v448
    %1406 = vmatpush1.msra.mxu0 %v447
    %1407 = vmatprep.subr.mxu0 %v460
    %1408 = vmatpush1.msra.mxu0 %v459
    %1409 = vmatprep.subr.mxu0 %v472
    %1410 = vmatpush1.msra.mxu0 %v471
    %1411 = vmatprep.mubr.f32.mxu0 %v86
    %1412 = vmatmul.mubr.f32.gmra.mrb[0].mxu0 %v85
    %v1413 = vpop.f32.mrb[0].mxu0
    %v1414 = vadd.f32 %v706, %v1413
    %v1415 = vpop.f32.mrb[0].mxu0
    %v1416 = vadd.f32 %v710, %v1415
    %1417 = vmatprep.mubr.f32.mxu0 %v89
    %1418 = vmatmul.mubr.f32.gmra.mrb[0].mxu0 %v88
    %v1419 = vpop.f32.mrb[0].mxu0
    %v1420 = vadd.f32 %v706, %v1419
    %v1421 = vpop.f32.mrb[0].mxu0
    %v1422 = vadd.f32 %v710, %v1421
    %1423 = vdwg.mxu0
    %1424 = vmatprep.subr.mxu0 %v484
    %1425 = vmatpush1.msra.mxu0 %v483
    %1426 = vmatprep.subr.mxu0 %v496
    %1427 = vmatpush1.msra.mxu0 %v495
    %1428 = vmatprep.subr.mxu0 %v508
    %1429 = vmatpush1.msra.mxu0 %v507
    %1430 = vmatprep.subr.mxu0 %v520
    %1431 = vmatpush1.msra.mxu0 %v519
    %1432 = vmatprep.subr.mxu0 %v532
    %1433 = vmatpush1.msra.mxu0 %v531
    %1434 = vmatprep.subr.mxu0 %v544
    %1435 = vmatpush1.msra.mxu0 %v543
    %1436 = vmatprep.subr.mxu0 %v556
    %1437 = vmatpush1.msra.mxu0 %v555
    %1438 = vmatprep.subr.mxu0 %v568
    %1439 = vmatpush1.msra.mxu0 %v567
    %1440 = vmatprep.subr.mxu0 %v580
    %1441 = vmatpush1.msra.mxu0 %v579
    %1442 = vmatprep.subr.mxu0 %v592
    %1443 = vmatpush1.msra.mxu0 %v591
    %1444 = vmatprep.subr.mxu0 %v604
    %1445 = vmatpush1.msra.mxu0 %v603
    %1446 = vmatprep.subr.mxu0 %v616
    %1447 = vmatpush1.msra.mxu0 %v615
    %1448 = vmatprep.subr.mxu0 %v628
    %1449 = vmatpush1.msra.mxu0 %v627
    %1450 = vmatprep.subr.mxu0 %v640
    %1451 = vmatpush1.msra.mxu0 %v639
    %1452 = vmatprep.subr.mxu0 %v652
    %1453 = vmatpush1.msra.mxu0 %v651
    %1454 = vmatprep.subr.mxu0 %v664
    %1455 = vmatpush1.msra.mxu0 %v663
    %1456 = vmatprep.subr.mxu0 0.0
    %1457 = vmatpush1.msra.mxu0 0.0
    %1458 = vmatprep.subr.mxu0 0.0
    %1459 = vmatpush1.msra.mxu0 0.0
    %1460 = vmatprep.subr.mxu0 0.0
    %1461 = vmatpush1.msra.mxu0 0.0
    %1462 = vmatprep.subr.mxu0 0.0
    %1463 = vmatpush1.msra.mxu0 0.0
    %1464 = vmatprep.subr.mxu0 0.0
    %1465 = vmatpush1.msra.mxu0 0.0
    %1466 = vmatprep.subr.mxu0 0.0
    %1467 = vmatpush1.msra.mxu0 0.0
    %1468 = vmatprep.subr.mxu0 0.0
    %1469 = vmatpush1.msra.mxu0 0.0
    %1470 = vmatprep.subr.mxu0 0.0
    %1471 = vmatpush1.msra.mxu0 0.0
    %1472 = vmatprep.subr.mxu0 0.0
    %1473 = vmatpush1.msra.mxu0 0.0
    %1474 = vmatprep.subr.mxu0 0.0
    %1475 = vmatpush1.msra.mxu0 0.0
    %1476 = vmatprep.subr.mxu0 0.0
    %1477 = vmatpush1.msra.mxu0 0.0
    %1478 = vmatprep.subr.mxu0 0.0
    %1479 = vmatpush1.msra.mxu0 0.0
    %1480 = vmatprep.subr.mxu0 0.0
    %1481 = vmatpush1.msra.mxu0 0.0
    %1482 = vmatprep.subr.mxu0 0.0
    %1483 = vmatpush1.msra.mxu0 0.0
    %1484 = vmatprep.subr.mxu0 0.0
    %1485 = vmatpush1.msra.mxu0 0.0
    %1486 = vmatprep.subr.mxu0 0.0
    %1487 = vmatpush1.msra.mxu0 0.0
    %1488 = vmatprep.mubr.f32.mxu0 0.0
    %1489 = vmatmul.mubr.f32.gmra.mrb[0].mxu0 %v87
    %v1490 = vpop.f32.mrb[0].mxu0
    %v1491 = vadd.f32 %v1414, %v1490
    %v1492 = vpop.f32.mrb[0].mxu0
    %v1493 = vadd.f32 %v1416, %v1492
    %1494 = vmatprep.mubr.f32.mxu0 0.0
    %1495 = vmatmul.mubr.f32.gmra.mrb[0].mxu0 %v90
    %v1496 = vpop.f32.mrb[0].mxu0
    %v1497 = vadd.f32 %v1420, %v1496
    %v1498 = vpop.f32.mrb[0].mxu0
    %v1499 = vadd.f32 %v1422, %v1498
    %1500 = vdwg.mxu0
    %1501 = vmatprep.subr.mxu0 %v102
    %1502 = vmatpush1.msra.mxu0 %v101
    %1503 = vmatprep.subr.mxu0 %v114
    %1504 = vmatpush1.msra.mxu0 %v113
    %1505 = vmatprep.subr.mxu0 %v126
    %1506 = vmatpush1.msra.mxu0 %v125
    %1507 = vmatprep.subr.mxu0 %v138
    %1508 = vmatpush1.msra.mxu0 %v137
    %1509 = vmatprep.subr.mxu0 %v150
    %1510 = vmatpush1.msra.mxu0 %v149
    %1511 = vmatprep.subr.mxu0 %v162
    %1512 = vmatpush1.msra.mxu0 %v161
    %1513 = vmatprep.subr.mxu0 %v174
    %1514 = vmatpush1.msra.mxu0 %v173
    %1515 = vmatprep.subr.mxu0 %v186
    %1516 = vmatpush1.msra.mxu0 %v185
    %1517 = vmatprep.subr.mxu0 %v198
    %1518 = vmatpush1.msra.mxu0 %v197
    %1519 = vmatprep.subr.mxu0 %v210
    %1520 = vmatpush1.msra.mxu0 %v209
    %1521 = vmatprep.subr.mxu0 %v222
    %1522 = vmatpush1.msra.mxu0 %v221
    %1523 = vmatprep.subr.mxu0 %v234
    %1524 = vmatpush1.msra.mxu0 %v233
    %1525 = vmatprep.subr.mxu0 %v246
    %1526 = vmatpush1.msra.mxu0 %v245
    %1527 = vmatprep.subr.mxu0 %v258
    %1528 = vmatpush1.msra.mxu0 %v257
    %1529 = vmatprep.subr.mxu0 %v270
    %1530 = vmatpush1.msra.mxu0 %v269
    %1531 = vmatprep.subr.mxu0 %v282
    %1532 = vmatpush1.msra.mxu0 %v281
    %1533 = vmatprep.subr.mxu0 %v294
    %1534 = vmatpush1.msra.mxu0 %v293
    %1535 = vmatprep.subr.mxu0 %v306
    %1536 = vmatpush1.msra.mxu0 %v305
    %1537 = vmatprep.subr.mxu0 %v318
    %1538 = vmatpush1.msra.mxu0 %v317
    %1539 = vmatprep.subr.mxu0 %v330
    %1540 = vmatpush1.msra.mxu0 %v329
    %1541 = vmatprep.subr.mxu0 %v342
    %1542 = vmatpush1.msra.mxu0 %v341
    %1543 = vmatprep.subr.mxu0 %v354
    %1544 = vmatpush1.msra.mxu0 %v353
    %1545 = vmatprep.subr.mxu0 %v366
    %1546 = vmatpush1.msra.mxu0 %v365
    %1547 = vmatprep.subr.mxu0 %v378
    %1548 = vmatpush1.msra.mxu0 %v377
    %1549 = vmatprep.subr.mxu0 %v390
    %1550 = vmatpush1.msra.mxu0 %v389
    %1551 = vmatprep.subr.mxu0 %v402
    %1552 = vmatpush1.msra.mxu0 %v401
    %1553 = vmatprep.subr.mxu0 %v414
    %1554 = vmatpush1.msra.mxu0 %v413
    %1555 = vmatprep.subr.mxu0 %v426
    %1556 = vmatpush1.msra.mxu0 %v425
    %1557 = vmatprep.subr.mxu0 %v438
    %1558 = vmatpush1.msra.mxu0 %v437
    %1559 = vmatprep.subr.mxu0 %v450
    %1560 = vmatpush1.msra.mxu0 %v449
    %1561 = vmatprep.subr.mxu0 %v462
    %1562 = vmatpush1.msra.mxu0 %v461
    %1563 = vmatprep.subr.mxu0 %v474
    %1564 = vmatpush1.msra.mxu0 %v473
    %1565 = vmatprep.mubr.f32.mxu0 %v86
    %1566 = vmatmul.mubr.f32.gmra.mrb[0].mxu0 %v85
    %v1567 = vpop.f32.mrb[0].mxu0
    %v1568 = vadd.f32 %v714, %v1567
    %v1569 = vpop.f32.mrb[0].mxu0
    %v1570 = vadd.f32 %v718, %v1569
    %1571 = vmatprep.mubr.f32.mxu0 %v89
    %1572 = vmatmul.mubr.f32.gmra.mrb[0].mxu0 %v88
    %v1573 = vpop.f32.mrb[0].mxu0
    %v1574 = vadd.f32 %v714, %v1573
    %v1575 = vpop.f32.mrb[0].mxu0
    %v1576 = vadd.f32 %v718, %v1575
    %1577 = vdwg.mxu0
    %1578 = vmatprep.subr.mxu0 %v486
    %1579 = vmatpush1.msra.mxu0 %v485
    %1580 = vmatprep.subr.mxu0 %v498
    %1581 = vmatpush1.msra.mxu0 %v497
    %1582 = vmatprep.subr.mxu0 %v510
    %1583 = vmatpush1.msra.mxu0 %v509
    %1584 = vmatprep.subr.mxu0 %v522
    %1585 = vmatpush1.msra.mxu0 %v521
    %1586 = vmatprep.subr.mxu0 %v534
    %1587 = vmatpush1.msra.mxu0 %v533
    %1588 = vmatprep.subr.mxu0 %v546
    %1589 = vmatpush1.msra.mxu0 %v545
    %1590 = vmatprep.subr.mxu0 %v558
    %1591 = vmatpush1.msra.mxu0 %v557
    %1592 = vmatprep.subr.mxu0 %v570
    %1593 = vmatpush1.msra.mxu0 %v569
    %1594 = vmatprep.subr.mxu0 %v582
    %1595 = vmatpush1.msra.mxu0 %v581
    %1596 = vmatprep.subr.mxu0 %v594
    %1597 = vmatpush1.msra.mxu0 %v593
    %1598 = vmatprep.subr.mxu0 %v606
    %1599 = vmatpush1.msra.mxu0 %v605
    %1600 = vmatprep.subr.mxu0 %v618
    %1601 = vmatpush1.msra.mxu0 %v617
    %1602 = vmatprep.subr.mxu0 %v630
    %1603 = vmatpush1.msra.mxu0 %v629
    %1604 = vmatprep.subr.mxu0 %v642
    %1605 = vmatpush1.msra.mxu0 %v641
    %1606 = vmatprep.subr.mxu0 %v654
    %1607 = vmatpush1.msra.mxu0 %v653
    %1608 = vmatprep.subr.mxu0 %v666
    %1609 = vmatpush1.msra.mxu0 %v665
    %1610 = vmatprep.subr.mxu0 0.0
    %1611 = vmatpush1.msra.mxu0 0.0
    %1612 = vmatprep.subr.mxu0 0.0
    %1613 = vmatpush1.msra.mxu0 0.0
    %1614 = vmatprep.subr.mxu0 0.0
    %1615 = vmatpush1.msra.mxu0 0.0
    %1616 = vmatprep.subr.mxu0 0.0
    %1617 = vmatpush1.msra.mxu0 0.0
    %1618 = vmatprep.subr.mxu0 0.0
    %1619 = vmatpush1.msra.mxu0 0.0
    %1620 = vmatprep.subr.mxu0 0.0
    %1621 = vmatpush1.msra.mxu0 0.0
    %1622 = vmatprep.subr.mxu0 0.0
    %1623 = vmatpush1.msra.mxu0 0.0
    %1624 = vmatprep.subr.mxu0 0.0
    %1625 = vmatpush1.msra.mxu0 0.0
    %1626 = vmatprep.subr.mxu0 0.0
    %1627 = vmatpush1.msra.mxu0 0.0
    %1628 = vmatprep.subr.mxu0 0.0
    %1629 = vmatpush1.msra.mxu0 0.0
    %1630 = vmatprep.subr.mxu0 0.0
    %1631 = vmatpush1.msra.mxu0 0.0
    %1632 = vmatprep.subr.mxu0 0.0
    %1633 = vmatpush1.msra.mxu0 0.0
    %1634 = vmatprep.subr.mxu0 0.0
    %1635 = vmatpush1.msra.mxu0 0.0
    %1636 = vmatprep.subr.mxu0 0.0
    %1637 = vmatpush1.msra.mxu0 0.0
    %1638 = vmatprep.subr.mxu0 0.0
    %1639 = vmatpush1.msra.mxu0 0.0
    %1640 = vmatprep.subr.mxu0 0.0
    %1641 = vmatpush1.msra.mxu0 0.0
    %1642 = vmatprep.mubr.f32.mxu0 0.0
    %1643 = vmatmul.mubr.f32.gmra.mrb[0].mxu0 %v87
    %v1644 = vpop.f32.mrb[0].mxu0
    %v1645 = vadd.f32 %v1568, %v1644
    %v1646 = vpop.f32.mrb[0].mxu0
    %v1647 = vadd.f32 %v1570, %v1646
    %1648 = vmatprep.mubr.f32.mxu0 0.0
    %1649 = vmatmul.mubr.f32.gmra.mrb[0].mxu0 %v90
    %v1650 = vpop.f32.mrb[0].mxu0
    %v1651 = vadd.f32 %v1574, %v1650
    %v1652 = vpop.f32.mrb[0].mxu0
    %v1653 = vadd.f32 %v1576, %v1652
    %1654 = vdwg.mxu0
    %v1655 = vmax.f32 %v875, 0.0
    %v1656 = vmax.f32 %v877, 0.0
    %v1657 = vmax.f32 %v1029, 0.0
    %v1658 = vmax.f32 %v1031, 0.0
    %v1659 = vmax.f32 %v1183, 0.0
    %v1660 = vmax.f32 %v1185, 0.0
    %v1661 = vmax.f32 %v1337, 0.0
    %v1662 = vmax.f32 %v1339, 0.0
    %v1663 = vmax.f32 %v1491, 0.0
    %v1664 = vmax.f32 %v1493, 0.0
    %v1665 = vmax.f32 %v1645, 0.0
    %v1666 = vmax.f32 %v1647, 0.0
    %v1667 = vmax.f32 %v881, 0.0
    %v1668 = vmax.f32 %v883, 0.0
    %v1669 = vmax.f32 %v1035, 0.0
    %v1670 = vmax.f32 %v1037, 0.0
    %v1671 = vmax.f32 %v1189, 0.0
    %v1672 = vmax.f32 %v1191, 0.0
    %v1673 = vmax.f32 %v1343, 0.0
    %v1674 = vmax.f32 %v1345, 0.0
    %v1675 = vmax.f32 %v1497, 0.0
    %v1676 = vmax.f32 %v1499, 0.0
    %v1677 = vmax.f32 %v1651, 0.0
    %v1678 = vmax.f32 %v1653, 0.0
    %v1679 = vld [vmem:[#allocation8] sm:$0xff]
    %v1680 = vld [vmem:[#allocation8 + $0x8] sm:$0xff]
    %v1681 = vld [vmem:[#allocation8 + $0x10] sm:$0xff]
    %v1682 = vld [vmem:[#allocation8 + $0x18] sm:$0xff]
    %v1683 = vld [vmem:[#allocation8 + $0x20] sm:$0xff]
    %v1684 = vld [vmem:[#allocation8 + $0x28] sm:$0xff]
    %v1685 = vld [vmem:[#allocation8 + $0x30] sm:$0xff]
    %v1686 = vld [vmem:[#allocation8 + $0x38] sm:$0xff]
    %v1687 = vld [vmem:[#allocation8 + $0x40] sm:$0xff]
    %v1688 = vld [vmem:[#allocation8 + $0x48] sm:$0xff]
    %v1689 = vld [vmem:[#allocation8 + $0x50] sm:$0xff]
    %v1690 = vld [vmem:[#allocation8 + $0x58] sm:$0xff]
    %v1691 = vld [vmem:[#allocation8 + $0x60] sm:$0xff]
    %v1692 = vld [vmem:[#allocation8 + $0x68] sm:$0xff]
    %v1693 = vld [vmem:[#allocation8 + $0x70] sm:$0xff]
    %v1694 = vld [vmem:[#allocation8 + $0x78] sm:$0xff]
    %v1695 = vld [vmem:[#allocation8 + $0x80] sm:$0xff]
    %v1696 = vld [vmem:[#allocation8 + $0x88] sm:$0xff]
    %v1697 = vld [vmem:[#allocation8 + $0x90] sm:$0xff]
    %v1698 = vld [vmem:[#allocation8 + $0x98] sm:$0xff]
    %v1699 = vld [vmem:[#allocation8 + $0xa0] sm:$0xff]
    %v1700 = vld [vmem:[#allocation8 + $0xa8] sm:$0xff]
    %v1701 = vld [vmem:[#allocation8 + $0xb0] sm:$0xff]
    %v1702 = vld [vmem:[#allocation8 + $0xb8] sm:$0xff]
    %v1703 = vld [vmem:[#allocation8 + $0xc0] sm:$0xff]
    %v1704 = vld [vmem:[#allocation8 + $0xc8] sm:$0xff]
    %v1705 = vld [vmem:[#allocation8 + $0xd0] sm:$0xff]
    %v1706 = vld [vmem:[#allocation8 + $0xd8] sm:$0xff]
    %v1707 = vld [vmem:[#allocation8 + $0xe0] sm:$0xff]
    %v1708 = vld [vmem:[#allocation8 + $0xe8] sm:$0xff]
    %v1709 = vld [vmem:[#allocation8 + $0xf0] sm:$0xff]
    %v1710 = vld [vmem:[#allocation8 + $0xf8] sm:$0xff]
    %v1711 = vld [vmem:[#allocation8 + $0x100] sm:$0xff]
    %v1712 = vld [vmem:[#allocation8 + $0x108] sm:$0xff]
    %v1713 = vld [vmem:[#allocation8 + $0x110] sm:$0xff]
    %v1714 = vld [vmem:[#allocation8 + $0x118] sm:$0xff]
    %v1715 = vld [vmem:[#allocation8 + $0x120] sm:$0xff]
    %v1716 = vld [vmem:[#allocation8 + $0x128] sm:$0xff]
    %v1717 = vld [vmem:[#allocation8 + $0x130] sm:$0xff]
    %v1718 = vld [vmem:[#allocation8 + $0x138] sm:$0xff]
    %v1719 = vld [vmem:[#allocation8 + $0x140] sm:$0xff]
    %v1720 = vld [vmem:[#allocation8 + $0x148] sm:$0xff]
    %v1721 = vld [vmem:[#allocation8 + $0x150] sm:$0xff]
    %v1722 = vld [vmem:[#allocation8 + $0x158] sm:$0xff]
    %v1723 = vld [vmem:[#allocation8 + $0x160] sm:$0xff]
    %v1724 = vld [vmem:[#allocation8 + $0x168] sm:$0xff]
    %v1725 = vld [vmem:[#allocation8 + $0x170] sm:$0xff]
    %v1726 = vld [vmem:[#allocation8 + $0x178] sm:$0xff]
    %v1727 = vld [vmem:[#allocation8 + $0x180] sm:$0xff]
    %v1728 = vld [vmem:[#allocation8 + $0x188] sm:$0xff]
    %v1729 = vld [vmem:[#allocation8 + $0x190] sm:$0xff]
    %v1730 = vld [vmem:[#allocation8 + $0x198] sm:$0xff]
    %v1731 = vld [vmem:[#allocation8 + $0x1a0] sm:$0xff]
    %v1732 = vld [vmem:[#allocation8 + $0x1a8] sm:$0xff]
    %v1733 = vld [vmem:[#allocation8 + $0x1b0] sm:$0xff]
    %v1734 = vld [vmem:[#allocation8 + $0x1b8] sm:$0xff]
    %v1735 = vld [vmem:[#allocation8 + $0x1c0] sm:$0xff]
    %v1736 = vld [vmem:[#allocation8 + $0x1c8] sm:$0xff]
    %v1737 = vld [vmem:[#allocation8 + $0x1d0] sm:$0xff]
    %v1738 = vld [vmem:[#allocation8 + $0x1d8] sm:$0xff]
    %v1739 = vld [vmem:[#allocation8 + $0x1e0] sm:$0xff]
    %v1740 = vld [vmem:[#allocation8 + $0x1e8] sm:$0xff]
    %v1741 = vld [vmem:[#allocation8 + $0x1f0] sm:$0xff]
    %v1742 = vld [vmem:[#allocation8 + $0x1f8] sm:$0xff]
    %v1743 = vld [vmem:[#allocation8 + $0x200] sm:$0xff]
    %v1744 = vld [vmem:[#allocation8 + $0x208] sm:$0xff]
    %v1745 = vld [vmem:[#allocation8 + $0x210] sm:$0xff]
    %v1746 = vld [vmem:[#allocation8 + $0x218] sm:$0xff]
    %v1747 = vld [vmem:[#allocation8 + $0x220] sm:$0xff]
    %v1748 = vld [vmem:[#allocation8 + $0x228] sm:$0xff]
    %v1749 = vld [vmem:[#allocation8 + $0x230] sm:$0xff]
    %v1750 = vld [vmem:[#allocation8 + $0x238] sm:$0xff]
    %v1751 = vld [vmem:[#allocation8 + $0x240] sm:$0xff]
    %v1752 = vld [vmem:[#allocation8 + $0x248] sm:$0xff]
    %v1753 = vld [vmem:[#allocation8 + $0x250] sm:$0xff]
    %v1754 = vld [vmem:[#allocation8 + $0x258] sm:$0xff]
    %v1755 = vld [vmem:[#allocation8 + $0x260] sm:$0xff]
    %v1756 = vld [vmem:[#allocation8 + $0x268] sm:$0xff]
    %v1757 = vld [vmem:[#allocation8 + $0x270] sm:$0xff]
    %v1758 = vld [vmem:[#allocation8 + $0x278] sm:$0xff]
    %v1759 = vld [vmem:[#allocation8 + $0x280] sm:$0xff]
    %v1760 = vld [vmem:[#allocation8 + $0x288] sm:$0xff]
    %v1761 = vld [vmem:[#allocation8 + $0x290] sm:$0xff]
    %v1762 = vld [vmem:[#allocation8 + $0x298] sm:$0xff]
    %v1763 = vld [vmem:[#allocation8 + $0x2a0] sm:$0xff]
    %v1764 = vld [vmem:[#allocation8 + $0x2a8] sm:$0xff]
    %v1765 = vld [vmem:[#allocation8 + $0x2b0] sm:$0xff]
    %v1766 = vld [vmem:[#allocation8 + $0x2b8] sm:$0xff]
    %v1767 = vld [vmem:[#allocation8 + $0x2c0] sm:$0xff]
    %v1768 = vld [vmem:[#allocation8 + $0x2c8] sm:$0xff]
    %v1769 = vld [vmem:[#allocation8 + $0x2d0] sm:$0xff]
    %v1770 = vld [vmem:[#allocation8 + $0x2d8] sm:$0xff]
    %v1771 = vld [vmem:[#allocation8 + $0x2e0] sm:$0xff]
    %v1772 = vld [vmem:[#allocation8 + $0x2e8] sm:$0xff]
    %v1773 = vld [vmem:[#allocation8 + $0x2f0] sm:$0xff]
    %v1774 = vld [vmem:[#allocation8 + $0x2f8] sm:$0xff]
    %v1775 = vld [vmem:[#allocation8 + $0x300] sm:$0xff]
    %v1776 = vld [vmem:[#allocation8 + $0x308] sm:$0xff]
    %v1777 = vld [vmem:[#allocation8 + $0x310] sm:$0xff]
    %v1778 = vld [vmem:[#allocation8 + $0x318] sm:$0xff]
    %v1779 = vld [vmem:[#allocation8 + $0x320] sm:$0xff]
    %v1780 = vld [vmem:[#allocation8 + $0x328] sm:$0xff]
    %v1781 = vld [vmem:[#allocation8 + $0x330] sm:$0xff]
    %v1782 = vld [vmem:[#allocation8 + $0x338] sm:$0xff]
    %v1783 = vld [vmem:[#allocation8 + $0x340] sm:$0xff]
    %v1784 = vld [vmem:[#allocation8 + $0x348] sm:$0xff]
    %v1785 = vld [vmem:[#allocation8 + $0x350] sm:$0xff]
    %v1786 = vld [vmem:[#allocation8 + $0x358] sm:$0xff]
    %v1787 = vld [vmem:[#allocation8 + $0x360] sm:$0xff]
    %v1788 = vld [vmem:[#allocation8 + $0x368] sm:$0xff]
    %v1789 = vld [vmem:[#allocation8 + $0x370] sm:$0xff]
    %v1790 = vld [vmem:[#allocation8 + $0x378] sm:$0xff]
    %v1791 = vld [vmem:[#allocation8 + $0x380] sm:$0xff]
    %v1792 = vld [vmem:[#allocation8 + $0x388] sm:$0xff]
    %v1793 = vld [vmem:[#allocation8 + $0x390] sm:$0xff]
    %v1794 = vld [vmem:[#allocation8 + $0x398] sm:$0xff]
    %v1795 = vld [vmem:[#allocation8 + $0x3a0] sm:$0xff]
    %v1796 = vld [vmem:[#allocation8 + $0x3a8] sm:$0xff]
    %v1797 = vld [vmem:[#allocation8 + $0x3b0] sm:$0xff]
    %v1798 = vld [vmem:[#allocation8 + $0x3b8] sm:$0xff]
    %v1799 = vld [vmem:[#allocation8 + $0x3c0] sm:$0xff]
    %v1800 = vld [vmem:[#allocation8 + $0x3c8] sm:$0xff]
    %v1801 = vld [vmem:[#allocation8 + $0x3d0] sm:$0xff]
    %v1802 = vld [vmem:[#allocation8 + $0x3d8] sm:$0xff]
    %v1803 = vld [vmem:[#allocation8 + $0x3e0] sm:$0xff]
    %v1804 = vld [vmem:[#allocation8 + $0x3e8] sm:$0xff]
    %v1805 = vld [vmem:[#allocation8 + $0x3f0] sm:$0xff]
    %v1806 = vld [vmem:[#allocation8 + $0x3f8] sm:$0xff]
    %v1807 = vld [vmem:[#allocation8 + $0x400] sm:$0xff]
    %v1808 = vld [vmem:[#allocation8 + $0x408] sm:$0xff]
    %v1809 = vld [vmem:[#allocation8 + $0x410] sm:$0xff]
    %v1810 = vld [vmem:[#allocation8 + $0x418] sm:$0xff]
    %v1811 = vld [vmem:[#allocation8 + $0x420] sm:$0xff]
    %v1812 = vld [vmem:[#allocation8 + $0x428] sm:$0xff]
    %v1813 = vld [vmem:[#allocation8 + $0x430] sm:$0xff]
    %v1814 = vld [vmem:[#allocation8 + $0x438] sm:$0xff]
    %v1815 = vld [vmem:[#allocation8 + $0x440] sm:$0xff]
    %v1816 = vld [vmem:[#allocation8 + $0x448] sm:$0xff]
    %v1817 = vld [vmem:[#allocation8 + $0x450] sm:$0xff]
    %v1818 = vld [vmem:[#allocation8 + $0x458] sm:$0xff]
    %v1819 = vld [vmem:[#allocation8 + $0x460] sm:$0xff]
    %v1820 = vld [vmem:[#allocation8 + $0x468] sm:$0xff]
    %v1821 = vld [vmem:[#allocation8 + $0x470] sm:$0xff]
    %v1822 = vld [vmem:[#allocation8 + $0x478] sm:$0xff]
    %v1823 = vld [vmem:[#allocation8 + $0x480] sm:$0xff]
    %v1824 = vld [vmem:[#allocation8 + $0x488] sm:$0xff]
    %v1825 = vld [vmem:[#allocation8 + $0x490] sm:$0xff]
    %v1826 = vld [vmem:[#allocation8 + $0x498] sm:$0xff]
    %v1827 = vld [vmem:[#allocation8 + $0x4a0] sm:$0xff]
    %v1828 = vld [vmem:[#allocation8 + $0x4a8] sm:$0xff]
    %v1829 = vld [vmem:[#allocation8 + $0x4b0] sm:$0xff]
    %v1830 = vld [vmem:[#allocation8 + $0x4b8] sm:$0xff]
    %v1831 = vld [vmem:[#allocation8 + $0x4c0] sm:$0xff]
    %v1832 = vld [vmem:[#allocation8 + $0x4c8] sm:$0xff]
    %v1833 = vld [vmem:[#allocation8 + $0x4d0] sm:$0xff]
    %v1834 = vld [vmem:[#allocation8 + $0x4d8] sm:$0xff]
    %v1835 = vld [vmem:[#allocation8 + $0x4e0] sm:$0xff]
    %v1836 = vld [vmem:[#allocation8 + $0x4e8] sm:$0xff]
    %v1837 = vld [vmem:[#allocation8 + $0x4f0] sm:$0xff]
    %v1838 = vld [vmem:[#allocation8 + $0x4f8] sm:$0xff]
    %v1839 = vld [vmem:[#allocation8 + $0x500] sm:$0xff]
    %v1840 = vld [vmem:[#allocation8 + $0x508] sm:$0xff]
    %v1841 = vld [vmem:[#allocation8 + $0x510] sm:$0xff]
    %v1842 = vld [vmem:[#allocation8 + $0x518] sm:$0xff]
    %v1843 = vld [vmem:[#allocation8 + $0x520] sm:$0xff]
    %v1844 = vld [vmem:[#allocation8 + $0x528] sm:$0xff]
    %v1845 = vld [vmem:[#allocation8 + $0x530] sm:$0xff]
    %v1846 = vld [vmem:[#allocation8 + $0x538] sm:$0xff]
    %v1847 = vld [vmem:[#allocation8 + $0x540] sm:$0xff]
    %v1848 = vld [vmem:[#allocation8 + $0x548] sm:$0xff]
    %v1849 = vld [vmem:[#allocation8 + $0x550] sm:$0xff]
    %v1850 = vld [vmem:[#allocation8 + $0x558] sm:$0xff]
    %v1851 = vld [vmem:[#allocation8 + $0x560] sm:$0xff]
    %v1852 = vld [vmem:[#allocation8 + $0x568] sm:$0xff]
    %v1853 = vld [vmem:[#allocation8 + $0x570] sm:$0xff]
    %v1854 = vld [vmem:[#allocation8 + $0x578] sm:$0xff]
    %v1855 = vld [vmem:[#allocation8 + $0x580] sm:$0xff]
    %v1856 = vld [vmem:[#allocation8 + $0x588] sm:$0xff]
    %v1857 = vld [vmem:[#allocation8 + $0x590] sm:$0xff]
    %v1858 = vld [vmem:[#allocation8 + $0x598] sm:$0xff]
    %v1859 = vld [vmem:[#allocation8 + $0x5a0] sm:$0xff]
    %v1860 = vld [vmem:[#allocation8 + $0x5a8] sm:$0xff]
    %v1861 = vld [vmem:[#allocation8 + $0x5b0] sm:$0xff]
    %v1862 = vld [vmem:[#allocation8 + $0x5b8] sm:$0xff]
    %v1863 = vld [vmem:[#allocation8 + $0x5c0] sm:$0xff]
    %v1864 = vld [vmem:[#allocation8 + $0x5c8] sm:$0xff]
    %v1865 = vld [vmem:[#allocation8 + $0x5d0] sm:$0xff]
    %v1866 = vld [vmem:[#allocation8 + $0x5d8] sm:$0xff]
    %v1867 = vld [vmem:[#allocation8 + $0x5e0] sm:$0xff]
    %v1868 = vld [vmem:[#allocation8 + $0x5e8] sm:$0xff]
    %v1869 = vld [vmem:[#allocation8 + $0x5f0] sm:$0xff]
    %v1870 = vld [vmem:[#allocation8 + $0x5f8] sm:$0xff]
    %v1871 = vld [vmem:[#allocation8 + $0x600] sm:$0xff]
    %v1872 = vld [vmem:[#allocation8 + $0x608] sm:$0xff]
    %v1873 = vld [vmem:[#allocation8 + $0x610] sm:$0xff]
    %v1874 = vld [vmem:[#allocation8 + $0x618] sm:$0xff]
    %v1875 = vld [vmem:[#allocation8 + $0x620] sm:$0xff]
    %v1876 = vld [vmem:[#allocation8 + $0x628] sm:$0xff]
    %v1877 = vld [vmem:[#allocation8 + $0x630] sm:$0xff]
    %v1878 = vld [vmem:[#allocation8 + $0x638] sm:$0xff]
    %v1879 = vld [vmem:[#allocation8 + $0x640] sm:$0xff]
    %v1880 = vld [vmem:[#allocation8 + $0x648] sm:$0xff]
    %v1881 = vld [vmem:[#allocation8 + $0x650] sm:$0xff]
    %v1882 = vld [vmem:[#allocation8 + $0x658] sm:$0xff]
    %v1883 = vld [vmem:[#allocation8 + $0x660] sm:$0xff]
    %v1884 = vld [vmem:[#allocation8 + $0x668] sm:$0xff]
    %v1885 = vld [vmem:[#allocation8 + $0x670] sm:$0xff]
    %v1886 = vld [vmem:[#allocation8 + $0x678] sm:$0xff]
    %v1887 = vld [vmem:[#allocation8 + $0x680] sm:$0xff]
    %v1888 = vld [vmem:[#allocation8 + $0x688] sm:$0xff]
    %v1889 = vld [vmem:[#allocation8 + $0x690] sm:$0xff]
    %v1890 = vld [vmem:[#allocation8 + $0x698] sm:$0xff]
    %v1891 = vld [vmem:[#allocation8 + $0x6a0] sm:$0xff]
    %v1892 = vld [vmem:[#allocation8 + $0x6a8] sm:$0xff]
    %v1893 = vld [vmem:[#allocation8 + $0x6b0] sm:$0xff]
    %v1894 = vld [vmem:[#allocation8 + $0x6b8] sm:$0xff]
    %v1895 = vld [vmem:[#allocation8 + $0x6c0] sm:$0xff]
    %v1896 = vld [vmem:[#allocation8 + $0x6c8] sm:$0xff]
    %v1897 = vld [vmem:[#allocation8 + $0x6d0] sm:$0xff]
    %v1898 = vld [vmem:[#allocation8 + $0x6d8] sm:$0xff]
    %v1899 = vld [vmem:[#allocation8 + $0x6e0] sm:$0xff]
    %v1900 = vld [vmem:[#allocation8 + $0x6e8] sm:$0xff]
    %v1901 = vld [vmem:[#allocation8 + $0x6f0] sm:$0xff]
    %v1902 = vld [vmem:[#allocation8 + $0x6f8] sm:$0xff]
    %v1903 = vld [vmem:[#allocation8 + $0x700] sm:$0xff]
    %v1904 = vld [vmem:[#allocation8 + $0x708] sm:$0xff]
    %v1905 = vld [vmem:[#allocation8 + $0x710] sm:$0xff]
    %v1906 = vld [vmem:[#allocation8 + $0x718] sm:$0xff]
    %v1907 = vld [vmem:[#allocation8 + $0x720] sm:$0xff]
    %v1908 = vld [vmem:[#allocation8 + $0x728] sm:$0xff]
    %v1909 = vld [vmem:[#allocation8 + $0x730] sm:$0xff]
    %v1910 = vld [vmem:[#allocation8 + $0x738] sm:$0xff]
    %v1911 = vld [vmem:[#allocation8 + $0x740] sm:$0xff]
    %v1912 = vld [vmem:[#allocation8 + $0x748] sm:$0xff]
    %v1913 = vld [vmem:[#allocation8 + $0x750] sm:$0xff]
    %v1914 = vld [vmem:[#allocation8 + $0x758] sm:$0xff]
    %v1915 = vld [vmem:[#allocation8 + $0x760] sm:$0xff]
    %v1916 = vld [vmem:[#allocation8 + $0x768] sm:$0xff]
    %v1917 = vld [vmem:[#allocation8 + $0x770] sm:$0xff]
    %v1918 = vld [vmem:[#allocation8 + $0x778] sm:$0xff]
    %v1919 = vld [vmem:[#allocation8 + $0x780] sm:$0xff]
    %v1920 = vld [vmem:[#allocation8 + $0x788] sm:$0xff]
    %v1921 = vld [vmem:[#allocation8 + $0x790] sm:$0xff]
    %v1922 = vld [vmem:[#allocation8 + $0x798] sm:$0xff]
    %v1923 = vld [vmem:[#allocation8 + $0x7a0] sm:$0xff]
    %v1924 = vld [vmem:[#allocation8 + $0x7a8] sm:$0xff]
    %v1925 = vld [vmem:[#allocation8 + $0x7b0] sm:$0xff]
    %v1926 = vld [vmem:[#allocation8 + $0x7b8] sm:$0xff]
    %v1927 = vld [vmem:[#allocation8 + $0x7c0] sm:$0xff]
    %v1928 = vld [vmem:[#allocation8 + $0x7c8] sm:$0xff]
    %v1929 = vld [vmem:[#allocation8 + $0x7d0] sm:$0xff]
    %v1930 = vld [vmem:[#allocation8 + $0x7d8] sm:$0xff]
    %v1931 = vld [vmem:[#allocation8 + $0x7e0] sm:$0xff]
    %v1932 = vld [vmem:[#allocation8 + $0x7e8] sm:$0xff]
    %v1933 = vld [vmem:[#allocation8 + $0x7f0] sm:$0xff]
    %v1934 = vld [vmem:[#allocation8 + $0x7f8] sm:$0xff]
    %v1935 = vld [vmem:[#allocation8 + $0x800] sm:$0xff]
    %v1936 = vld [vmem:[#allocation8 + $0x808] sm:$0xff]
    %v1937 = vld [vmem:[#allocation8 + $0x810] sm:$0xff]
    %v1938 = vld [vmem:[#allocation8 + $0x818] sm:$0xff]
    %v1939 = vld [vmem:[#allocation8 + $0x820] sm:$0xff]
    %v1940 = vld [vmem:[#allocation8 + $0x828] sm:$0xff]
    %v1941 = vld [vmem:[#allocation8 + $0x830] sm:$0xff]
    %v1942 = vld [vmem:[#allocation8 + $0x838] sm:$0xff]
    %v1943 = vld [vmem:[#allocation8 + $0x840] sm:$0xff]
    %v1944 = vld [vmem:[#allocation8 + $0x848] sm:$0xff]
    %v1945 = vld [vmem:[#allocation8 + $0x850] sm:$0xff]
    %v1946 = vld [vmem:[#allocation8 + $0x858] sm:$0xff]
    %v1947 = vld [vmem:[#allocation8 + $0x860] sm:$0xff]
    %v1948 = vld [vmem:[#allocation8 + $0x868] sm:$0xff]
    %v1949 = vld [vmem:[#allocation8 + $0x870] sm:$0xff]
    %v1950 = vld [vmem:[#allocation8 + $0x878] sm:$0xff]
    %v1951 = vld [vmem:[#allocation8 + $0x880] sm:$0xff]
    %v1952 = vld [vmem:[#allocation8 + $0x888] sm:$0xff]
    %v1953 = vld [vmem:[#allocation8 + $0x890] sm:$0xff]
    %v1954 = vld [vmem:[#allocation8 + $0x898] sm:$0xff]
    %v1955 = vld [vmem:[#allocation8 + $0x8a0] sm:$0xff]
    %v1956 = vld [vmem:[#allocation8 + $0x8a8] sm:$0xff]
    %v1957 = vld [vmem:[#allocation8 + $0x8b0] sm:$0xff]
    %v1958 = vld [vmem:[#allocation8 + $0x8b8] sm:$0xff]
    %v1959 = vld [vmem:[#allocation8 + $0x8c0] sm:$0xff]
    %v1960 = vld [vmem:[#allocation8 + $0x8c8] sm:$0xff]
    %v1961 = vld [vmem:[#allocation8 + $0x8d0] sm:$0xff]
    %v1962 = vld [vmem:[#allocation8 + $0x8d8] sm:$0xff]
    %v1963 = vld [vmem:[#allocation8 + $0x8e0] sm:$0xff]
    %v1964 = vld [vmem:[#allocation8 + $0x8e8] sm:$0xff]
    %v1965 = vld [vmem:[#allocation8 + $0x8f0] sm:$0xff]
    %v1966 = vld [vmem:[#allocation8 + $0x8f8] sm:$0xff]
    %v1967 = vld [vmem:[#allocation8 + $0x900] sm:$0xff]
    %v1968 = vld [vmem:[#allocation8 + $0x908] sm:$0xff]
    %v1969 = vld [vmem:[#allocation8 + $0x910] sm:$0xff]
    %v1970 = vld [vmem:[#allocation8 + $0x918] sm:$0xff]
    %v1971 = vld [vmem:[#allocation8 + $0x920] sm:$0xff]
    %v1972 = vld [vmem:[#allocation8 + $0x928] sm:$0xff]
    %v1973 = vld [vmem:[#allocation8 + $0x930] sm:$0xff]
    %v1974 = vld [vmem:[#allocation8 + $0x938] sm:$0xff]
    %v1975 = vld [vmem:[#allocation8 + $0x940] sm:$0xff]
    %v1976 = vld [vmem:[#allocation8 + $0x948] sm:$0xff]
    %v1977 = vld [vmem:[#allocation8 + $0x950] sm:$0xff]
    %v1978 = vld [vmem:[#allocation8 + $0x958] sm:$0xff]
    %v1979 = vld [vmem:[#allocation8 + $0x960] sm:$0xff]
    %v1980 = vld [vmem:[#allocation8 + $0x968] sm:$0xff]
    %v1981 = vld [vmem:[#allocation8 + $0x970] sm:$0xff]
    %v1982 = vld [vmem:[#allocation8 + $0x978] sm:$0xff]
    %v1983 = vld [vmem:[#allocation8 + $0x980] sm:$0xff]
    %v1984 = vld [vmem:[#allocation8 + $0x988] sm:$0xff]
    %v1985 = vld [vmem:[#allocation8 + $0x990] sm:$0xff]
    %v1986 = vld [vmem:[#allocation8 + $0x998] sm:$0xff]
    %v1987 = vld [vmem:[#allocation8 + $0x9a0] sm:$0xff]
    %v1988 = vld [vmem:[#allocation8 + $0x9a8] sm:$0xff]
    %v1989 = vld [vmem:[#allocation8 + $0x9b0] sm:$0xff]
    %v1990 = vld [vmem:[#allocation8 + $0x9b8] sm:$0xff]
    %v1991 = vld [vmem:[#allocation8 + $0x9c0] sm:$0xff]
    %v1992 = vld [vmem:[#allocation8 + $0x9c8] sm:$0xff]
    %v1993 = vld [vmem:[#allocation8 + $0x9d0] sm:$0xff]
    %v1994 = vld [vmem:[#allocation8 + $0x9d8] sm:$0xff]
    %v1995 = vld [vmem:[#allocation8 + $0x9e0] sm:$0xff]
    %v1996 = vld [vmem:[#allocation8 + $0x9e8] sm:$0xff]
    %v1997 = vld [vmem:[#allocation8 + $0x9f0] sm:$0xff]
    %v1998 = vld [vmem:[#allocation8 + $0x9f8] sm:$0xff]
    %v1999 = vld [vmem:[#allocation8 + $0xa00] sm:$0xff]
    %v2000 = vld [vmem:[#allocation8 + $0xa08] sm:$0xff]
    %v2001 = vld [vmem:[#allocation8 + $0xa10] sm:$0xff]
    %v2002 = vld [vmem:[#allocation8 + $0xa18] sm:$0xff]
    %v2003 = vld [vmem:[#allocation8 + $0xa20] sm:$0xff]
    %v2004 = vld [vmem:[#allocation8 + $0xa28] sm:$0xff]
    %v2005 = vld [vmem:[#allocation8 + $0xa30] sm:$0xff]
    %v2006 = vld [vmem:[#allocation8 + $0xa38] sm:$0xff]
    %v2007 = vld [vmem:[#allocation8 + $0xa40] sm:$0xff]
    %v2008 = vld [vmem:[#allocation8 + $0xa48] sm:$0xff]
    %v2009 = vld [vmem:[#allocation8 + $0xa50] sm:$0xff]
    %v2010 = vld [vmem:[#allocation8 + $0xa58] sm:$0xff]
    %v2011 = vld [vmem:[#allocation8 + $0xa60] sm:$0xff]
    %v2012 = vld [vmem:[#allocation8 + $0xa68] sm:$0xff]
    %v2013 = vld [vmem:[#allocation8 + $0xa70] sm:$0xff]
    %v2014 = vld [vmem:[#allocation8 + $0xa78] sm:$0xff]
    %v2015 = vld [vmem:[#allocation8 + $0xa80] sm:$0xff]
    %v2016 = vld [vmem:[#allocation8 + $0xa88] sm:$0xff]
    %v2017 = vld [vmem:[#allocation8 + $0xa90] sm:$0xff]
    %v2018 = vld [vmem:[#allocation8 + $0xa98] sm:$0xff]
    %v2019 = vld [vmem:[#allocation8 + $0xaa0] sm:$0xff]
    %v2020 = vld [vmem:[#allocation8 + $0xaa8] sm:$0xff]
    %v2021 = vld [vmem:[#allocation8 + $0xab0] sm:$0xff]
    %v2022 = vld [vmem:[#allocation8 + $0xab8] sm:$0xff]
    %v2023 = vld [vmem:[#allocation8 + $0xac0] sm:$0xff]
    %v2024 = vld [vmem:[#allocation8 + $0xac8] sm:$0xff]
    %v2025 = vld [vmem:[#allocation8 + $0xad0] sm:$0xff]
    %v2026 = vld [vmem:[#allocation8 + $0xad8] sm:$0xff]
    %v2027 = vld [vmem:[#allocation8 + $0xae0] sm:$0xff]
    %v2028 = vld [vmem:[#allocation8 + $0xae8] sm:$0xff]
    %v2029 = vld [vmem:[#allocation8 + $0xaf0] sm:$0xff]
    %v2030 = vld [vmem:[#allocation8 + $0xaf8] sm:$0xff]
    %v2031 = vld [vmem:[#allocation8 + $0xb00] sm:$0xff]
    %v2032 = vld [vmem:[#allocation8 + $0xb08] sm:$0xff]
    %v2033 = vld [vmem:[#allocation8 + $0xb10] sm:$0xff]
    %v2034 = vld [vmem:[#allocation8 + $0xb18] sm:$0xff]
    %v2035 = vld [vmem:[#allocation8 + $0xb20] sm:$0xff]
    %v2036 = vld [vmem:[#allocation8 + $0xb28] sm:$0xff]
    %v2037 = vld [vmem:[#allocation8 + $0xb30] sm:$0xff]
    %v2038 = vld [vmem:[#allocation8 + $0xb38] sm:$0xff]
    %v2039 = vld [vmem:[#allocation8 + $0xb40] sm:$0xff]
    %v2040 = vld [vmem:[#allocation8 + $0xb48] sm:$0xff]
    %v2041 = vld [vmem:[#allocation8 + $0xb50] sm:$0xff]
    %v2042 = vld [vmem:[#allocation8 + $0xb58] sm:$0xff]
    %v2043 = vld [vmem:[#allocation8 + $0xb60] sm:$0xff]
    %v2044 = vld [vmem:[#allocation8 + $0xb68] sm:$0xff]
    %v2045 = vld [vmem:[#allocation8 + $0xb70] sm:$0xff]
    %v2046 = vld [vmem:[#allocation8 + $0xb78] sm:$0xff]
    %v2047 = vld [vmem:[#allocation8 + $0xb80] sm:$0xff]
    %v2048 = vld [vmem:[#allocation8 + $0xb88] sm:$0xff]
    %v2049 = vld [vmem:[#allocation8 + $0xb90] sm:$0xff]
    %v2050 = vld [vmem:[#allocation8 + $0xb98] sm:$0xff]
    %v2051 = vld [vmem:[#allocation8 + $0xba0] sm:$0xff]
    %v2052 = vld [vmem:[#allocation8 + $0xba8] sm:$0xff]
    %v2053 = vld [vmem:[#allocation8 + $0xbb0] sm:$0xff]
    %v2054 = vld [vmem:[#allocation8 + $0xbb8] sm:$0xff]
    %v2055 = vld [vmem:[#allocation8 + $0xbc0] sm:$0xff]
    %v2056 = vld [vmem:[#allocation8 + $0xbc8] sm:$0xff]
    %v2057 = vld [vmem:[#allocation8 + $0xbd0] sm:$0xff]
    %v2058 = vld [vmem:[#allocation8 + $0xbd8] sm:$0xff]
    %v2059 = vld [vmem:[#allocation8 + $0xbe0] sm:$0xff]
    %v2060 = vld [vmem:[#allocation8 + $0xbe8] sm:$0xff]
    %v2061 = vld [vmem:[#allocation8 + $0xbf0] sm:$0xff]
    %v2062 = vld [vmem:[#allocation8 + $0xbf8] sm:$0xff]
    %v2063 = vld [vmem:[#allocation8 + $0xc00] sm:$0xff]
    %v2064 = vld [vmem:[#allocation8 + $0xc08] sm:$0xff]
    %v2065 = vld [vmem:[#allocation8 + $0xc10] sm:$0xff]
    %v2066 = vld [vmem:[#allocation8 + $0xc18] sm:$0xff]
    %v2067 = vld [vmem:[#allocation8 + $0xc20] sm:$0xff]
    %v2068 = vld [vmem:[#allocation8 + $0xc28] sm:$0xff]
    %v2069 = vld [vmem:[#allocation8 + $0xc30] sm:$0xff]
    %v2070 = vld [vmem:[#allocation8 + $0xc38] sm:$0xff]
    %v2071 = vld [vmem:[#allocation8 + $0xc40] sm:$0xff]
    %v2072 = vld [vmem:[#allocation8 + $0xc48] sm:$0xff]
    %v2073 = vld [vmem:[#allocation8 + $0xc50] sm:$0xff]
    %v2074 = vld [vmem:[#allocation8 + $0xc58] sm:$0xff]
    %v2075 = vld [vmem:[#allocation8 + $0xc60] sm:$0xff]
    %v2076 = vld [vmem:[#allocation8 + $0xc68] sm:$0xff]
    %v2077 = vld [vmem:[#allocation8 + $0xc70] sm:$0xff]
    %v2078 = vld [vmem:[#allocation8 + $0xc78] sm:$0xff]
    %v2079 = vld [vmem:[#allocation8 + $0xc80] sm:$0xff]
    %v2080 = vld [vmem:[#allocation8 + $0xc88] sm:$0xff]
    %v2081 = vld [vmem:[#allocation8 + $0xc90] sm:$0xff]
    %v2082 = vld [vmem:[#allocation8 + $0xc98] sm:$0xff]
    %v2083 = vld [vmem:[#allocation8 + $0xca0] sm:$0xff]
    %v2084 = vld [vmem:[#allocation8 + $0xca8] sm:$0xff]
    %v2085 = vld [vmem:[#allocation8 + $0xcb0] sm:$0xff]
    %v2086 = vld [vmem:[#allocation8 + $0xcb8] sm:$0xff]
    %v2087 = vld [vmem:[#allocation8 + $0xcc0] sm:$0xff]
    %v2088 = vld [vmem:[#allocation8 + $0xcc8] sm:$0xff]
    %v2089 = vld [vmem:[#allocation8 + $0xcd0] sm:$0xff]
    %v2090 = vld [vmem:[#allocation8 + $0xcd8] sm:$0xff]
    %v2091 = vld [vmem:[#allocation8 + $0xce0] sm:$0xff]
    %v2092 = vld [vmem:[#allocation8 + $0xce8] sm:$0xff]
    %v2093 = vld [vmem:[#allocation8 + $0xcf0] sm:$0xff]
    %v2094 = vld [vmem:[#allocation8 + $0xcf8] sm:$0xff]
    %v2095 = vld [vmem:[#allocation8 + $0xd00] sm:$0xff]
    %v2096 = vld [vmem:[#allocation8 + $0xd08] sm:$0xff]
    %v2097 = vld [vmem:[#allocation8 + $0xd10] sm:$0xff]
    %v2098 = vld [vmem:[#allocation8 + $0xd18] sm:$0xff]
    %v2099 = vld [vmem:[#allocation8 + $0xd20] sm:$0xff]
    %v2100 = vld [vmem:[#allocation8 + $0xd28] sm:$0xff]
    %v2101 = vld [vmem:[#allocation8 + $0xd30] sm:$0xff]
    %v2102 = vld [vmem:[#allocation8 + $0xd38] sm:$0xff]
    %v2103 = vld [vmem:[#allocation8 + $0xd40] sm:$0xff]
    %v2104 = vld [vmem:[#allocation8 + $0xd48] sm:$0xff]
    %v2105 = vld [vmem:[#allocation8 + $0xd50] sm:$0xff]
    %v2106 = vld [vmem:[#allocation8 + $0xd58] sm:$0xff]
    %v2107 = vld [vmem:[#allocation8 + $0xd60] sm:$0xff]
    %v2108 = vld [vmem:[#allocation8 + $0xd68] sm:$0xff]
    %v2109 = vld [vmem:[#allocation8 + $0xd70] sm:$0xff]
    %v2110 = vld [vmem:[#allocation8 + $0xd78] sm:$0xff]
    %v2111 = vld [vmem:[#allocation8 + $0xd80] sm:$0xff]
    %v2112 = vld [vmem:[#allocation8 + $0xd88] sm:$0xff]
    %v2113 = vld [vmem:[#allocation8 + $0xd90] sm:$0xff]
    %v2114 = vld [vmem:[#allocation8 + $0xd98] sm:$0xff]
    %v2115 = vld [vmem:[#allocation8 + $0xda0] sm:$0xff]
    %v2116 = vld [vmem:[#allocation8 + $0xda8] sm:$0xff]
    %v2117 = vld [vmem:[#allocation8 + $0xdb0] sm:$0xff]
    %v2118 = vld [vmem:[#allocation8 + $0xdb8] sm:$0xff]
    %v2119 = vld [vmem:[#allocation8 + $0xdc0] sm:$0xff]
    %v2120 = vld [vmem:[#allocation8 + $0xdc8] sm:$0xff]
    %v2121 = vld [vmem:[#allocation8 + $0xdd0] sm:$0xff]
    %v2122 = vld [vmem:[#allocation8 + $0xdd8] sm:$0xff]
    %v2123 = vld [vmem:[#allocation8 + $0xde0] sm:$0xff]
    %v2124 = vld [vmem:[#allocation8 + $0xde8] sm:$0xff]
    %v2125 = vld [vmem:[#allocation8 + $0xdf0] sm:$0xff]
    %v2126 = vld [vmem:[#allocation8 + $0xdf8] sm:$0xff]
    %v2127 = vld [vmem:[#allocation8 + $0xe00] sm:$0xff]
    %v2128 = vld [vmem:[#allocation8 + $0xe08] sm:$0xff]
    %v2129 = vld [vmem:[#allocation8 + $0xe10] sm:$0xff]
    %v2130 = vld [vmem:[#allocation8 + $0xe18] sm:$0xff]
    %v2131 = vld [vmem:[#allocation8 + $0xe20] sm:$0xff]
    %v2132 = vld [vmem:[#allocation8 + $0xe28] sm:$0xff]
    %v2133 = vld [vmem:[#allocation8 + $0xe30] sm:$0xff]
    %v2134 = vld [vmem:[#allocation8 + $0xe38] sm:$0xff]
    %v2135 = vld [vmem:[#allocation8 + $0xe40] sm:$0xff]
    %v2136 = vld [vmem:[#allocation8 + $0xe48] sm:$0xff]
    %v2137 = vld [vmem:[#allocation8 + $0xe50] sm:$0xff]
    %v2138 = vld [vmem:[#allocation8 + $0xe58] sm:$0xff]
    %v2139 = vld [vmem:[#allocation8 + $0xe60] sm:$0xff]
    %v2140 = vld [vmem:[#allocation8 + $0xe68] sm:$0xff]
    %v2141 = vld [vmem:[#allocation8 + $0xe70] sm:$0xff]
    %v2142 = vld [vmem:[#allocation8 + $0xe78] sm:$0xff]
    %v2143 = vld [vmem:[#allocation8 + $0xe80] sm:$0xff]
    %v2144 = vld [vmem:[#allocation8 + $0xe88] sm:$0xff]
    %v2145 = vld [vmem:[#allocation8 + $0xe90] sm:$0xff]
    %v2146 = vld [vmem:[#allocation8 + $0xe98] sm:$0xff]
    %v2147 = vld [vmem:[#allocation8 + $0xea0] sm:$0xff]
    %v2148 = vld [vmem:[#allocation8 + $0xea8] sm:$0xff]
    %v2149 = vld [vmem:[#allocation8 + $0xeb0] sm:$0xff]
    %v2150 = vld [vmem:[#allocation8 + $0xeb8] sm:$0xff]
    %v2151 = vld [vmem:[#allocation8 + $0xec0] sm:$0xff]
    %v2152 = vld [vmem:[#allocation8 + $0xec8] sm:$0xff]
    %v2153 = vld [vmem:[#allocation8 + $0xed0] sm:$0xff]
    %v2154 = vld [vmem:[#allocation8 + $0xed8] sm:$0xff]
    %v2155 = vld [vmem:[#allocation8 + $0xee0] sm:$0xff]
    %v2156 = vld [vmem:[#allocation8 + $0xee8] sm:$0xff]
    %v2157 = vld [vmem:[#allocation8 + $0xef0] sm:$0xff]
    %v2158 = vld [vmem:[#allocation8 + $0xef8] sm:$0xff]
    %v2159 = vld [vmem:[#allocation8 + $0xf00] sm:$0xff]
    %v2160 = vld [vmem:[#allocation8 + $0xf08] sm:$0xff]
    %v2161 = vld [vmem:[#allocation8 + $0xf10] sm:$0xff]
    %v2162 = vld [vmem:[#allocation8 + $0xf18] sm:$0xff]
    %v2163 = vld [vmem:[#allocation8 + $0xf20] sm:$0xff]
    %v2164 = vld [vmem:[#allocation8 + $0xf28] sm:$0xff]
    %v2165 = vld [vmem:[#allocation8 + $0xf30] sm:$0xff]
    %v2166 = vld [vmem:[#allocation8 + $0xf38] sm:$0xff]
    %v2167 = vld [vmem:[#allocation8 + $0xf40] sm:$0xff]
    %v2168 = vld [vmem:[#allocation8 + $0xf48] sm:$0xff]
    %v2169 = vld [vmem:[#allocation8 + $0xf50] sm:$0xff]
    %v2170 = vld [vmem:[#allocation8 + $0xf58] sm:$0xff]
    %v2171 = vld [vmem:[#allocation8 + $0xf60] sm:$0xff]
    %v2172 = vld [vmem:[#allocation8 + $0xf68] sm:$0xff]
    %v2173 = vld [vmem:[#allocation8 + $0xf70] sm:$0xff]
    %v2174 = vld [vmem:[#allocation8 + $0xf78] sm:$0xff]
    %v2175 = vld [vmem:[#allocation8 + $0xf80] sm:$0xff]
    %v2176 = vld [vmem:[#allocation8 + $0xf88] sm:$0xff]
    %v2177 = vld [vmem:[#allocation8 + $0xf90] sm:$0xff]
    %v2178 = vld [vmem:[#allocation8 + $0xf98] sm:$0xff]
    %v2179 = vld [vmem:[#allocation8 + $0xfa0] sm:$0xff]
    %v2180 = vld [vmem:[#allocation8 + $0xfa8] sm:$0xff]
    %v2181 = vld [vmem:[#allocation8 + $0xfb0] sm:$0xff]
    %v2182 = vld [vmem:[#allocation8 + $0xfb8] sm:$0xff]
    %v2183 = vld [vmem:[#allocation8 + $0xfc0] sm:$0xff]
    %v2184 = vld [vmem:[#allocation8 + $0xfc8] sm:$0xff]
    %v2185 = vld [vmem:[#allocation8 + $0xfd0] sm:$0xff]
    %v2186 = vld [vmem:[#allocation8 + $0xfd8] sm:$0xff]
    %v2187 = vld [vmem:[#allocation8 + $0xfe0] sm:$0xff]
    %v2188 = vld [vmem:[#allocation8 + $0xfe8] sm:$0xff]
    %v2189 = vld [vmem:[#allocation8 + $0xff0] sm:$0xff]
    %v2190 = vld [vmem:[#allocation8 + $0xff8] sm:$0xff]
    %v2191 = vld [vmem:[#allocation8 + $0x1000] sm:$0xff]
    %v2192 = vld [vmem:[#allocation8 + $0x1008] sm:$0xff]
    %v2193 = vld [vmem:[#allocation8 + $0x1010] sm:$0xff]
    %v2194 = vld [vmem:[#allocation8 + $0x1018] sm:$0xff]
    %v2195 = vld [vmem:[#allocation8 + $0x1020] sm:$0xff]
    %v2196 = vld [vmem:[#allocation8 + $0x1028] sm:$0xff]
    %v2197 = vld [vmem:[#allocation8 + $0x1030] sm:$0xff]
    %v2198 = vld [vmem:[#allocation8 + $0x1038] sm:$0xff]
    %v2199 = vld [vmem:[#allocation8 + $0x1040] sm:$0xff]
    %v2200 = vld [vmem:[#allocation8 + $0x1048] sm:$0xff]
    %v2201 = vld [vmem:[#allocation8 + $0x1050] sm:$0xff]
    %v2202 = vld [vmem:[#allocation8 + $0x1058] sm:$0xff]
    %v2203 = vld [vmem:[#allocation8 + $0x1060] sm:$0xff]
    %v2204 = vld [vmem:[#allocation8 + $0x1068] sm:$0xff]
    %v2205 = vld [vmem:[#allocation8 + $0x1070] sm:$0xff]
    %v2206 = vld [vmem:[#allocation8 + $0x1078] sm:$0xff]
    %v2207 = vld [vmem:[#allocation8 + $0x1080] sm:$0xff]
    %v2208 = vld [vmem:[#allocation8 + $0x1088] sm:$0xff]
    %v2209 = vld [vmem:[#allocation8 + $0x1090] sm:$0xff]
    %v2210 = vld [vmem:[#allocation8 + $0x1098] sm:$0xff]
    %v2211 = vld [vmem:[#allocation8 + $0x10a0] sm:$0xff]
    %v2212 = vld [vmem:[#allocation8 + $0x10a8] sm:$0xff]
    %v2213 = vld [vmem:[#allocation8 + $0x10b0] sm:$0xff]
    %v2214 = vld [vmem:[#allocation8 + $0x10b8] sm:$0xff]
    %v2215 = vld [vmem:[#allocation8 + $0x10c0] sm:$0xff]
    %v2216 = vld [vmem:[#allocation8 + $0x10c8] sm:$0xff]
    %v2217 = vld [vmem:[#allocation8 + $0x10d0] sm:$0xff]
    %v2218 = vld [vmem:[#allocation8 + $0x10d8] sm:$0xff]
    %v2219 = vld [vmem:[#allocation8 + $0x10e0] sm:$0xff]
    %v2220 = vld [vmem:[#allocation8 + $0x10e8] sm:$0xff]
    %v2221 = vld [vmem:[#allocation8 + $0x10f0] sm:$0xff]
    %v2222 = vld [vmem:[#allocation8 + $0x10f8] sm:$0xff]
    %v2223 = vld [vmem:[#allocation8 + $0x1100] sm:$0xff]
    %v2224 = vld [vmem:[#allocation8 + $0x1108] sm:$0xff]
    %v2225 = vld [vmem:[#allocation8 + $0x1110] sm:$0xff]
    %v2226 = vld [vmem:[#allocation8 + $0x1118] sm:$0xff]
    %v2227 = vld [vmem:[#allocation8 + $0x1120] sm:$0xff]
    %v2228 = vld [vmem:[#allocation8 + $0x1128] sm:$0xff]
    %v2229 = vld [vmem:[#allocation8 + $0x1130] sm:$0xff]
    %v2230 = vld [vmem:[#allocation8 + $0x1138] sm:$0xff]
    %v2231 = vld [vmem:[#allocation8 + $0x1140] sm:$0xff]
    %v2232 = vld [vmem:[#allocation8 + $0x1148] sm:$0xff]
    %v2233 = vld [vmem:[#allocation8 + $0x1150] sm:$0xff]
    %v2234 = vld [vmem:[#allocation8 + $0x1158] sm:$0xff]
    %v2235 = vld [vmem:[#allocation8 + $0x1160] sm:$0xff]
    %v2236 = vld [vmem:[#allocation8 + $0x1168] sm:$0xff]
    %v2237 = vld [vmem:[#allocation8 + $0x1170] sm:$0xff]
    %v2238 = vld [vmem:[#allocation8 + $0x1178] sm:$0xff]
    %v2239 = vld [vmem:[#allocation8 + $0x1180] sm:$0xff]
    %v2240 = vld [vmem:[#allocation8 + $0x1188] sm:$0xff]
    %v2241 = vld [vmem:[#allocation8 + $0x1190] sm:$0xff]
    %v2242 = vld [vmem:[#allocation8 + $0x1198] sm:$0xff]
    %v2243 = vld [vmem:[#allocation8 + $0x11a0] sm:$0xff]
    %v2244 = vld [vmem:[#allocation8 + $0x11a8] sm:$0xff]
    %v2245 = vld [vmem:[#allocation8 + $0x11b0] sm:$0xff]
    %v2246 = vld [vmem:[#allocation8 + $0x11b8] sm:$0xff]
    %v2247 = vld [vmem:[#allocation8 + $0x11c0] sm:$0xff]
    %v2248 = vld [vmem:[#allocation8 + $0x11c8] sm:$0xff]
    %v2249 = vld [vmem:[#allocation8 + $0x11d0] sm:$0xff]
    %v2250 = vld [vmem:[#allocation8 + $0x11d8] sm:$0xff]
    %v2251 = vld [vmem:[#allocation8 + $0x11e0] sm:$0xff]
    %v2252 = vld [vmem:[#allocation8 + $0x11e8] sm:$0xff]
    %v2253 = vld [vmem:[#allocation8 + $0x11f0] sm:$0xff]
    %v2254 = vld [vmem:[#allocation8 + $0x11f8] sm:$0xff]
    %v2255 = vld [vmem:[#allocation10] sm:$0x7]
    %v2257 = vlaneseq
    %v2258 = vshrl.u32 %v2257, 7
    %v2259 = vsub.s32 0, %v2258
    %v2260 = vrot.slane %v2255, %v2259
    %v2261 = vlaneseq
    %v2262 = vshrl.u32 %v2261, 7
    %v2263 = vsub.s32 1, %v2262
    %v2264 = vrot.slane %v2255, %v2263
    %v2265 = vlaneseq
    %v2266 = vshrl.u32 %v2265, 7
    %v2267 = vsub.s32 2, %v2266
    %v2268 = vrot.slane %v2255, %v2267
    %2272 = vmatprep.subr.mxu0 %v1680
    %2273 = vmatpush1.msra.mxu0 %v1679
    %2274 = vmatprep.subr.mxu0 %v1683
    %2275 = vmatpush1.msra.mxu0 %v1682
    %2276 = vmatprep.subr.mxu0 %v1686
    %2277 = vmatpush1.msra.mxu0 %v1685
    %2278 = vmatprep.subr.mxu0 %v1689
    %2279 = vmatpush1.msra.mxu0 %v1688
    %2280 = vmatprep.subr.mxu0 %v1692
    %2281 = vmatpush1.msra.mxu0 %v1691
    %2282 = vmatprep.subr.mxu0 %v1695
    %2283 = vmatpush1.msra.mxu0 %v1694
    %2284 = vmatprep.subr.mxu0 %v1698
    %2285 = vmatpush1.msra.mxu0 %v1697
    %2286 = vmatprep.subr.mxu0 %v1701
    %2287 = vmatpush1.msra.mxu0 %v1700
    %2288 = vmatprep.subr.mxu0 %v1704
    %2289 = vmatpush1.msra.mxu0 %v1703
    %2290 = vmatprep.subr.mxu0 %v1707
    %2291 = vmatpush1.msra.mxu0 %v1706
    %2292 = vmatprep.subr.mxu0 %v1710
    %2293 = vmatpush1.msra.mxu0 %v1709
    %2294 = vmatprep.subr.mxu0 %v1713
    %2295 = vmatpush1.msra.mxu0 %v1712
    %2296 = vmatprep.subr.mxu0 %v1716
    %2297 = vmatpush1.msra.mxu0 %v1715
    %2298 = vmatprep.subr.mxu0 %v1719
    %2299 = vmatpush1.msra.mxu0 %v1718
    %2300 = vmatprep.subr.mxu0 %v1722
    %2301 = vmatpush1.msra.mxu0 %v1721
    %2302 = vmatprep.subr.mxu0 %v1725
    %2303 = vmatpush1.msra.mxu0 %v1724
    %2304 = vmatprep.subr.mxu0 %v1728
    %2305 = vmatpush1.msra.mxu0 %v1727
    %2306 = vmatprep.subr.mxu0 %v1731
    %2307 = vmatpush1.msra.mxu0 %v1730
    %2308 = vmatprep.subr.mxu0 %v1734
    %2309 = vmatpush1.msra.mxu0 %v1733
    %2310 = vmatprep.subr.mxu0 %v1737
    %2311 = vmatpush1.msra.mxu0 %v1736
    %2312 = vmatprep.subr.mxu0 %v1740
    %2313 = vmatpush1.msra.mxu0 %v1739
    %2314 = vmatprep.subr.mxu0 %v1743
    %2315 = vmatpush1.msra.mxu0 %v1742
    %2316 = vmatprep.subr.mxu0 %v1746
    %2317 = vmatpush1.msra.mxu0 %v1745
    %2318 = vmatprep.subr.mxu0 %v1749
    %2319 = vmatpush1.msra.mxu0 %v1748
    %2320 = vmatprep.subr.mxu0 %v1752
    %2321 = vmatpush1.msra.mxu0 %v1751
    %2322 = vmatprep.subr.mxu0 %v1755
    %2323 = vmatpush1.msra.mxu0 %v1754
    %2324 = vmatprep.subr.mxu0 %v1758
    %2325 = vmatpush1.msra.mxu0 %v1757
    %2326 = vmatprep.subr.mxu0 %v1761
    %2327 = vmatpush1.msra.mxu0 %v1760
    %2328 = vmatprep.subr.mxu0 %v1764
    %2329 = vmatpush1.msra.mxu0 %v1763
    %2330 = vmatprep.subr.mxu0 %v1767
    %2331 = vmatpush1.msra.mxu0 %v1766
    %2332 = vmatprep.subr.mxu0 %v1770
    %2333 = vmatpush1.msra.mxu0 %v1769
    %2334 = vmatprep.subr.mxu0 %v1773
    %2335 = vmatpush1.msra.mxu0 %v1772
    %2336 = vmatprep.mubr.f32.mxu0 %v1656
    %2337 = vmatmul.mubr.f32.gmra.mrb[0].mxu0 %v1655
    %v2338 = vpop.f32.mrb[0].mxu0
    %v2339 = vadd.f32 %v2260, %v2338
    %v2340 = vpop.f32.mrb[0].mxu0
    %v2341 = vadd.f32 %v2264, %v2340
    %2342 = vmatprep.mubr.f32.mxu0 %v1668
    %2343 = vmatmul.mubr.f32.gmra.mrb[0].mxu0 %v1667
    %v2344 = vpop.f32.mrb[0].mxu0
    %v2345 = vadd.f32 %v2260, %v2344
    %v2346 = vpop.f32.mrb[0].mxu0
    %v2347 = vadd.f32 %v2264, %v2346
    %2348 = vdwg.mxu0
    %2349 = vmatprep.subr.mxu0 %v1776
    %2350 = vmatpush1.msra.mxu0 %v1775
    %2351 = vmatprep.subr.mxu0 %v1779
    %2352 = vmatpush1.msra.mxu0 %v1778
    %2353 = vmatprep.subr.mxu0 %v1782
    %2354 = vmatpush1.msra.mxu0 %v1781
    %2355 = vmatprep.subr.mxu0 %v1785
    %2356 = vmatpush1.msra.mxu0 %v1784
    %2357 = vmatprep.subr.mxu0 %v1788
    %2358 = vmatpush1.msra.mxu0 %v1787
    %2359 = vmatprep.subr.mxu0 %v1791
    %2360 = vmatpush1.msra.mxu0 %v1790
    %2361 = vmatprep.subr.mxu0 %v1794
    %2362 = vmatpush1.msra.mxu0 %v1793
    %2363 = vmatprep.subr.mxu0 %v1797
    %2364 = vmatpush1.msra.mxu0 %v1796
    %2365 = vmatprep.subr.mxu0 %v1800
    %2366 = vmatpush1.msra.mxu0 %v1799
    %2367 = vmatprep.subr.mxu0 %v1803
    %2368 = vmatpush1.msra.mxu0 %v1802
    %2369 = vmatprep.subr.mxu0 %v1806
    %2370 = vmatpush1.msra.mxu0 %v1805
    %2371 = vmatprep.subr.mxu0 %v1809
    %2372 = vmatpush1.msra.mxu0 %v1808
    %2373 = vmatprep.subr.mxu0 %v1812
    %2374 = vmatpush1.msra.mxu0 %v1811
    %2375 = vmatprep.subr.mxu0 %v1815
    %2376 = vmatpush1.msra.mxu0 %v1814
    %2377 = vmatprep.subr.mxu0 %v1818
    %2378 = vmatpush1.msra.mxu0 %v1817
    %2379 = vmatprep.subr.mxu0 %v1821
    %2380 = vmatpush1.msra.mxu0 %v1820
    %2381 = vmatprep.subr.mxu0 %v1824
    %2382 = vmatpush1.msra.mxu0 %v1823
    %2383 = vmatprep.subr.mxu0 %v1827
    %2384 = vmatpush1.msra.mxu0 %v1826
    %2385 = vmatprep.subr.mxu0 %v1830
    %2386 = vmatpush1.msra.mxu0 %v1829
    %2387 = vmatprep.subr.mxu0 %v1833
    %2388 = vmatpush1.msra.mxu0 %v1832
    %2389 = vmatprep.subr.mxu0 %v1836
    %2390 = vmatpush1.msra.mxu0 %v1835
    %2391 = vmatprep.subr.mxu0 %v1839
    %2392 = vmatpush1.msra.mxu0 %v1838
    %2393 = vmatprep.subr.mxu0 %v1842
    %2394 = vmatpush1.msra.mxu0 %v1841
    %2395 = vmatprep.subr.mxu0 %v1845
    %2396 = vmatpush1.msra.mxu0 %v1844
    %2397 = vmatprep.subr.mxu0 %v1848
    %2398 = vmatpush1.msra.mxu0 %v1847
    %2399 = vmatprep.subr.mxu0 %v1851
    %2400 = vmatpush1.msra.mxu0 %v1850
    %2401 = vmatprep.subr.mxu0 %v1854
    %2402 = vmatpush1.msra.mxu0 %v1853
    %2403 = vmatprep.subr.mxu0 %v1857
    %2404 = vmatpush1.msra.mxu0 %v1856
    %2405 = vmatprep.subr.mxu0 %v1860
    %2406 = vmatpush1.msra.mxu0 %v1859
    %2407 = vmatprep.subr.mxu0 %v1863
    %2408 = vmatpush1.msra.mxu0 %v1862
    %2409 = vmatprep.subr.mxu0 %v1866
    %2410 = vmatpush1.msra.mxu0 %v1865
    %2411 = vmatprep.subr.mxu0 %v1869
    %2412 = vmatpush1.msra.mxu0 %v1868
    %2413 = vmatprep.mubr.f32.mxu0 %v1658
    %2414 = vmatmul.mubr.f32.gmra.mrb[0].mxu0 %v1657
    %v2415 = vpop.f32.mrb[0].mxu0
    %v2416 = vadd.f32 %v2339, %v2415
    %v2417 = vpop.f32.mrb[0].mxu0
    %v2418 = vadd.f32 %v2341, %v2417
    %2419 = vmatprep.mubr.f32.mxu0 %v1670
    %2420 = vmatmul.mubr.f32.gmra.mrb[0].mxu0 %v1669
    %v2421 = vpop.f32.mrb[0].mxu0
    %v2422 = vadd.f32 %v2345, %v2421
    %v2423 = vpop.f32.mrb[0].mxu0
    %v2424 = vadd.f32 %v2347, %v2423
    %2425 = vdwg.mxu0
    %2426 = vmatprep.subr.mxu0 %v1872
    %2427 = vmatpush1.msra.mxu0 %v1871
    %2428 = vmatprep.subr.mxu0 %v1875
    %2429 = vmatpush1.msra.mxu0 %v1874
    %2430 = vmatprep.subr.mxu0 %v1878
    %2431 = vmatpush1.msra.mxu0 %v1877
    %2432 = vmatprep.subr.mxu0 %v1881
    %2433 = vmatpush1.msra.mxu0 %v1880
    %2434 = vmatprep.subr.mxu0 %v1884
    %2435 = vmatpush1.msra.mxu0 %v1883
    %2436 = vmatprep.subr.mxu0 %v1887
    %2437 = vmatpush1.msra.mxu0 %v1886
    %2438 = vmatprep.subr.mxu0 %v1890
    %2439 = vmatpush1.msra.mxu0 %v1889
    %2440 = vmatprep.subr.mxu0 %v1893
    %2441 = vmatpush1.msra.mxu0 %v1892
    %2442 = vmatprep.subr.mxu0 %v1896
    %2443 = vmatpush1.msra.mxu0 %v1895
    %2444 = vmatprep.subr.mxu0 %v1899
    %2445 = vmatpush1.msra.mxu0 %v1898
    %2446 = vmatprep.subr.mxu0 %v1902
    %2447 = vmatpush1.msra.mxu0 %v1901
    %2448 = vmatprep.subr.mxu0 %v1905
    %2449 = vmatpush1.msra.mxu0 %v1904
    %2450 = vmatprep.subr.mxu0 %v1908
    %2451 = vmatpush1.msra.mxu0 %v1907
    %2452 = vmatprep.subr.mxu0 %v1911
    %2453 = vmatpush1.msra.mxu0 %v1910
    %2454 = vmatprep.subr.mxu0 %v1914
    %2455 = vmatpush1.msra.mxu0 %v1913
    %2456 = vmatprep.subr.mxu0 %v1917
    %2457 = vmatpush1.msra.mxu0 %v1916
    %2458 = vmatprep.subr.mxu0 %v1920
    %2459 = vmatpush1.msra.mxu0 %v1919
    %2460 = vmatprep.subr.mxu0 %v1923
    %2461 = vmatpush1.msra.mxu0 %v1922
    %2462 = vmatprep.subr.mxu0 %v1926
    %2463 = vmatpush1.msra.mxu0 %v1925
    %2464 = vmatprep.subr.mxu0 %v1929
    %2465 = vmatpush1.msra.mxu0 %v1928
    %2466 = vmatprep.subr.mxu0 %v1932
    %2467 = vmatpush1.msra.mxu0 %v1931
    %2468 = vmatprep.subr.mxu0 %v1935
    %2469 = vmatpush1.msra.mxu0 %v1934
    %2470 = vmatprep.subr.mxu0 %v1938
    %2471 = vmatpush1.msra.mxu0 %v1937
    %2472 = vmatprep.subr.mxu0 %v1941
    %2473 = vmatpush1.msra.mxu0 %v1940
    %2474 = vmatprep.subr.mxu0 %v1944
    %2475 = vmatpush1.msra.mxu0 %v1943
    %2476 = vmatprep.subr.mxu0 %v1947
    %2477 = vmatpush1.msra.mxu0 %v1946
    %2478 = vmatprep.subr.mxu0 %v1950
    %2479 = vmatpush1.msra.mxu0 %v1949
    %2480 = vmatprep.subr.mxu0 %v1953
    %2481 = vmatpush1.msra.mxu0 %v1952
    %2482 = vmatprep.subr.mxu0 %v1956
    %2483 = vmatpush1.msra.mxu0 %v1955
    %2484 = vmatprep.subr.mxu0 %v1959
    %2485 = vmatpush1.msra.mxu0 %v1958
    %2486 = vmatprep.subr.mxu0 %v1962
    %2487 = vmatpush1.msra.mxu0 %v1961
    %2488 = vmatprep.subr.mxu0 %v1965
    %2489 = vmatpush1.msra.mxu0 %v1964
    %2490 = vmatprep.mubr.f32.mxu0 %v1660
    %2491 = vmatmul.mubr.f32.gmra.mrb[0].mxu0 %v1659
    %v2492 = vpop.f32.mrb[0].mxu0
    %v2493 = vadd.f32 %v2416, %v2492
    %v2494 = vpop.f32.mrb[0].mxu0
    %v2495 = vadd.f32 %v2418, %v2494
    %2496 = vmatprep.mubr.f32.mxu0 %v1672
    %2497 = vmatmul.mubr.f32.gmra.mrb[0].mxu0 %v1671
    %v2498 = vpop.f32.mrb[0].mxu0
    %v2499 = vadd.f32 %v2422, %v2498
    %v2500 = vpop.f32.mrb[0].mxu0
    %v2501 = vadd.f32 %v2424, %v2500
    %2502 = vdwg.mxu0
    %2503 = vmatprep.subr.mxu0 %v1968
    %2504 = vmatpush1.msra.mxu0 %v1967
    %2505 = vmatprep.subr.mxu0 %v1971
    %2506 = vmatpush1.msra.mxu0 %v1970
    %2507 = vmatprep.subr.mxu0 %v1974
    %2508 = vmatpush1.msra.mxu0 %v1973
    %2509 = vmatprep.subr.mxu0 %v1977
    %2510 = vmatpush1.msra.mxu0 %v1976
    %2511 = vmatprep.subr.mxu0 %v1980
    %2512 = vmatpush1.msra.mxu0 %v1979
    %2513 = vmatprep.subr.mxu0 %v1983
    %2514 = vmatpush1.msra.mxu0 %v1982
    %2515 = vmatprep.subr.mxu0 %v1986
    %2516 = vmatpush1.msra.mxu0 %v1985
    %2517 = vmatprep.subr.mxu0 %v1989
    %2518 = vmatpush1.msra.mxu0 %v1988
    %2519 = vmatprep.subr.mxu0 %v1992
    %2520 = vmatpush1.msra.mxu0 %v1991
    %2521 = vmatprep.subr.mxu0 %v1995
    %2522 = vmatpush1.msra.mxu0 %v1994
    %2523 = vmatprep.subr.mxu0 %v1998
    %2524 = vmatpush1.msra.mxu0 %v1997
    %2525 = vmatprep.subr.mxu0 %v2001
    %2526 = vmatpush1.msra.mxu0 %v2000
    %2527 = vmatprep.subr.mxu0 %v2004
    %2528 = vmatpush1.msra.mxu0 %v2003
    %2529 = vmatprep.subr.mxu0 %v2007
    %2530 = vmatpush1.msra.mxu0 %v2006
    %2531 = vmatprep.subr.mxu0 %v2010
    %2532 = vmatpush1.msra.mxu0 %v2009
    %2533 = vmatprep.subr.mxu0 %v2013
    %2534 = vmatpush1.msra.mxu0 %v2012
    %2535 = vmatprep.subr.mxu0 %v2016
    %2536 = vmatpush1.msra.mxu0 %v2015
    %2537 = vmatprep.subr.mxu0 %v2019
    %2538 = vmatpush1.msra.mxu0 %v2018
    %2539 = vmatprep.subr.mxu0 %v2022
    %2540 = vmatpush1.msra.mxu0 %v2021
    %2541 = vmatprep.subr.mxu0 %v2025
    %2542 = vmatpush1.msra.mxu0 %v2024
    %2543 = vmatprep.subr.mxu0 %v2028
    %2544 = vmatpush1.msra.mxu0 %v2027
    %2545 = vmatprep.subr.mxu0 %v2031
    %2546 = vmatpush1.msra.mxu0 %v2030
    %2547 = vmatprep.subr.mxu0 %v2034
    %2548 = vmatpush1.msra.mxu0 %v2033
    %2549 = vmatprep.subr.mxu0 %v2037
    %2550 = vmatpush1.msra.mxu0 %v2036
    %2551 = vmatprep.subr.mxu0 %v2040
    %2552 = vmatpush1.msra.mxu0 %v2039
    %2553 = vmatprep.subr.mxu0 %v2043
    %2554 = vmatpush1.msra.mxu0 %v2042
    %2555 = vmatprep.subr.mxu0 %v2046
    %2556 = vmatpush1.msra.mxu0 %v2045
    %2557 = vmatprep.subr.mxu0 %v2049
    %2558 = vmatpush1.msra.mxu0 %v2048
    %2559 = vmatprep.subr.mxu0 %v2052
    %2560 = vmatpush1.msra.mxu0 %v2051
    %2561 = vmatprep.subr.mxu0 %v2055
    %2562 = vmatpush1.msra.mxu0 %v2054
    %2563 = vmatprep.subr.mxu0 %v2058
    %2564 = vmatpush1.msra.mxu0 %v2057
    %2565 = vmatprep.subr.mxu0 %v2061
    %2566 = vmatpush1.msra.mxu0 %v2060
    %2567 = vmatprep.mubr.f32.mxu0 %v1662
    %2568 = vmatmul.mubr.f32.gmra.mrb[0].mxu0 %v1661
    %v2569 = vpop.f32.mrb[0].mxu0
    %v2570 = vadd.f32 %v2493, %v2569
    %v2571 = vpop.f32.mrb[0].mxu0
    %v2572 = vadd.f32 %v2495, %v2571
    %2573 = vmatprep.mubr.f32.mxu0 %v1674
    %2574 = vmatmul.mubr.f32.gmra.mrb[0].mxu0 %v1673
    %v2575 = vpop.f32.mrb[0].mxu0
    %v2576 = vadd.f32 %v2499, %v2575
    %v2577 = vpop.f32.mrb[0].mxu0
    %v2578 = vadd.f32 %v2501, %v2577
    %2579 = vdwg.mxu0
    %2580 = vmatprep.subr.mxu0 %v2064
    %2581 = vmatpush1.msra.mxu0 %v2063
    %2582 = vmatprep.subr.mxu0 %v2067
    %2583 = vmatpush1.msra.mxu0 %v2066
    %2584 = vmatprep.subr.mxu0 %v2070
    %2585 = vmatpush1.msra.mxu0 %v2069
    %2586 = vmatprep.subr.mxu0 %v2073
    %2587 = vmatpush1.msra.mxu0 %v2072
    %2588 = vmatprep.subr.mxu0 %v2076
    %2589 = vmatpush1.msra.mxu0 %v2075
    %2590 = vmatprep.subr.mxu0 %v2079
    %2591 = vmatpush1.msra.mxu0 %v2078
    %2592 = vmatprep.subr.mxu0 %v2082
    %2593 = vmatpush1.msra.mxu0 %v2081
    %2594 = vmatprep.subr.mxu0 %v2085
    %2595 = vmatpush1.msra.mxu0 %v2084
    %2596 = vmatprep.subr.mxu0 %v2088
    %2597 = vmatpush1.msra.mxu0 %v2087
    %2598 = vmatprep.subr.mxu0 %v2091
    %2599 = vmatpush1.msra.mxu0 %v2090
    %2600 = vmatprep.subr.mxu0 %v2094
    %2601 = vmatpush1.msra.mxu0 %v2093
    %2602 = vmatprep.subr.mxu0 %v2097
    %2603 = vmatpush1.msra.mxu0 %v2096
    %2604 = vmatprep.subr.mxu0 %v2100
    %2605 = vmatpush1.msra.mxu0 %v2099
    %2606 = vmatprep.subr.mxu0 %v2103
    %2607 = vmatpush1.msra.mxu0 %v2102
    %2608 = vmatprep.subr.mxu0 %v2106
    %2609 = vmatpush1.msra.mxu0 %v2105
    %2610 = vmatprep.subr.mxu0 %v2109
    %2611 = vmatpush1.msra.mxu0 %v2108
    %2612 = vmatprep.subr.mxu0 %v2112
    %2613 = vmatpush1.msra.mxu0 %v2111
    %2614 = vmatprep.subr.mxu0 %v2115
    %2615 = vmatpush1.msra.mxu0 %v2114
    %2616 = vmatprep.subr.mxu0 %v2118
    %2617 = vmatpush1.msra.mxu0 %v2117
    %2618 = vmatprep.subr.mxu0 %v2121
    %2619 = vmatpush1.msra.mxu0 %v2120
    %2620 = vmatprep.subr.mxu0 %v2124
    %2621 = vmatpush1.msra.mxu0 %v2123
    %2622 = vmatprep.subr.mxu0 %v2127
    %2623 = vmatpush1.msra.mxu0 %v2126
    %2624 = vmatprep.subr.mxu0 %v2130
    %2625 = vmatpush1.msra.mxu0 %v2129
    %2626 = vmatprep.subr.mxu0 %v2133
    %2627 = vmatpush1.msra.mxu0 %v2132
    %2628 = vmatprep.subr.mxu0 %v2136
    %2629 = vmatpush1.msra.mxu0 %v2135
    %2630 = vmatprep.subr.mxu0 %v2139
    %2631 = vmatpush1.msra.mxu0 %v2138
    %2632 = vmatprep.subr.mxu0 %v2142
    %2633 = vmatpush1.msra.mxu0 %v2141
    %2634 = vmatprep.subr.mxu0 %v2145
    %2635 = vmatpush1.msra.mxu0 %v2144
    %2636 = vmatprep.subr.mxu0 %v2148
    %2637 = vmatpush1.msra.mxu0 %v2147
    %2638 = vmatprep.subr.mxu0 %v2151
    %2639 = vmatpush1.msra.mxu0 %v2150
    %2640 = vmatprep.subr.mxu0 %v2154
    %2641 = vmatpush1.msra.mxu0 %v2153
    %2642 = vmatprep.subr.mxu0 %v2157
    %2643 = vmatpush1.msra.mxu0 %v2156
    %2644 = vmatprep.mubr.f32.mxu0 %v1664
    %2645 = vmatmul.mubr.f32.gmra.mrb[0].mxu0 %v1663
    %v2646 = vpop.f32.mrb[0].mxu0
    %v2647 = vadd.f32 %v2570, %v2646
    %v2648 = vpop.f32.mrb[0].mxu0
    %v2649 = vadd.f32 %v2572, %v2648
    %2650 = vmatprep.mubr.f32.mxu0 %v1676
    %2651 = vmatmul.mubr.f32.gmra.mrb[0].mxu0 %v1675
    %v2652 = vpop.f32.mrb[0].mxu0
    %v2653 = vadd.f32 %v2576, %v2652
    %v2654 = vpop.f32.mrb[0].mxu0
    %v2655 = vadd.f32 %v2578, %v2654
    %2656 = vdwg.mxu0
    %2657 = vmatprep.subr.mxu0 %v2160
    %2658 = vmatpush1.msra.mxu0 %v2159
    %2659 = vmatprep.subr.mxu0 %v2163
    %2660 = vmatpush1.msra.mxu0 %v2162
    %2661 = vmatprep.subr.mxu0 %v2166
    %2662 = vmatpush1.msra.mxu0 %v2165
    %2663 = vmatprep.subr.mxu0 %v2169
    %2664 = vmatpush1.msra.mxu0 %v2168
    %2665 = vmatprep.subr.mxu0 %v2172
    %2666 = vmatpush1.msra.mxu0 %v2171
    %2667 = vmatprep.subr.mxu0 %v2175
    %2668 = vmatpush1.msra.mxu0 %v2174
    %2669 = vmatprep.subr.mxu0 %v2178
    %2670 = vmatpush1.msra.mxu0 %v2177
    %2671 = vmatprep.subr.mxu0 %v2181
    %2672 = vmatpush1.msra.mxu0 %v2180
    %2673 = vmatprep.subr.mxu0 %v2184
    %2674 = vmatpush1.msra.mxu0 %v2183
    %2675 = vmatprep.subr.mxu0 %v2187
    %2676 = vmatpush1.msra.mxu0 %v2186
    %2677 = vmatprep.subr.mxu0 %v2190
    %2678 = vmatpush1.msra.mxu0 %v2189
    %2679 = vmatprep.subr.mxu0 %v2193
    %2680 = vmatpush1.msra.mxu0 %v2192
    %2681 = vmatprep.subr.mxu0 %v2196
    %2682 = vmatpush1.msra.mxu0 %v2195
    %2683 = vmatprep.subr.mxu0 %v2199
    %2684 = vmatpush1.msra.mxu0 %v2198
    %2685 = vmatprep.subr.mxu0 %v2202
    %2686 = vmatpush1.msra.mxu0 %v2201
    %2687 = vmatprep.subr.mxu0 %v2205
    %2688 = vmatpush1.msra.mxu0 %v2204
    %2689 = vmatprep.subr.mxu0 %v2208
    %2690 = vmatpush1.msra.mxu0 %v2207
    %2691 = vmatprep.subr.mxu0 %v2211
    %2692 = vmatpush1.msra.mxu0 %v2210
    %2693 = vmatprep.subr.mxu0 %v2214
    %2694 = vmatpush1.msra.mxu0 %v2213
    %2695 = vmatprep.subr.mxu0 %v2217
    %2696 = vmatpush1.msra.mxu0 %v2216
    %2697 = vmatprep.subr.mxu0 %v2220
    %2698 = vmatpush1.msra.mxu0 %v2219
    %2699 = vmatprep.subr.mxu0 %v2223
    %2700 = vmatpush1.msra.mxu0 %v2222
    %2701 = vmatprep.subr.mxu0 %v2226
    %2702 = vmatpush1.msra.mxu0 %v2225
    %2703 = vmatprep.subr.mxu0 %v2229
    %2704 = vmatpush1.msra.mxu0 %v2228
    %2705 = vmatprep.subr.mxu0 %v2232
    %2706 = vmatpush1.msra.mxu0 %v2231
    %2707 = vmatprep.subr.mxu0 %v2235
    %2708 = vmatpush1.msra.mxu0 %v2234
    %2709 = vmatprep.subr.mxu0 %v2238
    %2710 = vmatpush1.msra.mxu0 %v2237
    %2711 = vmatprep.subr.mxu0 %v2241
    %2712 = vmatpush1.msra.mxu0 %v2240
    %2713 = vmatprep.subr.mxu0 %v2244
    %2714 = vmatpush1.msra.mxu0 %v2243
    %2715 = vmatprep.subr.mxu0 %v2247
    %2716 = vmatpush1.msra.mxu0 %v2246
    %2717 = vmatprep.subr.mxu0 %v2250
    %2718 = vmatpush1.msra.mxu0 %v2249
    %2719 = vmatprep.subr.mxu0 %v2253
    %2720 = vmatpush1.msra.mxu0 %v2252
    %2721 = vmatprep.mubr.f32.mxu0 %v1666
    %2722 = vmatmul.mubr.f32.gmra.mrb[0].mxu0 %v1665
    %v2723 = vpop.f32.mrb[0].mxu0
    %v2724 = vadd.f32 %v2647, %v2723
    %v2725 = vpop.f32.mrb[0].mxu0
    %v2726 = vadd.f32 %v2649, %v2725
    %2727 = vmatprep.mubr.f32.mxu0 %v1678
    %2728 = vmatmul.mubr.f32.gmra.mrb[0].mxu0 %v1677
    %v2729 = vpop.f32.mrb[0].mxu0
    %v2730 = vadd.f32 %v2653, %v2729
    %v2731 = vpop.f32.mrb[0].mxu0
    %v2732 = vadd.f32 %v2655, %v2731
    %2733 = vdwg.mxu0
    %2734 = vmatprep.subr.mxu0 0.0
    %2735 = vmatpush1.msra.mxu0 %v1681
    %2736 = vmatprep.subr.mxu0 0.0
    %2737 = vmatpush1.msra.mxu0 %v1684
    %2738 = vmatprep.subr.mxu0 0.0
    %2739 = vmatpush1.msra.mxu0 %v1687
    %2740 = vmatprep.subr.mxu0 0.0
    %2741 = vmatpush1.msra.mxu0 %v1690
    %2742 = vmatprep.subr.mxu0 0.0
    %2743 = vmatpush1.msra.mxu0 %v1693
    %2744 = vmatprep.subr.mxu0 0.0
    %2745 = vmatpush1.msra.mxu0 %v1696
    %2746 = vmatprep.subr.mxu0 0.0
    %2747 = vmatpush1.msra.mxu0 %v1699
    %2748 = vmatprep.subr.mxu0 0.0
    %2749 = vmatpush1.msra.mxu0 %v1702
    %2750 = vmatprep.subr.mxu0 0.0
    %2751 = vmatpush1.msra.mxu0 %v1705
    %2752 = vmatprep.subr.mxu0 0.0
    %2753 = vmatpush1.msra.mxu0 %v1708
    %2754 = vmatprep.subr.mxu0 0.0
    %2755 = vmatpush1.msra.mxu0 %v1711
    %2756 = vmatprep.subr.mxu0 0.0
    %2757 = vmatpush1.msra.mxu0 %v1714
    %2758 = vmatprep.subr.mxu0 0.0
    %2759 = vmatpush1.msra.mxu0 %v1717
    %2760 = vmatprep.subr.mxu0 0.0
    %2761 = vmatpush1.msra.mxu0 %v1720
    %2762 = vmatprep.subr.mxu0 0.0
    %2763 = vmatpush1.msra.mxu0 %v1723
    %2764 = vmatprep.subr.mxu0 0.0
    %2765 = vmatpush1.msra.mxu0 %v1726
    %2766 = vmatprep.subr.mxu0 0.0
    %2767 = vmatpush1.msra.mxu0 %v1729
    %2768 = vmatprep.subr.mxu0 0.0
    %2769 = vmatpush1.msra.mxu0 %v1732
    %2770 = vmatprep.subr.mxu0 0.0
    %2771 = vmatpush1.msra.mxu0 %v1735
    %2772 = vmatprep.subr.mxu0 0.0
    %2773 = vmatpush1.msra.mxu0 %v1738
    %2774 = vmatprep.subr.mxu0 0.0
    %2775 = vmatpush1.msra.mxu0 %v1741
    %2776 = vmatprep.subr.mxu0 0.0
    %2777 = vmatpush1.msra.mxu0 %v1744
    %2778 = vmatprep.subr.mxu0 0.0
    %2779 = vmatpush1.msra.mxu0 %v1747
    %2780 = vmatprep.subr.mxu0 0.0
    %2781 = vmatpush1.msra.mxu0 %v1750
    %2782 = vmatprep.subr.mxu0 0.0
    %2783 = vmatpush1.msra.mxu0 %v1753
    %2784 = vmatprep.subr.mxu0 0.0
    %2785 = vmatpush1.msra.mxu0 %v1756
    %2786 = vmatprep.subr.mxu0 0.0
    %2787 = vmatpush1.msra.mxu0 %v1759
    %2788 = vmatprep.subr.mxu0 0.0
    %2789 = vmatpush1.msra.mxu0 %v1762
    %2790 = vmatprep.subr.mxu0 0.0
    %2791 = vmatpush1.msra.mxu0 %v1765
    %2792 = vmatprep.subr.mxu0 0.0
    %2793 = vmatpush1.msra.mxu0 %v1768
    %2794 = vmatprep.subr.mxu0 0.0
    %2795 = vmatpush1.msra.mxu0 %v1771
    %2796 = vmatprep.subr.mxu0 0.0
    %2797 = vmatpush1.msra.mxu0 %v1774
    %2798 = vmatprep.mubr.f32.mxu0 %v1656
    %2799 = vmatmul.mubr.f32.gmra.mrb[0].mxu0 %v1655
    %v2800 = vpop.f32.mrb[0].mxu0
    %v2801 = vadd.f32 %v2268, %v2800
    %v2802 = vpop.f32.mrb[0].mxu0
    %2803 = vmatprep.mubr.f32.mxu0 %v1668
    %2804 = vmatmul.mubr.f32.gmra.mrb[0].mxu0 %v1667
    %v2805 = vpop.f32.mrb[0].mxu0
    %v2806 = vadd.f32 %v2268, %v2805
    %v2807 = vpop.f32.mrb[0].mxu0
    %2808 = vdwg.mxu0
    %2809 = vmatprep.subr.mxu0 0.0
    %2810 = vmatpush1.msra.mxu0 %v1777
    %2811 = vmatprep.subr.mxu0 0.0
    %2812 = vmatpush1.msra.mxu0 %v1780
    %2813 = vmatprep.subr.mxu0 0.0
    %2814 = vmatpush1.msra.mxu0 %v1783
    %2815 = vmatprep.subr.mxu0 0.0
    %2816 = vmatpush1.msra.mxu0 %v1786
    %2817 = vmatprep.subr.mxu0 0.0
    %2818 = vmatpush1.msra.mxu0 %v1789
    %2819 = vmatprep.subr.mxu0 0.0
    %2820 = vmatpush1.msra.mxu0 %v1792
    %2821 = vmatprep.subr.mxu0 0.0
    %2822 = vmatpush1.msra.mxu0 %v1795
    %2823 = vmatprep.subr.mxu0 0.0
    %2824 = vmatpush1.msra.mxu0 %v1798
    %2825 = vmatprep.subr.mxu0 0.0
    %2826 = vmatpush1.msra.mxu0 %v1801
    %2827 = vmatprep.subr.mxu0 0.0
    %2828 = vmatpush1.msra.mxu0 %v1804
    %2829 = vmatprep.subr.mxu0 0.0
    %2830 = vmatpush1.msra.mxu0 %v1807
    %2831 = vmatprep.subr.mxu0 0.0
    %2832 = vmatpush1.msra.mxu0 %v1810
    %2833 = vmatprep.subr.mxu0 0.0
    %2834 = vmatpush1.msra.mxu0 %v1813
    %2835 = vmatprep.subr.mxu0 0.0
    %2836 = vmatpush1.msra.mxu0 %v1816
    %2837 = vmatprep.subr.mxu0 0.0
    %2838 = vmatpush1.msra.mxu0 %v1819
    %2839 = vmatprep.subr.mxu0 0.0
    %2840 = vmatpush1.msra.mxu0 %v1822
    %2841 = vmatprep.subr.mxu0 0.0
    %2842 = vmatpush1.msra.mxu0 %v1825
    %2843 = vmatprep.subr.mxu0 0.0
    %2844 = vmatpush1.msra.mxu0 %v1828
    %2845 = vmatprep.subr.mxu0 0.0
    %2846 = vmatpush1.msra.mxu0 %v1831
    %2847 = vmatprep.subr.mxu0 0.0
    %2848 = vmatpush1.msra.mxu0 %v1834
    %2849 = vmatprep.subr.mxu0 0.0
    %2850 = vmatpush1.msra.mxu0 %v1837
    %2851 = vmatprep.subr.mxu0 0.0
    %2852 = vmatpush1.msra.mxu0 %v1840
    %2853 = vmatprep.subr.mxu0 0.0
    %2854 = vmatpush1.msra.mxu0 %v1843
    %2855 = vmatprep.subr.mxu0 0.0
    %2856 = vmatpush1.msra.mxu0 %v1846
    %2857 = vmatprep.subr.mxu0 0.0
    %2858 = vmatpush1.msra.mxu0 %v1849
    %2859 = vmatprep.subr.mxu0 0.0
    %2860 = vmatpush1.msra.mxu0 %v1852
    %2861 = vmatprep.subr.mxu0 0.0
    %2862 = vmatpush1.msra.mxu0 %v1855
    %2863 = vmatprep.subr.mxu0 0.0
    %2864 = vmatpush1.msra.mxu0 %v1858
    %2865 = vmatprep.subr.mxu0 0.0
    %2866 = vmatpush1.msra.mxu0 %v1861
    %2867 = vmatprep.subr.mxu0 0.0
    %2868 = vmatpush1.msra.mxu0 %v1864
    %2869 = vmatprep.subr.mxu0 0.0
    %2870 = vmatpush1.msra.mxu0 %v1867
    %2871 = vmatprep.subr.mxu0 0.0
    %2872 = vmatpush1.msra.mxu0 %v1870
    %2873 = vmatprep.mubr.f32.mxu0 %v1658
    %2874 = vmatmul.mubr.f32.gmra.mrb[0].mxu0 %v1657
    %v2875 = vpop.f32.mrb[0].mxu0
    %v2876 = vadd.f32 %v2801, %v2875
    %v2877 = vpop.f32.mrb[0].mxu0
    %2878 = vmatprep.mubr.f32.mxu0 %v1670
    %2879 = vmatmul.mubr.f32.gmra.mrb[0].mxu0 %v1669
    %v2880 = vpop.f32.mrb[0].mxu0
    %v2881 = vadd.f32 %v2806, %v2880
    %v2882 = vpop.f32.mrb[0].mxu0
    %2883 = vdwg.mxu0
    %2884 = vmatprep.subr.mxu0 0.0
    %2885 = vmatpush1.msra.mxu0 %v1873
    %2886 = vmatprep.subr.mxu0 0.0
    %2887 = vmatpush1.msra.mxu0 %v1876
    %2888 = vmatprep.subr.mxu0 0.0
    %2889 = vmatpush1.msra.mxu0 %v1879
    %2890 = vmatprep.subr.mxu0 0.0
    %2891 = vmatpush1.msra.mxu0 %v1882
    %2892 = vmatprep.subr.mxu0 0.0
    %2893 = vmatpush1.msra.mxu0 %v1885
    %2894 = vmatprep.subr.mxu0 0.0
    %2895 = vmatpush1.msra.mxu0 %v1888
    %2896 = vmatprep.subr.mxu0 0.0
    %2897 = vmatpush1.msra.mxu0 %v1891
    %2898 = vmatprep.subr.mxu0 0.0
    %2899 = vmatpush1.msra.mxu0 %v1894
    %2900 = vmatprep.subr.mxu0 0.0
    %2901 = vmatpush1.msra.mxu0 %v1897
    %2902 = vmatprep.subr.mxu0 0.0
    %2903 = vmatpush1.msra.mxu0 %v1900
    %2904 = vmatprep.subr.mxu0 0.0
    %2905 = vmatpush1.msra.mxu0 %v1903
    %2906 = vmatprep.subr.mxu0 0.0
    %2907 = vmatpush1.msra.mxu0 %v1906
    %2908 = vmatprep.subr.mxu0 0.0
    %2909 = vmatpush1.msra.mxu0 %v1909
    %2910 = vmatprep.subr.mxu0 0.0
    %2911 = vmatpush1.msra.mxu0 %v1912
    %2912 = vmatprep.subr.mxu0 0.0
    %2913 = vmatpush1.msra.mxu0 %v1915
    %2914 = vmatprep.subr.mxu0 0.0
    %2915 = vmatpush1.msra.mxu0 %v1918
    %2916 = vmatprep.subr.mxu0 0.0
    %2917 = vmatpush1.msra.mxu0 %v1921
    %2918 = vmatprep.subr.mxu0 0.0
    %2919 = vmatpush1.msra.mxu0 %v1924
    %2920 = vmatprep.subr.mxu0 0.0
    %2921 = vmatpush1.msra.mxu0 %v1927
    %2922 = vmatprep.subr.mxu0 0.0
    %2923 = vmatpush1.msra.mxu0 %v1930
    %2924 = vmatprep.subr.mxu0 0.0
    %2925 = vmatpush1.msra.mxu0 %v1933
    %2926 = vmatprep.subr.mxu0 0.0
    %2927 = vmatpush1.msra.mxu0 %v1936
    %2928 = vmatprep.subr.mxu0 0.0
    %2929 = vmatpush1.msra.mxu0 %v1939
    %2930 = vmatprep.subr.mxu0 0.0
    %2931 = vmatpush1.msra.mxu0 %v1942
    %2932 = vmatprep.subr.mxu0 0.0
    %2933 = vmatpush1.msra.mxu0 %v1945
    %2934 = vmatprep.subr.mxu0 0.0
    %2935 = vmatpush1.msra.mxu0 %v1948
    %2936 = vmatprep.subr.mxu0 0.0
    %2937 = vmatpush1.msra.mxu0 %v1951
    %2938 = vmatprep.subr.mxu0 0.0
    %2939 = vmatpush1.msra.mxu0 %v1954
    %2940 = vmatprep.subr.mxu0 0.0
    %2941 = vmatpush1.msra.mxu0 %v1957
    %2942 = vmatprep.subr.mxu0 0.0
    %2943 = vmatpush1.msra.mxu0 %v1960
    %2944 = vmatprep.subr.mxu0 0.0
    %2945 = vmatpush1.msra.mxu0 %v1963
    %2946 = vmatprep.subr.mxu0 0.0
    %2947 = vmatpush1.msra.mxu0 %v1966
    %2948 = vmatprep.mubr.f32.mxu0 %v1660
    %2949 = vmatmul.mubr.f32.gmra.mrb[0].mxu0 %v1659
    %v2950 = vpop.f32.mrb[0].mxu0
    %v2951 = vadd.f32 %v2876, %v2950
    %v2952 = vpop.f32.mrb[0].mxu0
    %2953 = vmatprep.mubr.f32.mxu0 %v1672
    %2954 = vmatmul.mubr.f32.gmra.mrb[0].mxu0 %v1671
    %v2955 = vpop.f32.mrb[0].mxu0
    %v2956 = vadd.f32 %v2881, %v2955
    %v2957 = vpop.f32.mrb[0].mxu0
    %2958 = vdwg.mxu0
    %2959 = vmatprep.subr.mxu0 0.0
    %2960 = vmatpush1.msra.mxu0 %v1969
    %2961 = vmatprep.subr.mxu0 0.0
    %2962 = vmatpush1.msra.mxu0 %v1972
    %2963 = vmatprep.subr.mxu0 0.0
    %2964 = vmatpush1.msra.mxu0 %v1975
    %2965 = vmatprep.subr.mxu0 0.0
    %2966 = vmatpush1.msra.mxu0 %v1978
    %2967 = vmatprep.subr.mxu0 0.0
    %2968 = vmatpush1.msra.mxu0 %v1981
    %2969 = vmatprep.subr.mxu0 0.0
    %2970 = vmatpush1.msra.mxu0 %v1984
    %2971 = vmatprep.subr.mxu0 0.0
    %2972 = vmatpush1.msra.mxu0 %v1987
    %2973 = vmatprep.subr.mxu0 0.0
    %2974 = vmatpush1.msra.mxu0 %v1990
    %2975 = vmatprep.subr.mxu0 0.0
    %2976 = vmatpush1.msra.mxu0 %v1993
    %2977 = vmatprep.subr.mxu0 0.0
    %2978 = vmatpush1.msra.mxu0 %v1996
    %2979 = vmatprep.subr.mxu0 0.0
    %2980 = vmatpush1.msra.mxu0 %v1999
    %2981 = vmatprep.subr.mxu0 0.0
    %2982 = vmatpush1.msra.mxu0 %v2002
    %2983 = vmatprep.subr.mxu0 0.0
    %2984 = vmatpush1.msra.mxu0 %v2005
    %2985 = vmatprep.subr.mxu0 0.0
    %2986 = vmatpush1.msra.mxu0 %v2008
    %2987 = vmatprep.subr.mxu0 0.0
    %2988 = vmatpush1.msra.mxu0 %v2011
    %2989 = vmatprep.subr.mxu0 0.0
    %2990 = vmatpush1.msra.mxu0 %v2014
    %2991 = vmatprep.subr.mxu0 0.0
    %2992 = vmatpush1.msra.mxu0 %v2017
    %2993 = vmatprep.subr.mxu0 0.0
    %2994 = vmatpush1.msra.mxu0 %v2020
    %2995 = vmatprep.subr.mxu0 0.0
    %2996 = vmatpush1.msra.mxu0 %v2023
    %2997 = vmatprep.subr.mxu0 0.0
    %2998 = vmatpush1.msra.mxu0 %v2026
    %2999 = vmatprep.subr.mxu0 0.0
    %3000 = vmatpush1.msra.mxu0 %v2029
    %3001 = vmatprep.subr.mxu0 0.0
    %3002 = vmatpush1.msra.mxu0 %v2032
    %3003 = vmatprep.subr.mxu0 0.0
    %3004 = vmatpush1.msra.mxu0 %v2035
    %3005 = vmatprep.subr.mxu0 0.0
    %3006 = vmatpush1.msra.mxu0 %v2038
    %3007 = vmatprep.subr.mxu0 0.0
    %3008 = vmatpush1.msra.mxu0 %v2041
    %3009 = vmatprep.subr.mxu0 0.0
    %3010 = vmatpush1.msra.mxu0 %v2044
    %3011 = vmatprep.subr.mxu0 0.0
    %3012 = vmatpush1.msra.mxu0 %v2047
    %3013 = vmatprep.subr.mxu0 0.0
    %3014 = vmatpush1.msra.mxu0 %v2050
    %3015 = vmatprep.subr.mxu0 0.0
    %3016 = vmatpush1.msra.mxu0 %v2053
    %3017 = vmatprep.subr.mxu0 0.0
    %3018 = vmatpush1.msra.mxu0 %v2056
    %3019 = vmatprep.subr.mxu0 0.0
    %3020 = vmatpush1.msra.mxu0 %v2059
    %3021 = vmatprep.subr.mxu0 0.0
    %3022 = vmatpush1.msra.mxu0 %v2062
    %3023 = vmatprep.mubr.f32.mxu0 %v1662
    %3024 = vmatmul.mubr.f32.gmra.mrb[0].mxu0 %v1661
    %v3025 = vpop.f32.mrb[0].mxu0
    %v3026 = vadd.f32 %v2951, %v3025
    %v3027 = vpop.f32.mrb[0].mxu0
    %3028 = vmatprep.mubr.f32.mxu0 %v1674
    %3029 = vmatmul.mubr.f32.gmra.mrb[0].mxu0 %v1673
    %v3030 = vpop.f32.mrb[0].mxu0
    %v3031 = vadd.f32 %v2956, %v3030
    %v3032 = vpop.f32.mrb[0].mxu0
    %3033 = vdwg.mxu0
    %3034 = vmatprep.subr.mxu0 0.0
    %3035 = vmatpush1.msra.mxu0 %v2065
    %3036 = vmatprep.subr.mxu0 0.0
    %3037 = vmatpush1.msra.mxu0 %v2068
    %3038 = vmatprep.subr.mxu0 0.0
    %3039 = vmatpush1.msra.mxu0 %v2071
    %3040 = vmatprep.subr.mxu0 0.0
    %3041 = vmatpush1.msra.mxu0 %v2074
    %3042 = vmatprep.subr.mxu0 0.0
    %3043 = vmatpush1.msra.mxu0 %v2077
    %3044 = vmatprep.subr.mxu0 0.0
    %3045 = vmatpush1.msra.mxu0 %v2080
    %3046 = vmatprep.subr.mxu0 0.0
    %3047 = vmatpush1.msra.mxu0 %v2083
    %3048 = vmatprep.subr.mxu0 0.0
    %3049 = vmatpush1.msra.mxu0 %v2086
    %3050 = vmatprep.subr.mxu0 0.0
    %3051 = vmatpush1.msra.mxu0 %v2089
    %3052 = vmatprep.subr.mxu0 0.0
    %3053 = vmatpush1.msra.mxu0 %v2092
    %3054 = vmatprep.subr.mxu0 0.0
    %3055 = vmatpush1.msra.mxu0 %v2095
    %3056 = vmatprep.subr.mxu0 0.0
    %3057 = vmatpush1.msra.mxu0 %v2098
    %3058 = vmatprep.subr.mxu0 0.0
    %3059 = vmatpush1.msra.mxu0 %v2101
    %3060 = vmatprep.subr.mxu0 0.0
    %3061 = vmatpush1.msra.mxu0 %v2104
    %3062 = vmatprep.subr.mxu0 0.0
    %3063 = vmatpush1.msra.mxu0 %v2107
    %3064 = vmatprep.subr.mxu0 0.0
    %3065 = vmatpush1.msra.mxu0 %v2110
    %3066 = vmatprep.subr.mxu0 0.0
    %3067 = vmatpush1.msra.mxu0 %v2113
    %3068 = vmatprep.subr.mxu0 0.0
    %3069 = vmatpush1.msra.mxu0 %v2116
    %3070 = vmatprep.subr.mxu0 0.0
    %3071 = vmatpush1.msra.mxu0 %v2119
    %3072 = vmatprep.subr.mxu0 0.0
    %3073 = vmatpush1.msra.mxu0 %v2122
    %3074 = vmatprep.subr.mxu0 0.0
    %3075 = vmatpush1.msra.mxu0 %v2125
    %3076 = vmatprep.subr.mxu0 0.0
    %3077 = vmatpush1.msra.mxu0 %v2128
    %3078 = vmatprep.subr.mxu0 0.0
    %3079 = vmatpush1.msra.mxu0 %v2131
    %3080 = vmatprep.subr.mxu0 0.0
    %3081 = vmatpush1.msra.mxu0 %v2134
    %3082 = vmatprep.subr.mxu0 0.0
    %3083 = vmatpush1.msra.mxu0 %v2137
    %3084 = vmatprep.subr.mxu0 0.0
    %3085 = vmatpush1.msra.mxu0 %v2140
    %3086 = vmatprep.subr.mxu0 0.0
    %3087 = vmatpush1.msra.mxu0 %v2143
    %3088 = vmatprep.subr.mxu0 0.0
    %3089 = vmatpush1.msra.mxu0 %v2146
    %3090 = vmatprep.subr.mxu0 0.0
    %3091 = vmatpush1.msra.mxu0 %v2149
    %3092 = vmatprep.subr.mxu0 0.0
    %3093 = vmatpush1.msra.mxu0 %v2152
    %3094 = vmatprep.subr.mxu0 0.0
    %3095 = vmatpush1.msra.mxu0 %v2155
    %3096 = vmatprep.subr.mxu0 0.0
    %3097 = vmatpush1.msra.mxu0 %v2158
    %3098 = vmatprep.mubr.f32.mxu0 %v1664
    %3099 = vmatmul.mubr.f32.gmra.mrb[0].mxu0 %v1663
    %v3100 = vpop.f32.mrb[0].mxu0
    %v3101 = vadd.f32 %v3026, %v3100
    %v3102 = vpop.f32.mrb[0].mxu0
    %3103 = vmatprep.mubr.f32.mxu0 %v1676
    %3104 = vmatmul.mubr.f32.gmra.mrb[0].mxu0 %v1675
    %v3105 = vpop.f32.mrb[0].mxu0
    %v3106 = vadd.f32 %v3031, %v3105
    %v3107 = vpop.f32.mrb[0].mxu0
    %3108 = vdwg.mxu0
    %3109 = vmatprep.subr.mxu0 0.0
    %3110 = vmatpush1.msra.mxu0 %v2161
    %3111 = vmatprep.subr.mxu0 0.0
    %3112 = vmatpush1.msra.mxu0 %v2164
    %3113 = vmatprep.subr.mxu0 0.0
    %3114 = vmatpush1.msra.mxu0 %v2167
    %3115 = vmatprep.subr.mxu0 0.0
    %3116 = vmatpush1.msra.mxu0 %v2170
    %3117 = vmatprep.subr.mxu0 0.0
    %3118 = vmatpush1.msra.mxu0 %v2173
    %3119 = vmatprep.subr.mxu0 0.0
    %3120 = vmatpush1.msra.mxu0 %v2176
    %3121 = vmatprep.subr.mxu0 0.0
    %3122 = vmatpush1.msra.mxu0 %v2179
    %3123 = vmatprep.subr.mxu0 0.0
    %3124 = vmatpush1.msra.mxu0 %v2182
    %3125 = vmatprep.subr.mxu0 0.0
    %3126 = vmatpush1.msra.mxu0 %v2185
    %3127 = vmatprep.subr.mxu0 0.0
    %3128 = vmatpush1.msra.mxu0 %v2188
    %3129 = vmatprep.subr.mxu0 0.0
    %3130 = vmatpush1.msra.mxu0 %v2191
    %3131 = vmatprep.subr.mxu0 0.0
    %3132 = vmatpush1.msra.mxu0 %v2194
    %3133 = vmatprep.subr.mxu0 0.0
    %3134 = vmatpush1.msra.mxu0 %v2197
    %3135 = vmatprep.subr.mxu0 0.0
    %3136 = vmatpush1.msra.mxu0 %v2200
    %3137 = vmatprep.subr.mxu0 0.0
    %3138 = vmatpush1.msra.mxu0 %v2203
    %3139 = vmatprep.subr.mxu0 0.0
    %3140 = vmatpush1.msra.mxu0 %v2206
    %3141 = vmatprep.subr.mxu0 0.0
    %3142 = vmatpush1.msra.mxu0 %v2209
    %3143 = vmatprep.subr.mxu0 0.0
    %3144 = vmatpush1.msra.mxu0 %v2212
    %3145 = vmatprep.subr.mxu0 0.0
    %3146 = vmatpush1.msra.mxu0 %v2215
    %3147 = vmatprep.subr.mxu0 0.0
    %3148 = vmatpush1.msra.mxu0 %v2218
    %3149 = vmatprep.subr.mxu0 0.0
    %3150 = vmatpush1.msra.mxu0 %v2221
    %3151 = vmatprep.subr.mxu0 0.0
    %3152 = vmatpush1.msra.mxu0 %v2224
    %3153 = vmatprep.subr.mxu0 0.0
    %3154 = vmatpush1.msra.mxu0 %v2227
    %3155 = vmatprep.subr.mxu0 0.0
    %3156 = vmatpush1.msra.mxu0 %v2230
    %3157 = vmatprep.subr.mxu0 0.0
    %3158 = vmatpush1.msra.mxu0 %v2233
    %3159 = vmatprep.subr.mxu0 0.0
    %3160 = vmatpush1.msra.mxu0 %v2236
    %3161 = vmatprep.subr.mxu0 0.0
    %3162 = vmatpush1.msra.mxu0 %v2239
    %3163 = vmatprep.subr.mxu0 0.0
    %3164 = vmatpush1.msra.mxu0 %v2242
    %3165 = vmatprep.subr.mxu0 0.0
    %3166 = vmatpush1.msra.mxu0 %v2245
    %3167 = vmatprep.subr.mxu0 0.0
    %3168 = vmatpush1.msra.mxu0 %v2248
    %3169 = vmatprep.subr.mxu0 0.0
    %3170 = vmatpush1.msra.mxu0 %v2251
    %3171 = vmatprep.subr.mxu0 0.0
    %3172 = vmatpush1.msra.mxu0 %v2254
    %3173 = vmatprep.mubr.f32.mxu0 %v1666
    %3174 = vmatmul.mubr.f32.gmra.mrb[0].mxu0 %v1665
    %v3175 = vpop.f32.mrb[0].mxu0
    %v3176 = vadd.f32 %v3101, %v3175
    %v3177 = vpop.f32.mrb[0].mxu0
    %3178 = vmatprep.mubr.f32.mxu0 %v1678
    %3179 = vmatmul.mubr.f32.gmra.mrb[0].mxu0 %v1677
    %v3180 = vpop.f32.mrb[0].mxu0
    %v3181 = vadd.f32 %v3106, %v3180
    %v3182 = vpop.f32.mrb[0].mxu0
    %3183 = vdwg.mxu0
    %3184 = vst [vmem:[#allocation11] sm:$0xff] %v2724
    %3185 = vst [vmem:[#allocation11 + $0x8] sm:$0xff] %v2726
    %3186 = vst [vmem:[#allocation11 + $0x10] sm:$0xff] %v3176
    %3187 = vst [vmem:[#allocation11 + $0x18] sm:$0xff] %v2730
    %3188 = vst [vmem:[#allocation11 + $0x20] sm:$0xff] %v2732
    %3189 = vst [vmem:[#allocation11 + $0x28] sm:$0xff] %v3181
    // Predicated region
    $region42: #{tpu_custom_call.1} parent=1 // pred_check
      _
    $region43: #{tpu_custom_call.1} parent=1 // pred_check_branch
      %3191 = sbr.rel (0) target = $region45
    $region44: #{tpu_custom_call.1} parent=1 // pred_region
      %s3193 = ssub.s32 768, 768
      %3194 = vsyncadd [#allocation4], %s3193
      %s3195 = sshll.u32 [#allocation11], 4
      %s3196 = int_to_ptr.vmem [resolvable:$true] %s3195
      %3201 = dma.vmem_to_hbm [thread:$0]  %s3196, 768, %s5, [#allocation4], 384, 384, 24
    $region45: #{tpu_custom_call.1} parent=1 // pred_fallthru
      _
    // Predicated region
    $region46: #{tpu_custom_call.1} parent=1 // pred_check
      _
    $region47: #{tpu_custom_call.1} parent=1 // pred_check_branch
      %3203 = sbr.rel (0) target = $region49
    $region48: #{tpu_custom_call.1} parent=1 // pred_region
      %3204 = dma.done [#allocation4], 768
    $region49: #{tpu_custom_call.1} parent=1 // pred_fallthru
      _
    %3205 = vsyncpa [#allocation3], 1
    %3206 = vsyncpa [#allocation6], 1
    %3207 = vsyncpa [#allocation9], 1
    %3208 = vsyncpa [#allocation4], 1

</llo_original>
